<compile_context>
chip_gen: v7x
topology: tpu7x:2x2x1
jax: 0.10.0
libtpu: 0.0.40
codegen_flags: <defaults>
</compile_context>

<pallas_src>
import jax
import jax.numpy as jnp
from jax.experimental import pallas as pl
from jax.experimental.pallas import tpu as pltpu

# ---- static model geometry -------------------------------------------------
C_IN = 7
C_OUT = 128
KH = KW = 3
H = W = 8
OH, OW = H - KH + 1, W - KW + 1        # 6, 6
PH, PW = OH // 2, OW // 2              # 3, 3
N_POS = PH * PW                        # 9 pooled spatial positions
K_REAL = C_IN * KH * KW                # 63
K_PAD = 128                            # im2col contraction padded 63 -> 128
OUT_PAD = 128                          # final output lanes padded 2 -> 128
TB = 8                                 # per-grid-step batch tile (sublane-aligned)


# ----------------------------- Pallas kernel --------------------------------

def fused_kernel(p_ref, wc_ref, bc_ref,
                 w1_ref, b1_ref, w2_ref, b2_ref, w3_ref, b3_ref,
                 w4_ref, b4_ref, w5_ref, b5_ref, o_ref):
    # p_ref : (4*9*TB, 128) bf16 im2col patches for this batch tile,
    #         rows ordered (dh, dw, ph, pw, b_local); cols (c,kh,kw) zero-padded.
    # wc_ref: (128, 128) bf16 conv weight (rows (c,kh,kw), zero-padded).
    # w*_ref: bf16 MLP weights (W1 rows pre-permuted; W4/W5 lane-padded).
    # b*_ref: (1, N) f32 biases.
    n = N_POS * TB                                   # 9*TB pooled rows per block

    # Conv as four row-block GEMMs on the MXU; MaxPool2d(2,2) is the
    # elementwise max over the four (dh, dw) blocks.  bias+ReLU after pooling
    # (relu(x+b) is monotone in x, so this equals ReLU-then-pool).
    def conv_block(i):
        return jnp.dot(p_ref[pl.ds(i * n, n), :], wc_ref[...],
                       preferred_element_type=jnp.float32)

    pool = jnp.maximum(jnp.maximum(conv_block(0), conv_block(1)),
                       jnp.maximum(conv_block(2), conv_block(3)))
    pool = jnp.maximum(pool + bc_ref[...], 0.0)      # (9*TB, 128) f32

    # Flatten to (TB, 9*128) with feature order (ph, pw, c): lane-aligned concat
    # of per-position (TB, 128) blocks.  TB is a multiple of 8, so every slice
    # starts on a sublane boundary (no relayout).
    flat = jnp.concatenate(
        [pool[p * TB:(p + 1) * TB, :] for p in range(N_POS)], axis=1)

    def dense(h, w_ref, b_ref, relu):
        y = jnp.dot(h.astype(jnp.bfloat16), w_ref[...],
                    preferred_element_type=jnp.float32) + b_ref[...]
        return jnp.maximum(y, 0.0) if relu else y

    h = dense(flat, w1_ref, b1_ref, True)
    h = dense(h, w2_ref, b2_ref, True)
    h = dense(h, w3_ref, b3_ref, True)
    h = dense(h, w4_ref, b4_ref, True)               # cols 64.. are exact zeros
    h = dense(h, w5_ref, b5_ref, False)              # cols 2..  are exact zeros
    o_ref[...] = h.astype(o_ref.dtype)               # lane-dense (TB,128) store


# ------------------------------ wrappers -------------------------------------

def fused_forward(patches, wc, bc, ws, bs, num_tiles):
    args = [patches, wc, bc]
    for w, b in zip(ws, bs):
        args += [w, b]

    RT = 4 * N_POS * TB                              # patch rows per grid step
    B = num_tiles * TB

    def const_spec(shape):
        # whole array, re-used every grid step -> weights stay resident in VMEM
        return pl.BlockSpec(shape, lambda i: tuple(0 for _ in shape))

    in_specs = [pl.BlockSpec((RT, K_PAD), lambda i: (i, 0))]
    in_specs += [const_spec(a.shape) for a in args[1:]]

    flops = 2 * B * (4 * N_POS * K_PAD * C_OUT
                     + sum(int(w.shape[0] * w.shape[1]) for w in ws))
    bytes_accessed = (int(sum(int(a.size) * a.dtype.itemsize for a in args))
                      + B * OUT_PAD * 4)

    return pl.pallas_call(
        fused_kernel,
        out_shape=jax.ShapeDtypeStruct((B, OUT_PAD), jnp.float32),
        grid=(num_tiles,),
        in_specs=in_specs,
        out_specs=pl.BlockSpec((TB, OUT_PAD), lambda i: (i, 0)),
        compiler_params=pltpu.CompilerParams(
            dimension_semantics=("parallel",)),
        cost_estimate=pl.CostEstimate(flops=flops, transcendentals=0,
                                      bytes_accessed=bytes_accessed),
    )(*args)


def build_patches(x, num_tiles):
    # x: (B, C, H, W) NCHW -> (NT*4*PH*PW*TB, 128) bf16.
    # Rows ordered (tile, dh, dw, ph, pw, b_local); cols (c, kh, kw) to match the
    # torch conv weight flatten, zero-padded 63 -> 128.  Tiny, trace-time only.
    B, C, _, _ = x.shape
    p = jnp.stack([x[:, :, kh:kh + OH, kw:kw + OW]
                   for kh in range(KH) for kw in range(KW)], axis=-1)  # (B,C,OH,OW,9)
    p = p.reshape(num_tiles, TB, C, PH, 2, PW, 2, KH * KW)             # oh=2ph+dh
    p = jnp.transpose(p, (0, 4, 6, 3, 5, 1, 2, 7))                     # nt,dh,dw,ph,pw,b,c,k
    p = p.reshape(num_tiles * 4 * PH * PW * TB, K_REAL)
    p = jnp.pad(p, ((0, 0), (0, K_PAD - K_REAL)))
    return p.astype(jnp.bfloat16)


def pack_params(params):
    """One-time weight packing: bf16 cast, W1 row permutation, zero padding."""
    (cw, cb), lin = params
    wc = cw.reshape(cw.shape[0], -1).T                            # (63, 128)
    wc = jnp.pad(wc, ((0, K_PAD - K_REAL), (0, 0))).astype(jnp.bfloat16)
    bc = cb.reshape(1, -1).astype(jnp.float32)
    c_pool = cw.shape[0]                                          # 128 channels
    ws, bs = [], []
    n_lin = len(lin)
    for i, (w, b) in enumerate(lin):
        if i == 0:
            # torch flatten order is (c, ph, pw); kernel produces (ph, pw, c).
            w = w.reshape(c_pool, N_POS, w.shape[1]).transpose(1, 0, 2).reshape(w.shape)
        if i >= n_lin - 2:
            # pad last two layers to 128 lanes (zero weights / zero bias);
            # W5 input rows padded 64 -> 128 (those activations are exact zeros).
            pad_rows = (0, 0) if w.shape[0] == OUT_PAD else (0, OUT_PAD - w.shape[0])
            w = jnp.pad(w, (pad_rows, (0, OUT_PAD - w.shape[1])))
            b = jnp.pad(b, (0, OUT_PAD - b.shape[0]))
        ws.append(w.astype(jnp.bfloat16))
        bs.append(b.reshape(1, -1).astype(jnp.float32))
    return wc, bc, tuple(ws), tuple(bs)


@jax.jit
def test_model_forward(x, packed):
    wc, bc, ws, bs = packed
    B = x.shape[0]
    assert B % TB == 0, f"batch {B} must be a multiple of the tile {TB}"
    num_tiles = B // TB
    patches = build_patches(x, num_tiles)
    out = fused_forward(patches, wc, bc, ws, bs, num_tiles)
    return out[:, :2]                                   # drop lane padding


# --------------------------- f32 reference -----------------------------------

def reference_forward(x, params):
    (cw, cb), lin = params
    y = jax.lax.conv_general_dilated(x, cw, (1, 1), "VALID",
                                     dimension_numbers=("NCHW", "OIHW", "NCHW"))
    y = jnp.maximum(y + cb.reshape(1, -1, 1, 1), 0.0)
    B, Cc, Hh, Ww = y.shape
    y = y.reshape(B, Cc, Hh // 2, 2, Ww // 2, 2).max(axis=(3, 5))
    h = y.reshape(B, -1)
    for i, (w, b) in enumerate(lin):
        h = h @ w + b
        if i < len(lin) - 1:
            h = jnp.maximum(h, 0.0)
    return h


def init_params(key):
    ks = jax.random.split(key, 12)
    cw = jax.random.normal(ks[0], (C_OUT, C_IN, KH, KW), jnp.float32) * 0.05
    cb = jax.random.normal(ks[1], (C_OUT,), jnp.float32) * 0.05
    dims = [(1152, 512), (512, 512), (512, 128), (128, 64), (64, 2)]
    lin = []
    for i, (din, dout) in enumerate(dims):
        w = jax.random.normal(ks[2 + 2 * i], (din, dout), jnp.float32) * (1.0 / jnp.sqrt(din))
        b = jax.random.normal(ks[3 + 2 * i], (dout,), jnp.float32) * 0.01
        lin.append((w, b))
    return (cw, cb), lin


if __name__ == "__main__":
    key = jax.random.PRNGKey(0)
    kx, kp = jax.random.split(key)
    # (B, C_in, H, W) = (16, 7, 8, 8): conv -> (16,128,6,6), pool -> (16,128,3,3),
    # flatten -> (16, 1152), matching the Linear(1152, ...) stack.
    # B=16 with TB=8 exercises the batch grid (grid=(2,)).
    B = 16
    x = jax.random.normal(kx, (B, C_IN, H, W), jnp.float32)
    params = init_params(kp)
    packed = pack_params(params)

    out = jax.block_until_ready(test_model_forward(x, packed))
    ref = jax.block_until_ready(reference_forward(x, params))

    assert out.shape == (B, 2), out.shape
    # bf16 weights/activations in the kernel -> relaxed tolerance vs f32 ref.
    assert jnp.allclose(out, ref, atol=5e-2, rtol=5e-2), (out, ref)
    print("KERNEL_OK")
</pallas_src>

<mosaic_0001>
module attributes {stable_mosaic.version = 11 : i64} {
  func.func @fused_kernel(%arg0: i32, %arg1: memref<288x128xbf16, #tpu.memory_space<vmem>>, %arg2: memref<128x128xbf16, #tpu.memory_space<vmem>>, %arg3: memref<1x128xf32, #tpu.memory_space<vmem>>, %arg4: memref<1152x512xbf16, #tpu.memory_space<vmem>>, %arg5: memref<1x512xf32, #tpu.memory_space<vmem>>, %arg6: memref<512x512xbf16, #tpu.memory_space<vmem>>, %arg7: memref<1x512xf32, #tpu.memory_space<vmem>>, %arg8: memref<512x128xbf16, #tpu.memory_space<vmem>>, %arg9: memref<1x128xf32, #tpu.memory_space<vmem>>, %arg10: memref<128x128xbf16, #tpu.memory_space<vmem>>, %arg11: memref<1x128xf32, #tpu.memory_space<vmem>>, %arg12: memref<128x128xbf16, #tpu.memory_space<vmem>>, %arg13: memref<1x128xf32, #tpu.memory_space<vmem>>, %arg14: memref<8x128xf32, #tpu.memory_space<vmem>>) attributes {dimension_semantics = [#tpu.dimension_semantics<parallel>], iteration_bounds = array<i64: 2>, scalar_prefetch = 0 : i64, scratch_operands = 0 : i64, tpu.core_type = #tpu.core_type<tc>, window_params = [{transform_indices = @transform_0, window_bounds = array<i64: 288, 128>}, {pipeline_mode = #tpu.pipeline_mode<synchronous>, transform_indices = @transform_1, window_bounds = array<i64: 128, 128>}, {pipeline_mode = #tpu.pipeline_mode<synchronous>, transform_indices = @transform_2, window_bounds = array<i64: 1, 128>}, {pipeline_mode = #tpu.pipeline_mode<synchronous>, transform_indices = @transform_3, window_bounds = array<i64: 1152, 512>}, {pipeline_mode = #tpu.pipeline_mode<synchronous>, transform_indices = @transform_4, window_bounds = array<i64: 1, 512>}, {pipeline_mode = #tpu.pipeline_mode<synchronous>, transform_indices = @transform_5, window_bounds = array<i64: 512, 512>}, {pipeline_mode = #tpu.pipeline_mode<synchronous>, transform_indices = @transform_6, window_bounds = array<i64: 1, 512>}, {pipeline_mode = #tpu.pipeline_mode<synchronous>, transform_indices = @transform_7, window_bounds = array<i64: 512, 128>}, {pipeline_mode = #tpu.pipeline_mode<synchronous>, transform_indices = @transform_8, window_bounds = array<i64: 1, 128>}, {pipeline_mode = #tpu.pipeline_mode<synchronous>, transform_indices = @transform_9, window_bounds = array<i64: 128, 128>}, {pipeline_mode = #tpu.pipeline_mode<synchronous>, transform_indices = @transform_10, window_bounds = array<i64: 1, 128>}, {pipeline_mode = #tpu.pipeline_mode<synchronous>, transform_indices = @transform_11, window_bounds = array<i64: 128, 128>}, {pipeline_mode = #tpu.pipeline_mode<synchronous>, transform_indices = @transform_12, window_bounds = array<i64: 1, 128>}, {transform_indices = @transform_13, window_bounds = array<i64: 8, 128>}]} {
    %c0 = arith.constant 0 : index
    %c0_0 = arith.constant 0 : index
    %0 = vector.load %arg1[%c0, %c0_0] : memref<288x128xbf16, #tpu.memory_space<vmem>>, vector<72x128xbf16>
    %c0_1 = arith.constant 0 : index
    %c0_2 = arith.constant 0 : index
    %1 = vector.load %arg2[%c0_1, %c0_2] : memref<128x128xbf16, #tpu.memory_space<vmem>>, vector<128x128xbf16>
    %cst = arith.constant dense<0.000000e+00> : vector<72x128xf32>
    %2 = tpu.matmul %0, %1, %cst {dimension_numbers = #tpu.dot_dimension_numbers<[1], [0], [0], [1], [0, 0, 1, 1], [], []>} : vector<72x128xbf16>, vector<128x128xbf16>, vector<72x128xf32> -> vector<72x128xf32>
    %c72 = arith.constant 72 : index
    %c0_3 = arith.constant 0 : index
    %3 = vector.load %arg1[%c72, %c0_3] : memref<288x128xbf16, #tpu.memory_space<vmem>>, vector<72x128xbf16>
    %c0_4 = arith.constant 0 : index
    %c0_5 = arith.constant 0 : index
    %4 = vector.load %arg2[%c0_4, %c0_5] : memref<128x128xbf16, #tpu.memory_space<vmem>>, vector<128x128xbf16>
    %cst_6 = arith.constant dense<0.000000e+00> : vector<72x128xf32>
    %5 = tpu.matmul %3, %4, %cst_6 {dimension_numbers = #tpu.dot_dimension_numbers<[1], [0], [0], [1], [0, 0, 1, 1], [], []>} : vector<72x128xbf16>, vector<128x128xbf16>, vector<72x128xf32> -> vector<72x128xf32>
    %6 = arith.maximumf %2, %5 : vector<72x128xf32>
    %c144 = arith.constant 144 : index
    %c0_7 = arith.constant 0 : index
    %7 = vector.load %arg1[%c144, %c0_7] : memref<288x128xbf16, #tpu.memory_space<vmem>>, vector<72x128xbf16>
    %c0_8 = arith.constant 0 : index
    %c0_9 = arith.constant 0 : index
    %8 = vector.load %arg2[%c0_8, %c0_9] : memref<128x128xbf16, #tpu.memory_space<vmem>>, vector<128x128xbf16>
    %cst_10 = arith.constant dense<0.000000e+00> : vector<72x128xf32>
    %9 = tpu.matmul %7, %8, %cst_10 {dimension_numbers = #tpu.dot_dimension_numbers<[1], [0], [0], [1], [0, 0, 1, 1], [], []>} : vector<72x128xbf16>, vector<128x128xbf16>, vector<72x128xf32> -> vector<72x128xf32>
    %c216 = arith.constant 216 : index
    %c0_11 = arith.constant 0 : index
    %10 = vector.load %arg1[%c216, %c0_11] : memref<288x128xbf16, #tpu.memory_space<vmem>>, vector<72x128xbf16>
    %c0_12 = arith.constant 0 : index
    %c0_13 = arith.constant 0 : index
    %11 = vector.load %arg2[%c0_12, %c0_13] : memref<128x128xbf16, #tpu.memory_space<vmem>>, vector<128x128xbf16>
    %cst_14 = arith.constant dense<0.000000e+00> : vector<72x128xf32>
    %12 = tpu.matmul %10, %11, %cst_14 {dimension_numbers = #tpu.dot_dimension_numbers<[1], [0], [0], [1], [0, 0, 1, 1], [], []>} : vector<72x128xbf16>, vector<128x128xbf16>, vector<72x128xf32> -> vector<72x128xf32>
    %13 = arith.maximumf %9, %12 : vector<72x128xf32>
    %14 = arith.maximumf %6, %13 : vector<72x128xf32>
    %c0_15 = arith.constant 0 : index
    %c0_16 = arith.constant 0 : index
    %15 = vector.load %arg3[%c0_15, %c0_16] : memref<1x128xf32, #tpu.memory_space<vmem>>, vector<1x128xf32>
    %16 = vector.broadcast %15 : vector<1x128xf32> to vector<72x128xf32>
    %17 = arith.addf %14, %16 : vector<72x128xf32>
    %cst_17 = arith.constant 0.000000e+00 : f32
    %18 = vector.broadcast %cst_17 : f32 to vector<72x128xf32>
    %19 = arith.maximumf %17, %18 : vector<72x128xf32>
    %20 = vector.extract_strided_slice %19 {offsets = [0, 0], sizes = [8, 128], strides = [1, 1]} : vector<72x128xf32> to vector<8x128xf32>
    %21 = vector.extract_strided_slice %19 {offsets = [8, 0], sizes = [8, 128], strides = [1, 1]} : vector<72x128xf32> to vector<8x128xf32>
    %22 = vector.extract_strided_slice %19 {offsets = [16, 0], sizes = [8, 128], strides = [1, 1]} : vector<72x128xf32> to vector<8x128xf32>
    %23 = vector.extract_strided_slice %19 {offsets = [24, 0], sizes = [8, 128], strides = [1, 1]} : vector<72x128xf32> to vector<8x128xf32>
    %24 = vector.extract_strided_slice %19 {offsets = [32, 0], sizes = [8, 128], strides = [1, 1]} : vector<72x128xf32> to vector<8x128xf32>
    %25 = vector.extract_strided_slice %19 {offsets = [40, 0], sizes = [8, 128], strides = [1, 1]} : vector<72x128xf32> to vector<8x128xf32>
    %26 = vector.extract_strided_slice %19 {offsets = [48, 0], sizes = [8, 128], strides = [1, 1]} : vector<72x128xf32> to vector<8x128xf32>
    %27 = vector.extract_strided_slice %19 {offsets = [56, 0], sizes = [8, 128], strides = [1, 1]} : vector<72x128xf32> to vector<8x128xf32>
    %28 = vector.extract_strided_slice %19 {offsets = [64, 0], sizes = [8, 128], strides = [1, 1]} : vector<72x128xf32> to vector<8x128xf32>
    %29 = tpu.concatenate %20, %21, %22, %23, %24, %25, %26, %27, %28 in 1 : vector<8x128xf32>, vector<8x128xf32>, vector<8x128xf32>, vector<8x128xf32>, vector<8x128xf32>, vector<8x128xf32>, vector<8x128xf32>, vector<8x128xf32>, vector<8x128xf32> -> vector<8x1152xf32>
    %30 = arith.truncf %29 : vector<8x1152xf32> to vector<8x1152xbf16>
    %c0_18 = arith.constant 0 : index
    %c0_19 = arith.constant 0 : index
    %31 = vector.load %arg4[%c0_18, %c0_19] : memref<1152x512xbf16, #tpu.memory_space<vmem>>, vector<1152x512xbf16>
    %cst_20 = arith.constant dense<0.000000e+00> : vector<8x512xf32>
    %32 = tpu.matmul %30, %31, %cst_20 {dimension_numbers = #tpu.dot_dimension_numbers<[1], [0], [0], [1], [0, 0, 1, 1], [], []>} : vector<8x1152xbf16>, vector<1152x512xbf16>, vector<8x512xf32> -> vector<8x512xf32>
    %c0_21 = arith.constant 0 : index
    %c0_22 = arith.constant 0 : index
    %33 = vector.load %arg5[%c0_21, %c0_22] : memref<1x512xf32, #tpu.memory_space<vmem>>, vector<1x512xf32>
    %34 = vector.broadcast %33 : vector<1x512xf32> to vector<8x512xf32>
    %35 = arith.addf %32, %34 : vector<8x512xf32>
    %cst_23 = arith.constant 0.000000e+00 : f32
    %36 = vector.broadcast %cst_23 : f32 to vector<8x512xf32>
    %37 = arith.maximumf %35, %36 : vector<8x512xf32>
    %38 = arith.truncf %37 : vector<8x512xf32> to vector<8x512xbf16>
    %c0_24 = arith.constant 0 : index
    %c0_25 = arith.constant 0 : index
    %39 = vector.load %arg6[%c0_24, %c0_25] : memref<512x512xbf16, #tpu.memory_space<vmem>>, vector<512x512xbf16>
    %cst_26 = arith.constant dense<0.000000e+00> : vector<8x512xf32>
    %40 = tpu.matmul %38, %39, %cst_26 {dimension_numbers = #tpu.dot_dimension_numbers<[1], [0], [0], [1], [0, 0, 1, 1], [], []>} : vector<8x512xbf16>, vector<512x512xbf16>, vector<8x512xf32> -> vector<8x512xf32>
    %c0_27 = arith.constant 0 : index
    %c0_28 = arith.constant 0 : index
    %41 = vector.load %arg7[%c0_27, %c0_28] : memref<1x512xf32, #tpu.memory_space<vmem>>, vector<1x512xf32>
    %42 = vector.broadcast %41 : vector<1x512xf32> to vector<8x512xf32>
    %43 = arith.addf %40, %42 : vector<8x512xf32>
    %cst_29 = arith.constant 0.000000e+00 : f32
    %44 = vector.broadcast %cst_29 : f32 to vector<8x512xf32>
    %45 = arith.maximumf %43, %44 : vector<8x512xf32>
    %46 = arith.truncf %45 : vector<8x512xf32> to vector<8x512xbf16>
    %c0_30 = arith.constant 0 : index
    %c0_31 = arith.constant 0 : index
    %47 = vector.load %arg8[%c0_30, %c0_31] : memref<512x128xbf16, #tpu.memory_space<vmem>>, vector<512x128xbf16>
    %cst_32 = arith.constant dense<0.000000e+00> : vector<8x128xf32>
    %48 = tpu.matmul %46, %47, %cst_32 {dimension_numbers = #tpu.dot_dimension_numbers<[1], [0], [0], [1], [0, 0, 1, 1], [], []>} : vector<8x512xbf16>, vector<512x128xbf16>, vector<8x128xf32> -> vector<8x128xf32>
    %c0_33 = arith.constant 0 : index
    %c0_34 = arith.constant 0 : index
    %49 = vector.load %arg9[%c0_33, %c0_34] : memref<1x128xf32, #tpu.memory_space<vmem>>, vector<1x128xf32>
    %50 = vector.broadcast %49 : vector<1x128xf32> to vector<8x128xf32>
    %51 = arith.addf %48, %50 : vector<8x128xf32>
    %cst_35 = arith.constant 0.000000e+00 : f32
    %52 = vector.broadcast %cst_35 : f32 to vector<8x128xf32>
    %53 = arith.maximumf %51, %52 : vector<8x128xf32>
    %54 = arith.truncf %53 : vector<8x128xf32> to vector<8x128xbf16>
    %c0_36 = arith.constant 0 : index
    %c0_37 = arith.constant 0 : index
    %55 = vector.load %arg10[%c0_36, %c0_37] : memref<128x128xbf16, #tpu.memory_space<vmem>>, vector<128x128xbf16>
    %cst_38 = arith.constant dense<0.000000e+00> : vector<8x128xf32>
    %56 = tpu.matmul %54, %55, %cst_38 {dimension_numbers = #tpu.dot_dimension_numbers<[1], [0], [0], [1], [0, 0, 1, 1], [], []>} : vector<8x128xbf16>, vector<128x128xbf16>, vector<8x128xf32> -> vector<8x128xf32>
    %c0_39 = arith.constant 0 : index
    %c0_40 = arith.constant 0 : index
    %57 = vector.load %arg11[%c0_39, %c0_40] : memref<1x128xf32, #tpu.memory_space<vmem>>, vector<1x128xf32>
    %58 = vector.broadcast %57 : vector<1x128xf32> to vector<8x128xf32>
    %59 = arith.addf %56, %58 : vector<8x128xf32>
    %cst_41 = arith.constant 0.000000e+00 : f32
    %60 = vector.broadcast %cst_41 : f32 to vector<8x128xf32>
    %61 = arith.maximumf %59, %60 : vector<8x128xf32>
    %62 = arith.truncf %61 : vector<8x128xf32> to vector<8x128xbf16>
    %c0_42 = arith.constant 0 : index
    %c0_43 = arith.constant 0 : index
    %63 = vector.load %arg12[%c0_42, %c0_43] : memref<128x128xbf16, #tpu.memory_space<vmem>>, vector<128x128xbf16>
    %cst_44 = arith.constant dense<0.000000e+00> : vector<8x128xf32>
    %64 = tpu.matmul %62, %63, %cst_44 {dimension_numbers = #tpu.dot_dimension_numbers<[1], [0], [0], [1], [0, 0, 1, 1], [], []>} : vector<8x128xbf16>, vector<128x128xbf16>, vector<8x128xf32> -> vector<8x128xf32>
    %c0_45 = arith.constant 0 : index
    %c0_46 = arith.constant 0 : index
    %65 = vector.load %arg13[%c0_45, %c0_46] : memref<1x128xf32, #tpu.memory_space<vmem>>, vector<1x128xf32>
    %66 = vector.broadcast %65 : vector<1x128xf32> to vector<8x128xf32>
    %67 = arith.addf %64, %66 : vector<8x128xf32>
    %c0_47 = arith.constant 0 : index
    %c0_48 = arith.constant 0 : index
    %68 = vector.load %arg14[%c0_47, %c0_48] : memref<8x128xf32, #tpu.memory_space<vmem>>, vector<8x128xf32>
    tpu.vector_store %arg14[%c0_47, %c0_48], %67 {strides = array<i32>} : memref<8x128xf32, #tpu.memory_space<vmem>>, vector<8x128xf32>,
    return
  }
  func.func @transform_0(%arg0: i32) -> (i32, i32) {
    %c0_i32 = arith.constant 0 : i32
    %c0_i32_0 = arith.constant 0 : i32
    return %arg0, %c0_i32 : i32, i32
  }
  func.func @transform_1(%arg0: i32) -> (i32, i32) {
    %c0_i32 = arith.constant 0 : i32
    %c0_i32_0 = arith.constant 0 : i32
    %c0_i32_1 = arith.constant 0 : i32
    return %c0_i32, %c0_i32_0 : i32, i32
  }
  func.func @transform_2(%arg0: i32) -> (i32, i32) {
    %c0_i32 = arith.constant 0 : i32
    %c0_i32_0 = arith.constant 0 : i32
    %c0_i32_1 = arith.constant 0 : i32
    return %c0_i32, %c0_i32_0 : i32, i32
  }
  func.func @transform_3(%arg0: i32) -> (i32, i32) {
    %c0_i32 = arith.constant 0 : i32
    %c0_i32_0 = arith.constant 0 : i32
    %c0_i32_1 = arith.constant 0 : i32
    return %c0_i32, %c0_i32_0 : i32, i32
  }
  func.func @transform_4(%arg0: i32) -> (i32, i32) {
    %c0_i32 = arith.constant 0 : i32
    %c0_i32_0 = arith.constant 0 : i32
    %c0_i32_1 = arith.constant 0 : i32
    return %c0_i32, %c0_i32_0 : i32, i32
  }
  func.func @transform_5(%arg0: i32) -> (i32, i32) {
    %c0_i32 = arith.constant 0 : i32
    %c0_i32_0 = arith.constant 0 : i32
    %c0_i32_1 = arith.constant 0 : i32
    return %c0_i32, %c0_i32_0 : i32, i32
  }
  func.func @transform_6(%arg0: i32) -> (i32, i32) {
    %c0_i32 = arith.constant 0 : i32
    %c0_i32_0 = arith.constant 0 : i32
    %c0_i32_1 = arith.constant 0 : i32
    return %c0_i32, %c0_i32_0 : i32, i32
  }
  func.func @transform_7(%arg0: i32) -> (i32, i32) {
    %c0_i32 = arith.constant 0 : i32
    %c0_i32_0 = arith.constant 0 : i32
    %c0_i32_1 = arith.constant 0 : i32
    return %c0_i32, %c0_i32_0 : i32, i32
  }
  func.func @transform_8(%arg0: i32) -> (i32, i32) {
    %c0_i32 = arith.constant 0 : i32
    %c0_i32_0 = arith.constant 0 : i32
    %c0_i32_1 = arith.constant 0 : i32
    return %c0_i32, %c0_i32_0 : i32, i32
  }
  func.func @transform_9(%arg0: i32) -> (i32, i32) {
    %c0_i32 = arith.constant 0 : i32
    %c0_i32_0 = arith.constant 0 : i32
    %c0_i32_1 = arith.constant 0 : i32
    return %c0_i32, %c0_i32_0 : i32, i32
  }
  func.func @transform_10(%arg0: i32) -> (i32, i32) {
    %c0_i32 = arith.constant 0 : i32
    %c0_i32_0 = arith.constant 0 : i32
    %c0_i32_1 = arith.constant 0 : i32
    return %c0_i32, %c0_i32_0 : i32, i32
  }
  func.func @transform_11(%arg0: i32) -> (i32, i32) {
    %c0_i32 = arith.constant 0 : i32
    %c0_i32_0 = arith.constant 0 : i32
    %c0_i32_1 = arith.constant 0 : i32
    return %c0_i32, %c0_i32_0 : i32, i32
  }
  func.func @transform_12(%arg0: i32) -> (i32, i32) {
    %c0_i32 = arith.constant 0 : i32
    %c0_i32_0 = arith.constant 0 : i32
    %c0_i32_1 = arith.constant 0 : i32
    return %c0_i32, %c0_i32_0 : i32, i32
  }
  func.func @transform_13(%arg0: i32) -> (i32, i32) {
    %c0_i32 = arith.constant 0 : i32
    %c0_i32_0 = arith.constant 0 : i32
    return %arg0, %c0_i32 : i32, i32
  }
}

</mosaic_0001>

<llo_original>
// kernel: test_model_forward.1
$region0: #{test_model_forward.1}
  #allocation0 [shape = 'u32[]', space=smem, size = 0x4, offset = 0x4, fixed_abs, tag = 'smem constant byte address 0x4 - core index']
  #allocation1 [shape = 'u32[144,128]{1,0:T(1,128)}', space=vmem, size = 0x12000, scoped, tag = 'internal scratch']
  %s0 = inlined_call_operand.vmem [shape: bf16[576,128], index: 0, kind: input, shape index: {}]
  %s1 = inlined_call_operand.vmem [shape: bf16[128,128], index: 1, kind: input, shape index: {}]
  %s2 = inlined_call_operand.vmem [shape: f32[1,128], index: 2, kind: input, shape index: {}]
  %s3 = inlined_call_operand.vmem [shape: bf16[1152,512], index: 3, kind: input, shape index: {}]
  %s4 = inlined_call_operand.vmem [shape: f32[1,512], index: 4, kind: input, shape index: {}]
  %s5 = inlined_call_operand.vmem [shape: bf16[512,512], index: 5, kind: input, shape index: {}]
  %s6 = inlined_call_operand.vmem [shape: f32[1,512], index: 6, kind: input, shape index: {}]
  %s7 = inlined_call_operand.vmem [shape: bf16[512,128], index: 7, kind: input, shape index: {}]
  %s8 = inlined_call_operand.vmem [shape: f32[1,128], index: 8, kind: input, shape index: {}]
  %s9 = inlined_call_operand.vmem [shape: bf16[128,128], index: 9, kind: input, shape index: {}]
  %s10 = inlined_call_operand.vmem [shape: f32[1,128], index: 10, kind: input, shape index: {}]
  %s11 = inlined_call_operand.vmem [shape: bf16[128,128], index: 11, kind: input, shape index: {}]
  %s12 = inlined_call_operand.vmem [shape: f32[1,128], index: 12, kind: input, shape index: {}]
  %s13 = inlined_call_operand.vmem [shape: f32[16,128], index: 13, kind: output, shape index: {}]
  %s14 = sld [smem:[#allocation0]]
  $region85: #{test_model_forward.1} parent=0
    _
  %s16 = ssub.s32 1, %s14
  %s17 = scalar_select 0, %s16, %s14
  loop: start=0, step=1, limit=4
  $region2: #{test_model_forward.1} parent=0 // loop_pre_header
    _
  $region3: #{test_model_forward.1} parent=0 // loop_header
    %s19 = sphi 0, %s23
    %p20 = scmp.ge.s32.totalorder %s19, 4
    %s29 = sphi 0, %s31
    %s32 = sphi 0, %s29
    %s33 = sphi 0, %s32
    %s49 = sphi 0, %s33
    %s53 = sphi 0, %s53
    %s55 = sphi 0, %s53
    %s56 = sphi 0, %s55
    %s70 = sphi 0, %s56
    %s74 = sphi 0, %s74
    %s76 = sphi 0, %s74
    %s77 = sphi 0, %s76
    %s91 = sphi 0, %s77
    %s95 = sphi 0, %s95
    %s97 = sphi 0, %s95
    %s98 = sphi 0, %s97
    %s112 = sphi 0, %s98
    %s116 = sphi 0, %s116
    %s118 = sphi 0, %s116
    %s119 = sphi 0, %s118
    %s133 = sphi 0, %s119
    %s137 = sphi 0, %s137
    %s139 = sphi 0, %s137
    %s140 = sphi 0, %s139
    %s154 = sphi 0, %s140
    %s158 = sphi 0, %s158
    %s160 = sphi 0, %s158
    %s161 = sphi 0, %s160
    %s175 = sphi 0, %s161
    %s179 = sphi 0, %s179
    %s181 = sphi 0, %s179
    %s182 = sphi 0, %s181
    %s196 = sphi 0, %s182
    %s200 = sphi 0, %s200
    %s202 = sphi 0, %s200
    %s203 = sphi 0, %s202
    %s217 = sphi 0, %s203
    %s221 = sphi 0, %s221
    %s223 = sphi 0, %s221
    %s224 = sphi 0, %s223
    %s238 = sphi 0, %s224
    %s242 = sphi 0, %s242
    %s244 = sphi 0, %s242
    %s245 = sphi 0, %s244
    %s259 = sphi 0, %s245
    %s263 = sphi 0, %s263
    %s265 = sphi 0, %s263
    %s266 = sphi 0, %s265
    %s280 = sphi 0, %s266
    %s284 = sphi 0, %s284
    %s286 = sphi 0, %s284
    %s287 = sphi 0, %s286
    %s301 = sphi 0, %s287
    %s307 = sphi 0, %s309
    %s310 = sphi 0, %s307
    %s311 = sphi 0, %s310
    %s327 = sphi 0, %s311
  $region4: #{test_model_forward.1} parent=0 // loop_header_branch
    %22 = sbr.rel (%p20) target = $region8
  $region5: #{test_model_forward.1} parent=0 // loop_body
    %s24 = ssub.s32 %s19, 1
    %s25 = ssub.s32 %s19, 2
    %s26 = sadd.s32 %s19, 1
    %s27 = ssub.s32 %s19, %s26
    %p28 = scmp.eq.s32.totalorder %s27, 0
    %s30 = sadd.s32 %s29, 1
    %s31 = scalar_select %p28, %s29, %s30
    %p34 = pneg %p28
    %p35 = scmp.eq.s32.totalorder %s19, 1
    %p36 = por %p34, %p35
    %p37 = scmp.ne.s32.totalorder %s29, %s32
    %p38 = scmp.eq.s32.totalorder %s19, 0
    %p39 = por %p37, %p38
    %p40 = scmp.ne.s32.totalorder %s29, %s32
    %p41 = scmp.eq.s32.totalorder %s24, 1
    %p42 = por %p40, %p41
    %p43 = scmp.ne.s32.totalorder %s32, %s33
    %p44 = scmp.eq.s32.totalorder %s24, 0
    %p45 = por %p43, %p44
    %p46 = scmp.ne.s32.totalorder %s32, %s33
    %p47 = scmp.eq.s32.totalorder %s25, 1
    %p48 = por %p46, %p47
    %p50 = scmp.ne.s32.totalorder %s33, %s49
    %p51 = scmp.eq.s32.totalorder %s25, 0
    %p52 = por %p50, %p51
    %s54 = sadd.s32 %s53, 1
    %p57 = scmp.eq.s32.totalorder %s19, 1
    %p58 = scmp.ne.s32.totalorder %s53, %s55
    %p59 = scmp.eq.s32.totalorder %s19, 0
    %p60 = por %p58, %p59
    %p61 = scmp.ne.s32.totalorder %s53, %s55
    %p62 = scmp.eq.s32.totalorder %s24, 1
    %p63 = por %p61, %p62
    %p64 = scmp.ne.s32.totalorder %s55, %s56
    %p65 = scmp.eq.s32.totalorder %s24, 0
    %p66 = por %p64, %p65
    %p67 = scmp.ne.s32.totalorder %s55, %s56
    %p68 = scmp.eq.s32.totalorder %s25, 1
    %p69 = por %p67, %p68
    %p71 = scmp.ne.s32.totalorder %s56, %s70
    %p72 = scmp.eq.s32.totalorder %s25, 0
    %p73 = por %p71, %p72
    %s75 = sadd.s32 %s74, 1
    %p78 = scmp.eq.s32.totalorder %s19, 1
    %p79 = scmp.ne.s32.totalorder %s74, %s76
    %p80 = scmp.eq.s32.totalorder %s19, 0
    %p81 = por %p79, %p80
    %p82 = scmp.ne.s32.totalorder %s74, %s76
    %p83 = scmp.eq.s32.totalorder %s24, 1
    %p84 = por %p82, %p83
    %p85 = scmp.ne.s32.totalorder %s76, %s77
    %p86 = scmp.eq.s32.totalorder %s24, 0
    %p87 = por %p85, %p86
    %p88 = scmp.ne.s32.totalorder %s76, %s77
    %p89 = scmp.eq.s32.totalorder %s25, 1
    %p90 = por %p88, %p89
    %p92 = scmp.ne.s32.totalorder %s77, %s91
    %p93 = scmp.eq.s32.totalorder %s25, 0
    %p94 = por %p92, %p93
    %s96 = sadd.s32 %s95, 1
    %p99 = scmp.eq.s32.totalorder %s19, 1
    %p100 = scmp.ne.s32.totalorder %s95, %s97
    %p101 = scmp.eq.s32.totalorder %s19, 0
    %p102 = por %p100, %p101
    %p103 = scmp.ne.s32.totalorder %s95, %s97
    %p104 = scmp.eq.s32.totalorder %s24, 1
    %p105 = por %p103, %p104
    %p106 = scmp.ne.s32.totalorder %s97, %s98
    %p107 = scmp.eq.s32.totalorder %s24, 0
    %p108 = por %p106, %p107
    %p109 = scmp.ne.s32.totalorder %s97, %s98
    %p110 = scmp.eq.s32.totalorder %s25, 1
    %p111 = por %p109, %p110
    %p113 = scmp.ne.s32.totalorder %s98, %s112
    %p114 = scmp.eq.s32.totalorder %s25, 0
    %p115 = por %p113, %p114
    %s117 = sadd.s32 %s116, 1
    %p120 = scmp.eq.s32.totalorder %s19, 1
    %p121 = scmp.ne.s32.totalorder %s116, %s118
    %p122 = scmp.eq.s32.totalorder %s19, 0
    %p123 = por %p121, %p122
    %p124 = scmp.ne.s32.totalorder %s116, %s118
    %p125 = scmp.eq.s32.totalorder %s24, 1
    %p126 = por %p124, %p125
    %p127 = scmp.ne.s32.totalorder %s118, %s119
    %p128 = scmp.eq.s32.totalorder %s24, 0
    %p129 = por %p127, %p128
    %p130 = scmp.ne.s32.totalorder %s118, %s119
    %p131 = scmp.eq.s32.totalorder %s25, 1
    %p132 = por %p130, %p131
    %p134 = scmp.ne.s32.totalorder %s119, %s133
    %p135 = scmp.eq.s32.totalorder %s25, 0
    %p136 = por %p134, %p135
    %s138 = sadd.s32 %s137, 1
    %p141 = scmp.eq.s32.totalorder %s19, 1
    %p142 = scmp.ne.s32.totalorder %s137, %s139
    %p143 = scmp.eq.s32.totalorder %s19, 0
    %p144 = por %p142, %p143
    %p145 = scmp.ne.s32.totalorder %s137, %s139
    %p146 = scmp.eq.s32.totalorder %s24, 1
    %p147 = por %p145, %p146
    %p148 = scmp.ne.s32.totalorder %s139, %s140
    %p149 = scmp.eq.s32.totalorder %s24, 0
    %p150 = por %p148, %p149
    %p151 = scmp.ne.s32.totalorder %s139, %s140
    %p152 = scmp.eq.s32.totalorder %s25, 1
    %p153 = por %p151, %p152
    %p155 = scmp.ne.s32.totalorder %s140, %s154
    %p156 = scmp.eq.s32.totalorder %s25, 0
    %p157 = por %p155, %p156
    %s159 = sadd.s32 %s158, 1
    %p162 = scmp.eq.s32.totalorder %s19, 1
    %p163 = scmp.ne.s32.totalorder %s158, %s160
    %p164 = scmp.eq.s32.totalorder %s19, 0
    %p165 = por %p163, %p164
    %p166 = scmp.ne.s32.totalorder %s158, %s160
    %p167 = scmp.eq.s32.totalorder %s24, 1
    %p168 = por %p166, %p167
    %p169 = scmp.ne.s32.totalorder %s160, %s161
    %p170 = scmp.eq.s32.totalorder %s24, 0
    %p171 = por %p169, %p170
    %p172 = scmp.ne.s32.totalorder %s160, %s161
    %p173 = scmp.eq.s32.totalorder %s25, 1
    %p174 = por %p172, %p173
    %p176 = scmp.ne.s32.totalorder %s161, %s175
    %p177 = scmp.eq.s32.totalorder %s25, 0
    %p178 = por %p176, %p177
    %s180 = sadd.s32 %s179, 1
    %p183 = scmp.eq.s32.totalorder %s19, 1
    %p184 = scmp.ne.s32.totalorder %s179, %s181
    %p185 = scmp.eq.s32.totalorder %s19, 0
    %p186 = por %p184, %p185
    %p187 = scmp.ne.s32.totalorder %s179, %s181
    %p188 = scmp.eq.s32.totalorder %s24, 1
    %p189 = por %p187, %p188
    %p190 = scmp.ne.s32.totalorder %s181, %s182
    %p191 = scmp.eq.s32.totalorder %s24, 0
    %p192 = por %p190, %p191
    %p193 = scmp.ne.s32.totalorder %s181, %s182
    %p194 = scmp.eq.s32.totalorder %s25, 1
    %p195 = por %p193, %p194
    %p197 = scmp.ne.s32.totalorder %s182, %s196
    %p198 = scmp.eq.s32.totalorder %s25, 0
    %p199 = por %p197, %p198
    %s201 = sadd.s32 %s200, 1
    %p204 = scmp.eq.s32.totalorder %s19, 1
    %p205 = scmp.ne.s32.totalorder %s200, %s202
    %p206 = scmp.eq.s32.totalorder %s19, 0
    %p207 = por %p205, %p206
    %p208 = scmp.ne.s32.totalorder %s200, %s202
    %p209 = scmp.eq.s32.totalorder %s24, 1
    %p210 = por %p208, %p209
    %p211 = scmp.ne.s32.totalorder %s202, %s203
    %p212 = scmp.eq.s32.totalorder %s24, 0
    %p213 = por %p211, %p212
    %p214 = scmp.ne.s32.totalorder %s202, %s203
    %p215 = scmp.eq.s32.totalorder %s25, 1
    %p216 = por %p214, %p215
    %p218 = scmp.ne.s32.totalorder %s203, %s217
    %p219 = scmp.eq.s32.totalorder %s25, 0
    %p220 = por %p218, %p219
    %s222 = sadd.s32 %s221, 1
    %p225 = scmp.eq.s32.totalorder %s19, 1
    %p226 = scmp.ne.s32.totalorder %s221, %s223
    %p227 = scmp.eq.s32.totalorder %s19, 0
    %p228 = por %p226, %p227
    %p229 = scmp.ne.s32.totalorder %s221, %s223
    %p230 = scmp.eq.s32.totalorder %s24, 1
    %p231 = por %p229, %p230
    %p232 = scmp.ne.s32.totalorder %s223, %s224
    %p233 = scmp.eq.s32.totalorder %s24, 0
    %p234 = por %p232, %p233
    %p235 = scmp.ne.s32.totalorder %s223, %s224
    %p236 = scmp.eq.s32.totalorder %s25, 1
    %p237 = por %p235, %p236
    %p239 = scmp.ne.s32.totalorder %s224, %s238
    %p240 = scmp.eq.s32.totalorder %s25, 0
    %p241 = por %p239, %p240
    %s243 = sadd.s32 %s242, 1
    %p246 = scmp.eq.s32.totalorder %s19, 1
    %p247 = scmp.ne.s32.totalorder %s242, %s244
    %p248 = scmp.eq.s32.totalorder %s19, 0
    %p249 = por %p247, %p248
    %p250 = scmp.ne.s32.totalorder %s242, %s244
    %p251 = scmp.eq.s32.totalorder %s24, 1
    %p252 = por %p250, %p251
    %p253 = scmp.ne.s32.totalorder %s244, %s245
    %p254 = scmp.eq.s32.totalorder %s24, 0
    %p255 = por %p253, %p254
    %p256 = scmp.ne.s32.totalorder %s244, %s245
    %p257 = scmp.eq.s32.totalorder %s25, 1
    %p258 = por %p256, %p257
    %p260 = scmp.ne.s32.totalorder %s245, %s259
    %p261 = scmp.eq.s32.totalorder %s25, 0
    %p262 = por %p260, %p261
    %s264 = sadd.s32 %s263, 1
    %p267 = scmp.eq.s32.totalorder %s19, 1
    %p268 = scmp.ne.s32.totalorder %s263, %s265
    %p269 = scmp.eq.s32.totalorder %s19, 0
    %p270 = por %p268, %p269
    %p271 = scmp.ne.s32.totalorder %s263, %s265
    %p272 = scmp.eq.s32.totalorder %s24, 1
    %p273 = por %p271, %p272
    %p274 = scmp.ne.s32.totalorder %s265, %s266
    %p275 = scmp.eq.s32.totalorder %s24, 0
    %p276 = por %p274, %p275
    %p277 = scmp.ne.s32.totalorder %s265, %s266
    %p278 = scmp.eq.s32.totalorder %s25, 1
    %p279 = por %p277, %p278
    %p281 = scmp.ne.s32.totalorder %s266, %s280
    %p282 = scmp.eq.s32.totalorder %s25, 0
    %p283 = por %p281, %p282
    %s285 = sadd.s32 %s284, 1
    %p288 = scmp.eq.s32.totalorder %s19, 1
    %p289 = scmp.ne.s32.totalorder %s284, %s286
    %p290 = scmp.eq.s32.totalorder %s19, 0
    %p291 = por %p289, %p290
    %p292 = scmp.ne.s32.totalorder %s284, %s286
    %p293 = scmp.eq.s32.totalorder %s24, 1
    %p294 = por %p292, %p293
    %p295 = scmp.ne.s32.totalorder %s286, %s287
    %p296 = scmp.eq.s32.totalorder %s24, 0
    %p297 = por %p295, %p296
    %p298 = scmp.ne.s32.totalorder %s286, %s287
    %p299 = scmp.eq.s32.totalorder %s25, 1
    %p300 = por %p298, %p299
    %p302 = scmp.ne.s32.totalorder %s287, %s301
    %p303 = scmp.eq.s32.totalorder %s25, 0
    %p304 = por %p302, %p303
    %s305 = ssub.s32 %s19, %s26
    %p306 = scmp.eq.s32.totalorder %s305, 0
    %s308 = sadd.s32 %s307, 1
    %s309 = scalar_select %p306, %s307, %s308
    %p312 = pneg %p306
    %p313 = scmp.eq.s32.totalorder %s19, 1
    %p314 = por %p312, %p313
    %p315 = scmp.ne.s32.totalorder %s307, %s310
    %p316 = scmp.eq.s32.totalorder %s19, 0
    %p317 = por %p315, %p316
    %p318 = scmp.ne.s32.totalorder %s307, %s310
    %p319 = scmp.eq.s32.totalorder %s24, 1
    %p320 = por %p318, %p319
    %p321 = scmp.ne.s32.totalorder %s310, %s311
    %p322 = scmp.eq.s32.totalorder %s24, 0
    %p323 = por %p321, %p322
    %p324 = scmp.ne.s32.totalorder %s310, %s311
    %p325 = scmp.eq.s32.totalorder %s25, 1
    %p326 = por %p324, %p325
    %p328 = scmp.ne.s32.totalorder %s311, %s327
    %p329 = scmp.eq.s32.totalorder %s25, 0
    %p330 = por %p328, %p329
    %p331 = scmp.le.s32.totalorder 1, %s19
    %p332 = scmp.lt.s32.totalorder %s19, 3
    %p333 = pnand %p331, %p332
    %p334 = pneg %p333
    // Predicated region
    $region9: #{test_model_forward.1} parent=5 // pred_check
      _
    $region10: #{test_model_forward.1} parent=5 // pred_check_branch
      %336 = sbr.rel (%p333) target = $region12
    $region11: #{test_model_forward.1} parent=5 // pred_region
      %s337 = ssub.s32 %s19, 1
      // Predicated region
      $region13: #{test_model_forward.1} parent=11 // pred_check
        %p338 = pneg %p66
      $region14: #{test_model_forward.1} parent=11 // pred_check_branch
        %340 = sbr.rel (%p338) target = $region16
      $region15: #{test_model_forward.1} parent=11 // pred_region
        _
      $region16: #{test_model_forward.1} parent=11 // pred_fallthru
        _
      // Predicated region
      $region17: #{test_model_forward.1} parent=11 // pred_check
        %p341 = pneg %p87
      $region18: #{test_model_forward.1} parent=11 // pred_check_branch
        %343 = sbr.rel (%p341) target = $region20
      $region19: #{test_model_forward.1} parent=11 // pred_region
        _
      $region20: #{test_model_forward.1} parent=11 // pred_fallthru
        _
      // Predicated region
      $region21: #{test_model_forward.1} parent=11 // pred_check
        %p344 = pneg %p108
      $region22: #{test_model_forward.1} parent=11 // pred_check_branch
        %346 = sbr.rel (%p344) target = $region24
      $region23: #{test_model_forward.1} parent=11 // pred_region
        _
      $region24: #{test_model_forward.1} parent=11 // pred_fallthru
        _
      // Predicated region
      $region25: #{test_model_forward.1} parent=11 // pred_check
        %p347 = pneg %p129
      $region26: #{test_model_forward.1} parent=11 // pred_check_branch
        %349 = sbr.rel (%p347) target = $region28
      $region27: #{test_model_forward.1} parent=11 // pred_region
        _
      $region28: #{test_model_forward.1} parent=11 // pred_fallthru
        _
      // Predicated region
      $region29: #{test_model_forward.1} parent=11 // pred_check
        %p350 = pneg %p150
      $region30: #{test_model_forward.1} parent=11 // pred_check_branch
        %352 = sbr.rel (%p350) target = $region32
      $region31: #{test_model_forward.1} parent=11 // pred_region
        _
      $region32: #{test_model_forward.1} parent=11 // pred_fallthru
        _
      // Predicated region
      $region33: #{test_model_forward.1} parent=11 // pred_check
        %p353 = pneg %p171
      $region34: #{test_model_forward.1} parent=11 // pred_check_branch
        %355 = sbr.rel (%p353) target = $region36
      $region35: #{test_model_forward.1} parent=11 // pred_region
        _
      $region36: #{test_model_forward.1} parent=11 // pred_fallthru
        _
      // Predicated region
      $region37: #{test_model_forward.1} parent=11 // pred_check
        %p356 = pneg %p192
      $region38: #{test_model_forward.1} parent=11 // pred_check_branch
        %358 = sbr.rel (%p356) target = $region40
      $region39: #{test_model_forward.1} parent=11 // pred_region
        _
      $region40: #{test_model_forward.1} parent=11 // pred_fallthru
        _
      // Predicated region
      $region41: #{test_model_forward.1} parent=11 // pred_check
        %p359 = pneg %p213
      $region42: #{test_model_forward.1} parent=11 // pred_check_branch
        %361 = sbr.rel (%p359) target = $region44
      $region43: #{test_model_forward.1} parent=11 // pred_region
        _
      $region44: #{test_model_forward.1} parent=11 // pred_fallthru
        _
      // Predicated region
      $region45: #{test_model_forward.1} parent=11 // pred_check
        %p362 = pneg %p234
      $region46: #{test_model_forward.1} parent=11 // pred_check_branch
        %364 = sbr.rel (%p362) target = $region48
      $region47: #{test_model_forward.1} parent=11 // pred_region
        _
      $region48: #{test_model_forward.1} parent=11 // pred_fallthru
        _
      // Predicated region
      $region49: #{test_model_forward.1} parent=11 // pred_check
        %p365 = pneg %p255
      $region50: #{test_model_forward.1} parent=11 // pred_check_branch
        %367 = sbr.rel (%p365) target = $region52
      $region51: #{test_model_forward.1} parent=11 // pred_region
        _
      $region52: #{test_model_forward.1} parent=11 // pred_fallthru
        _
      // Predicated region
      $region53: #{test_model_forward.1} parent=11 // pred_check
        %p368 = pneg %p276
      $region54: #{test_model_forward.1} parent=11 // pred_check_branch
        %370 = sbr.rel (%p368) target = $region56
      $region55: #{test_model_forward.1} parent=11 // pred_region
        _
      $region56: #{test_model_forward.1} parent=11 // pred_fallthru
        _
      // Predicated region
      $region57: #{test_model_forward.1} parent=11 // pred_check
        %p371 = pneg %p297
      $region58: #{test_model_forward.1} parent=11 // pred_check_branch
        %373 = sbr.rel (%p371) target = $region60
      $region59: #{test_model_forward.1} parent=11 // pred_region
        _
      $region60: #{test_model_forward.1} parent=11 // pred_fallthru
        _
    $region12: #{test_model_forward.1} parent=5 // pred_fallthru
      _
    %p374 = scmp.lt.s32.totalorder %s19, 2
    // Predicated region
    $region61: #{test_model_forward.1} parent=5 // pred_check
      %p375 = pneg %p374
    $region62: #{test_model_forward.1} parent=5 // pred_check_branch
      %377 = sbr.rel (%p375) target = $region64
    $region63: #{test_model_forward.1} parent=5 // pred_region
      // Predicated region
      $region65: #{test_model_forward.1} parent=63 // pred_check
        %p378 = pneg %p39
      $region66: #{test_model_forward.1} parent=63 // pred_check_branch
        %380 = sbr.rel (%p378) target = $region68
      $region67: #{test_model_forward.1} parent=63 // pred_region
        %s381 = smul.u32 36, %s19
        %p382 = scmp.lt.s32.totalorder %s381, 71
        %s383 = scalar_select %p382, %s381, 71
        %s384 = smul.addr %s383, 4
        %s385 = scalar_lea.vmem %s0, %s384
        %s386 = smul.u32 36, %s19
      $region68: #{test_model_forward.1} parent=63 // pred_fallthru
        _
    $region64: #{test_model_forward.1} parent=5 // pred_fallthru
      _
    %p387 = scmp.le.s32.totalorder 1, %s19
    %p388 = scmp.lt.s32.totalorder %s19, 3
    %p389 = pnand %p387, %p388
    %p390 = pneg %p389
    // Predicated region
    $region69: #{test_model_forward.1} parent=5 // pred_check
      _
    $region70: #{test_model_forward.1} parent=5 // pred_check_branch
      %392 = sbr.rel (%p389) target = $region72
    $region71: #{test_model_forward.1} parent=5 // pred_region
      %s393 = ssub.s32 %s19, 1
      %s394 = smul.u32 36, %s24
      %p395 = scmp.lt.s32.totalorder %s394, 71
      %s396 = scalar_select %p395, %s394, 71
      %s397 = smul.addr %s396, 4
      %s398 = scalar_lea.vmem %s0, %s397
      %p399 = pneg %p45
      %p400 = pneg %p42
      %p401 = pneg %p66
      %p402 = pneg %p63
      %p403 = pneg %p87
      %p404 = pneg %p84
      %p405 = pneg %p108
      %p406 = pneg %p105
      %p407 = pneg %p129
      %p408 = pneg %p126
      %p409 = pneg %p150
      %p410 = pneg %p147
      %p411 = pneg %p171
      %p412 = pneg %p168
      %p413 = pneg %p192
      %p414 = pneg %p189
      %p415 = pneg %p213
      %p416 = pneg %p210
      %p417 = pneg %p234
      %p418 = pneg %p231
      %p419 = pneg %p255
      %p420 = pneg %p252
      %p421 = pneg %p276
      %p422 = pneg %p273
      %p423 = pneg %p297
      %p424 = pneg %p294
      %p425 = pneg %p323
      %p426 = pneg %p320
      %p427 = scmp.lt.s32.totalorder %s24, 1
      %s428 = scalar_select %p427, %s24, 1
      %s429 = smul.addr %s428, 8
      %s430 = scalar_lea.vmem %s13, %s429
      %s431 = smul.u32 36, %s24
      %p432 = scmp.lt.s32.totalorder %s431, 71
      %s433 = scalar_select %p432, %s431, 71
      %s434 = smul.addr %s433, 4
      %s435 = scalar_lea.vmem %s0, %s434
      %s436 = smul.u32 36, %s24
      %p437 = scmp.lt.s32.totalorder %s24, 1
      %s438 = scalar_select %p437, %s24, 1
      %s439 = smul.addr %s438, 8
      %s440 = scalar_lea.vmem %s13, %s439
      %v442 = vld [vmem:[%s435] sm:$0xf]
      %v443 = vld [vmem:[%s435 + $0x4] sm:$0xf]
      %v444 = vld [vmem:[%s435 + $0x8] sm:$0xf]
      %v445 = vld [vmem:[%s435 + $0xc] sm:$0xf]
      %v446 = vld [vmem:[%s435 + $0x10] sm:$0xf]
      %v447 = vld [vmem:[%s435 + $0x14] sm:$0xf]
      %v448 = vld [vmem:[%s435 + $0x18] sm:$0xf]
      %v449 = vld [vmem:[%s435 + $0x1c] sm:$0xf]
      %v450 = vld [vmem:[%s435 + $0x20] sm:$0xf]
      %v451 = vld [vmem:[%s1] sm:$0xf]
      %v452 = vld [vmem:[%s1 + $0x4] sm:$0xf]
      %v453 = vld [vmem:[%s1 + $0x8] sm:$0xf]
      %v454 = vld [vmem:[%s1 + $0xc] sm:$0xf]
      %v455 = vld [vmem:[%s1 + $0x10] sm:$0xf]
      %v456 = vld [vmem:[%s1 + $0x14] sm:$0xf]
      %v457 = vld [vmem:[%s1 + $0x18] sm:$0xf]
      %v458 = vld [vmem:[%s1 + $0x1c] sm:$0xf]
      %v459 = vld [vmem:[%s1 + $0x20] sm:$0xf]
      %v460 = vld [vmem:[%s1 + $0x24] sm:$0xf]
      %v461 = vld [vmem:[%s1 + $0x28] sm:$0xf]
      %v462 = vld [vmem:[%s1 + $0x2c] sm:$0xf]
      %v463 = vld [vmem:[%s1 + $0x30] sm:$0xf]
      %v464 = vld [vmem:[%s1 + $0x34] sm:$0xf]
      %v465 = vld [vmem:[%s1 + $0x38] sm:$0xf]
      %v466 = vld [vmem:[%s1 + $0x3c] sm:$0xf]
      %v476 = vunpack.c.l.b16 %v442
      %v477 = vunpack.c.l.b16 %v443
      %v478 = vunpack.c.l.b16 %v444
      %v479 = vunpack.c.l.b16 %v445
      %v480 = vunpack.c.l.b16 %v446
      %v481 = vunpack.c.l.b16 %v447
      %v482 = vunpack.c.l.b16 %v448
      %v483 = vunpack.c.l.b16 %v449
      %v484 = vunpack.c.l.b16 %v450
      %v485 = vpack.c.b16 %v477, %v476
      %v486 = vpack.c.b16 %v479, %v478
      %v487 = vpack.c.b16 %v481, %v480
      %v488 = vpack.c.b16 %v483, %v482
      %v489 = vpack.c.b16 %v484, %v484
      %v511 = vunpack.c.l.b16 %v451
      %v512 = vunpack.c.l.b16 %v452
      %v513 = vunpack.c.l.b16 %v453
      %v514 = vunpack.c.l.b16 %v454
      %v515 = vunpack.c.l.b16 %v455
      %v516 = vunpack.c.l.b16 %v456
      %v517 = vunpack.c.l.b16 %v457
      %v518 = vunpack.c.l.b16 %v458
      %v519 = vunpack.c.l.b16 %v459
      %v520 = vunpack.c.l.b16 %v460
      %v521 = vunpack.c.l.b16 %v461
      %v522 = vunpack.c.l.b16 %v462
      %v523 = vunpack.c.l.b16 %v463
      %v524 = vunpack.c.l.b16 %v464
      %v525 = vunpack.c.l.b16 %v465
      %v526 = vunpack.c.l.b16 %v466
      %v527 = vpack.c.b16 %v512, %v511
      %v528 = vpack.c.b16 %v514, %v513
      %v529 = vpack.c.b16 %v516, %v515
      %v530 = vpack.c.b16 %v518, %v517
      %v531 = vpack.c.b16 %v520, %v519
      %v532 = vpack.c.b16 %v522, %v521
      %v533 = vpack.c.b16 %v524, %v523
      %v534 = vpack.c.b16 %v526, %v525
      %543 = vmatprep.subr.bf16.mxu0 0
      %544 = vmatpush1.bf16.msra.mxu0 %v527
      %545 = vmatprep.subr.bf16.mxu0 0
      %546 = vmatpush1.bf16.msra.mxu0 %v528
      %547 = vmatprep.subr.bf16.mxu0 0
      %548 = vmatpush1.bf16.msra.mxu0 %v529
      %549 = vmatprep.subr.bf16.mxu0 0
      %550 = vmatpush1.bf16.msra.mxu0 %v530
      %551 = vmatprep.subr.bf16.mxu0 0
      %552 = vmatpush1.bf16.msra.mxu0 %v531
      %553 = vmatprep.subr.bf16.mxu0 0
      %554 = vmatpush1.bf16.msra.mxu0 %v532
      %555 = vmatprep.subr.bf16.mxu0 0
      %556 = vmatpush1.bf16.msra.mxu0 %v533
      %557 = vmatprep.subr.bf16.mxu0 0
      %558 = vmatpush1.bf16.msra.mxu0 %v534
      %559 = vmatprep.subr.bf16.mxu0 0
      %560 = vmatpush1.bf16.msra.mxu0 0
      %561 = vmatprep.subr.bf16.mxu0 0
      %562 = vmatpush1.bf16.msra.mxu0 0
      %563 = vmatprep.subr.bf16.mxu0 0
      %564 = vmatpush1.bf16.msra.mxu0 0
      %565 = vmatprep.subr.bf16.mxu0 0
      %566 = vmatpush1.bf16.msra.mxu0 0
      %567 = vmatprep.subr.bf16.mxu0 0
      %568 = vmatpush1.bf16.msra.mxu0 0
      %569 = vmatprep.subr.bf16.mxu0 0
      %570 = vmatpush1.bf16.msra.mxu0 0
      %571 = vmatprep.subr.bf16.mxu0 0
      %572 = vmatpush1.bf16.msra.mxu0 0
      %573 = vmatprep.subr.bf16.mxu0 0
      %574 = vmatpush1.bf16.msra.mxu0 0
      %575 = vmatprep.mubr.bf16.mxu0 0
      %576 = vmatmul.mubr.bf16.gmra.mrb[0].mxu0 %v485
      %v577 = vpop.f32.mrb[0].mxu0
      %v578 = vadd.f32 0.0, %v577
      %v579 = vpop.f32.mrb[0].mxu0
      %v580 = vpop.f32.mrb[0].mxu0
      %v581 = vadd.f32 0.0, %v580
      %v582 = vpop.f32.mrb[0].mxu0
      %583 = vmatprep.mubr.bf16.mxu0 0
      %584 = vmatmul.mubr.bf16.gmra.mrb[0].mxu0 %v486
      %v585 = vpop.f32.mrb[0].mxu0
      %v586 = vadd.f32 0.0, %v585
      %v587 = vpop.f32.mrb[0].mxu0
      %v588 = vpop.f32.mrb[0].mxu0
      %v589 = vadd.f32 0.0, %v588
      %v590 = vpop.f32.mrb[0].mxu0
      %591 = vmatprep.mubr.bf16.mxu0 0
      %592 = vmatmul.mubr.bf16.gmra.mrb[0].mxu0 %v487
      %v593 = vpop.f32.mrb[0].mxu0
      %v594 = vadd.f32 0.0, %v593
      %v595 = vpop.f32.mrb[0].mxu0
      %v596 = vpop.f32.mrb[0].mxu0
      %v597 = vadd.f32 0.0, %v596
      %v598 = vpop.f32.mrb[0].mxu0
      %599 = vmatprep.mubr.bf16.mxu0 0
      %600 = vmatmul.mubr.bf16.gmra.mrb[0].mxu0 %v488
      %v601 = vpop.f32.mrb[0].mxu0
      %v602 = vadd.f32 0.0, %v601
      %v603 = vpop.f32.mrb[0].mxu0
      %v604 = vpop.f32.mrb[0].mxu0
      %v605 = vadd.f32 0.0, %v604
      %v606 = vpop.f32.mrb[0].mxu0
      %607 = vmatprep.mubr.bf16.mxu0 0
      %608 = vmatmul.mubr.bf16.gmra.mrb[0].mxu0 %v489
      %v609 = vpop.f32.mrb[0].mxu0
      %v610 = vadd.f32 0.0, %v609
      %v611 = vpop.f32.mrb[0].mxu0
      %v612 = vpop.f32.mrb[0].mxu0
      %v613 = vpop.f32.mrb[0].mxu0
      %614 = vdwg.mxu0
      %v615 = vld [vmem:[%s435 + $0x24] sm:$0xf]
      %v616 = vld [vmem:[%s435 + $0x28] sm:$0xf]
      %v617 = vld [vmem:[%s435 + $0x2c] sm:$0xf]
      %v618 = vld [vmem:[%s435 + $0x30] sm:$0xf]
      %v619 = vld [vmem:[%s435 + $0x34] sm:$0xf]
      %v620 = vld [vmem:[%s435 + $0x38] sm:$0xf]
      %v621 = vld [vmem:[%s435 + $0x3c] sm:$0xf]
      %v622 = vld [vmem:[%s435 + $0x40] sm:$0xf]
      %v623 = vld [vmem:[%s435 + $0x44] sm:$0xf]
      %v633 = vunpack.c.l.b16 %v615
      %v634 = vunpack.c.l.b16 %v616
      %v635 = vunpack.c.l.b16 %v617
      %v636 = vunpack.c.l.b16 %v618
      %v637 = vunpack.c.l.b16 %v619
      %v638 = vunpack.c.l.b16 %v620
      %v639 = vunpack.c.l.b16 %v621
      %v640 = vunpack.c.l.b16 %v622
      %v641 = vunpack.c.l.b16 %v623
      %v642 = vpack.c.b16 %v634, %v633
      %v643 = vpack.c.b16 %v636, %v635
      %v644 = vpack.c.b16 %v638, %v637
      %v645 = vpack.c.b16 %v640, %v639
      %v646 = vpack.c.b16 %v641, %v641
      %652 = vmatprep.subr.bf16.mxu0 0
      %653 = vmatpush1.bf16.msra.mxu0 %v527
      %654 = vmatprep.subr.bf16.mxu0 0
      %655 = vmatpush1.bf16.msra.mxu0 %v528
      %656 = vmatprep.subr.bf16.mxu0 0
      %657 = vmatpush1.bf16.msra.mxu0 %v529
      %658 = vmatprep.subr.bf16.mxu0 0
      %659 = vmatpush1.bf16.msra.mxu0 %v530
      %660 = vmatprep.subr.bf16.mxu0 0
      %661 = vmatpush1.bf16.msra.mxu0 %v531
      %662 = vmatprep.subr.bf16.mxu0 0
      %663 = vmatpush1.bf16.msra.mxu0 %v532
      %664 = vmatprep.subr.bf16.mxu0 0
      %665 = vmatpush1.bf16.msra.mxu0 %v533
      %666 = vmatprep.subr.bf16.mxu0 0
      %667 = vmatpush1.bf16.msra.mxu0 %v534
      %668 = vmatprep.subr.bf16.mxu0 0
      %669 = vmatpush1.bf16.msra.mxu0 0
      %670 = vmatprep.subr.bf16.mxu0 0
      %671 = vmatpush1.bf16.msra.mxu0 0
      %672 = vmatprep.subr.bf16.mxu0 0
      %673 = vmatpush1.bf16.msra.mxu0 0
      %674 = vmatprep.subr.bf16.mxu0 0
      %675 = vmatpush1.bf16.msra.mxu0 0
      %676 = vmatprep.subr.bf16.mxu0 0
      %677 = vmatpush1.bf16.msra.mxu0 0
      %678 = vmatprep.subr.bf16.mxu0 0
      %679 = vmatpush1.bf16.msra.mxu0 0
      %680 = vmatprep.subr.bf16.mxu0 0
      %681 = vmatpush1.bf16.msra.mxu0 0
      %682 = vmatprep.subr.bf16.mxu0 0
      %683 = vmatpush1.bf16.msra.mxu0 0
      %684 = vmatprep.mubr.bf16.mxu0 0
      %685 = vmatmul.mubr.bf16.gmra.mrb[0].mxu0 %v642
      %v686 = vpop.f32.mrb[0].mxu0
      %v687 = vadd.f32 0.0, %v686
      %v688 = vpop.f32.mrb[0].mxu0
      %v689 = vpop.f32.mrb[0].mxu0
      %v690 = vadd.f32 0.0, %v689
      %v691 = vpop.f32.mrb[0].mxu0
      %692 = vmatprep.mubr.bf16.mxu0 0
      %693 = vmatmul.mubr.bf16.gmra.mrb[0].mxu0 %v643
      %v694 = vpop.f32.mrb[0].mxu0
      %v695 = vadd.f32 0.0, %v694
      %v696 = vpop.f32.mrb[0].mxu0
      %v697 = vpop.f32.mrb[0].mxu0
      %v698 = vadd.f32 0.0, %v697
      %v699 = vpop.f32.mrb[0].mxu0
      %700 = vmatprep.mubr.bf16.mxu0 0
      %701 = vmatmul.mubr.bf16.gmra.mrb[0].mxu0 %v644
      %v702 = vpop.f32.mrb[0].mxu0
      %v703 = vadd.f32 0.0, %v702
      %v704 = vpop.f32.mrb[0].mxu0
      %v705 = vpop.f32.mrb[0].mxu0
      %v706 = vadd.f32 0.0, %v705
      %v707 = vpop.f32.mrb[0].mxu0
      %708 = vmatprep.mubr.bf16.mxu0 0
      %709 = vmatmul.mubr.bf16.gmra.mrb[0].mxu0 %v645
      %v710 = vpop.f32.mrb[0].mxu0
      %v711 = vadd.f32 0.0, %v710
      %v712 = vpop.f32.mrb[0].mxu0
      %v713 = vpop.f32.mrb[0].mxu0
      %v714 = vadd.f32 0.0, %v713
      %v715 = vpop.f32.mrb[0].mxu0
      %716 = vmatprep.mubr.bf16.mxu0 0
      %717 = vmatmul.mubr.bf16.gmra.mrb[0].mxu0 %v646
      %v718 = vpop.f32.mrb[0].mxu0
      %v719 = vadd.f32 0.0, %v718
      %v720 = vpop.f32.mrb[0].mxu0
      %v721 = vpop.f32.mrb[0].mxu0
      %v722 = vpop.f32.mrb[0].mxu0
      %723 = vdwg.mxu0
      %v724 = vmax.f32 %v578, %v687
      %v725 = vmax.f32 %v581, %v690
      %v726 = vmax.f32 %v586, %v695
      %v727 = vmax.f32 %v589, %v698
      %v728 = vmax.f32 %v594, %v703
      %v729 = vmax.f32 %v597, %v706
      %v730 = vmax.f32 %v602, %v711
      %v731 = vmax.f32 %v605, %v714
      %v732 = vmax.f32 %v610, %v719
      %v733 = vld [vmem:[%s435 + $0x48] sm:$0xf]
      %v734 = vld [vmem:[%s435 + $0x4c] sm:$0xf]
      %v735 = vld [vmem:[%s435 + $0x50] sm:$0xf]
      %v736 = vld [vmem:[%s435 + $0x54] sm:$0xf]
      %v737 = vld [vmem:[%s435 + $0x58] sm:$0xf]
      %v738 = vld [vmem:[%s435 + $0x5c] sm:$0xf]
      %v739 = vld [vmem:[%s435 + $0x60] sm:$0xf]
      %v740 = vld [vmem:[%s435 + $0x64] sm:$0xf]
      %v741 = vld [vmem:[%s435 + $0x68] sm:$0xf]
      %v751 = vunpack.c.l.b16 %v733
      %v752 = vunpack.c.l.b16 %v734
      %v753 = vunpack.c.l.b16 %v735
      %v754 = vunpack.c.l.b16 %v736
      %v755 = vunpack.c.l.b16 %v737
      %v756 = vunpack.c.l.b16 %v738
      %v757 = vunpack.c.l.b16 %v739
      %v758 = vunpack.c.l.b16 %v740
      %v759 = vunpack.c.l.b16 %v741
      %v760 = vpack.c.b16 %v752, %v751
      %v761 = vpack.c.b16 %v754, %v753
      %v762 = vpack.c.b16 %v756, %v755
      %v763 = vpack.c.b16 %v758, %v757
      %v764 = vpack.c.b16 %v759, %v759
      %770 = vmatprep.subr.bf16.mxu0 0
      %771 = vmatpush1.bf16.msra.mxu0 %v527
      %772 = vmatprep.subr.bf16.mxu0 0
      %773 = vmatpush1.bf16.msra.mxu0 %v528
      %774 = vmatprep.subr.bf16.mxu0 0
      %775 = vmatpush1.bf16.msra.mxu0 %v529
      %776 = vmatprep.subr.bf16.mxu0 0
      %777 = vmatpush1.bf16.msra.mxu0 %v530
      %778 = vmatprep.subr.bf16.mxu0 0
      %779 = vmatpush1.bf16.msra.mxu0 %v531
      %780 = vmatprep.subr.bf16.mxu0 0
      %781 = vmatpush1.bf16.msra.mxu0 %v532
      %782 = vmatprep.subr.bf16.mxu0 0
      %783 = vmatpush1.bf16.msra.mxu0 %v533
      %784 = vmatprep.subr.bf16.mxu0 0
      %785 = vmatpush1.bf16.msra.mxu0 %v534
      %786 = vmatprep.subr.bf16.mxu0 0
      %787 = vmatpush1.bf16.msra.mxu0 0
      %788 = vmatprep.subr.bf16.mxu0 0
      %789 = vmatpush1.bf16.msra.mxu0 0
      %790 = vmatprep.subr.bf16.mxu0 0
      %791 = vmatpush1.bf16.msra.mxu0 0
      %792 = vmatprep.subr.bf16.mxu0 0
      %793 = vmatpush1.bf16.msra.mxu0 0
      %794 = vmatprep.subr.bf16.mxu0 0
      %795 = vmatpush1.bf16.msra.mxu0 0
      %796 = vmatprep.subr.bf16.mxu0 0
      %797 = vmatpush1.bf16.msra.mxu0 0
      %798 = vmatprep.subr.bf16.mxu0 0
      %799 = vmatpush1.bf16.msra.mxu0 0
      %800 = vmatprep.subr.bf16.mxu0 0
      %801 = vmatpush1.bf16.msra.mxu0 0
      %802 = vmatprep.mubr.bf16.mxu0 0
      %803 = vmatmul.mubr.bf16.gmra.mrb[0].mxu0 %v760
      %v804 = vpop.f32.mrb[0].mxu0
      %v805 = vadd.f32 0.0, %v804
      %v806 = vpop.f32.mrb[0].mxu0
      %v807 = vpop.f32.mrb[0].mxu0
      %v808 = vadd.f32 0.0, %v807
      %v809 = vpop.f32.mrb[0].mxu0
      %810 = vmatprep.mubr.bf16.mxu0 0
      %811 = vmatmul.mubr.bf16.gmra.mrb[0].mxu0 %v761
      %v812 = vpop.f32.mrb[0].mxu0
      %v813 = vadd.f32 0.0, %v812
      %v814 = vpop.f32.mrb[0].mxu0
      %v815 = vpop.f32.mrb[0].mxu0
      %v816 = vadd.f32 0.0, %v815
      %v817 = vpop.f32.mrb[0].mxu0
      %818 = vmatprep.mubr.bf16.mxu0 0
      %819 = vmatmul.mubr.bf16.gmra.mrb[0].mxu0 %v762
      %v820 = vpop.f32.mrb[0].mxu0
      %v821 = vadd.f32 0.0, %v820
      %v822 = vpop.f32.mrb[0].mxu0
      %v823 = vpop.f32.mrb[0].mxu0
      %v824 = vadd.f32 0.0, %v823
      %v825 = vpop.f32.mrb[0].mxu0
      %826 = vmatprep.mubr.bf16.mxu0 0
      %827 = vmatmul.mubr.bf16.gmra.mrb[0].mxu0 %v763
      %v828 = vpop.f32.mrb[0].mxu0
      %v829 = vadd.f32 0.0, %v828
      %v830 = vpop.f32.mrb[0].mxu0
      %v831 = vpop.f32.mrb[0].mxu0
      %v832 = vadd.f32 0.0, %v831
      %v833 = vpop.f32.mrb[0].mxu0
      %834 = vmatprep.mubr.bf16.mxu0 0
      %835 = vmatmul.mubr.bf16.gmra.mrb[0].mxu0 %v764
      %v836 = vpop.f32.mrb[0].mxu0
      %v837 = vadd.f32 0.0, %v836
      %v838 = vpop.f32.mrb[0].mxu0
      %v839 = vpop.f32.mrb[0].mxu0
      %v840 = vpop.f32.mrb[0].mxu0
      %841 = vdwg.mxu0
      %v842 = vld [vmem:[%s435 + $0x6c] sm:$0xf]
      %v843 = vld [vmem:[%s435 + $0x70] sm:$0xf]
      %v844 = vld [vmem:[%s435 + $0x74] sm:$0xf]
      %v845 = vld [vmem:[%s435 + $0x78] sm:$0xf]
      %v846 = vld [vmem:[%s435 + $0x7c] sm:$0xf]
      %v847 = vld [vmem:[%s435 + $0x80] sm:$0xf]
      %v848 = vld [vmem:[%s435 + $0x84] sm:$0xf]
      %v849 = vld [vmem:[%s435 + $0x88] sm:$0xf]
      %v850 = vld [vmem:[%s435 + $0x8c] sm:$0xf]
      %v860 = vunpack.c.l.b16 %v842
      %v861 = vunpack.c.l.b16 %v843
      %v862 = vunpack.c.l.b16 %v844
      %v863 = vunpack.c.l.b16 %v845
      %v864 = vunpack.c.l.b16 %v846
      %v865 = vunpack.c.l.b16 %v847
      %v866 = vunpack.c.l.b16 %v848
      %v867 = vunpack.c.l.b16 %v849
      %v868 = vunpack.c.l.b16 %v850
      %v869 = vpack.c.b16 %v861, %v860
      %v870 = vpack.c.b16 %v863, %v862
      %v871 = vpack.c.b16 %v865, %v864
      %v872 = vpack.c.b16 %v867, %v866
      %v873 = vpack.c.b16 %v868, %v868
      %879 = vmatprep.subr.bf16.mxu0 0
      %880 = vmatpush1.bf16.msra.mxu0 %v527
      %881 = vmatprep.subr.bf16.mxu0 0
      %882 = vmatpush1.bf16.msra.mxu0 %v528
      %883 = vmatprep.subr.bf16.mxu0 0
      %884 = vmatpush1.bf16.msra.mxu0 %v529
      %885 = vmatprep.subr.bf16.mxu0 0
      %886 = vmatpush1.bf16.msra.mxu0 %v530
      %887 = vmatprep.subr.bf16.mxu0 0
      %888 = vmatpush1.bf16.msra.mxu0 %v531
      %889 = vmatprep.subr.bf16.mxu0 0
      %890 = vmatpush1.bf16.msra.mxu0 %v532
      %891 = vmatprep.subr.bf16.mxu0 0
      %892 = vmatpush1.bf16.msra.mxu0 %v533
      %893 = vmatprep.subr.bf16.mxu0 0
      %894 = vmatpush1.bf16.msra.mxu0 %v534
      %895 = vmatprep.subr.bf16.mxu0 0
      %896 = vmatpush1.bf16.msra.mxu0 0
      %897 = vmatprep.subr.bf16.mxu0 0
      %898 = vmatpush1.bf16.msra.mxu0 0
      %899 = vmatprep.subr.bf16.mxu0 0
      %900 = vmatpush1.bf16.msra.mxu0 0
      %901 = vmatprep.subr.bf16.mxu0 0
      %902 = vmatpush1.bf16.msra.mxu0 0
      %903 = vmatprep.subr.bf16.mxu0 0
      %904 = vmatpush1.bf16.msra.mxu0 0
      %905 = vmatprep.subr.bf16.mxu0 0
      %906 = vmatpush1.bf16.msra.mxu0 0
      %907 = vmatprep.subr.bf16.mxu0 0
      %908 = vmatpush1.bf16.msra.mxu0 0
      %909 = vmatprep.subr.bf16.mxu0 0
      %910 = vmatpush1.bf16.msra.mxu0 0
      %911 = vmatprep.mubr.bf16.mxu0 0
      %912 = vmatmul.mubr.bf16.gmra.mrb[0].mxu0 %v869
      %v913 = vpop.f32.mrb[0].mxu0
      %v914 = vadd.f32 0.0, %v913
      %v915 = vpop.f32.mrb[0].mxu0
      %v916 = vpop.f32.mrb[0].mxu0
      %v917 = vadd.f32 0.0, %v916
      %v918 = vpop.f32.mrb[0].mxu0
      %919 = vmatprep.mubr.bf16.mxu0 0
      %920 = vmatmul.mubr.bf16.gmra.mrb[0].mxu0 %v870
      %v921 = vpop.f32.mrb[0].mxu0
      %v922 = vadd.f32 0.0, %v921
      %v923 = vpop.f32.mrb[0].mxu0
      %v924 = vpop.f32.mrb[0].mxu0
      %v925 = vadd.f32 0.0, %v924
      %v926 = vpop.f32.mrb[0].mxu0
      %927 = vmatprep.mubr.bf16.mxu0 0
      %928 = vmatmul.mubr.bf16.gmra.mrb[0].mxu0 %v871
      %v929 = vpop.f32.mrb[0].mxu0
      %v930 = vadd.f32 0.0, %v929
      %v931 = vpop.f32.mrb[0].mxu0
      %v932 = vpop.f32.mrb[0].mxu0
      %v933 = vadd.f32 0.0, %v932
      %v934 = vpop.f32.mrb[0].mxu0
      %935 = vmatprep.mubr.bf16.mxu0 0
      %936 = vmatmul.mubr.bf16.gmra.mrb[0].mxu0 %v872
      %v937 = vpop.f32.mrb[0].mxu0
      %v938 = vadd.f32 0.0, %v937
      %v939 = vpop.f32.mrb[0].mxu0
      %v940 = vpop.f32.mrb[0].mxu0
      %v941 = vadd.f32 0.0, %v940
      %v942 = vpop.f32.mrb[0].mxu0
      %943 = vmatprep.mubr.bf16.mxu0 0
      %944 = vmatmul.mubr.bf16.gmra.mrb[0].mxu0 %v873
      %v945 = vpop.f32.mrb[0].mxu0
      %v946 = vadd.f32 0.0, %v945
      %v947 = vpop.f32.mrb[0].mxu0
      %v948 = vpop.f32.mrb[0].mxu0
      %v949 = vpop.f32.mrb[0].mxu0
      %950 = vdwg.mxu0
      %v951 = vmax.f32 %v805, %v914
      %v952 = vmax.f32 %v808, %v917
      %v953 = vmax.f32 %v813, %v922
      %v954 = vmax.f32 %v816, %v925
      %v955 = vmax.f32 %v821, %v930
      %v956 = vmax.f32 %v824, %v933
      %v957 = vmax.f32 %v829, %v938
      %v958 = vmax.f32 %v832, %v941
      %v959 = vmax.f32 %v837, %v946
      %v960 = vmax.f32 %v724, %v951
      %v961 = vmax.f32 %v725, %v952
      %v962 = vmax.f32 %v726, %v953
      %v963 = vmax.f32 %v727, %v954
      %v964 = vmax.f32 %v728, %v955
      %v965 = vmax.f32 %v729, %v956
      %v966 = vmax.f32 %v730, %v957
      %v967 = vmax.f32 %v731, %v958
      %v968 = vmax.f32 %v732, %v959
      %v969 = vld [vmem:[%s2] sm:$0x1]
      %v971 = vlaneseq
      %v972 = vshrl.u32 %v971, 7
      %v973 = vsub.s32 0, %v972
      %v974 = vrot.slane %v969, %v973
      %v976 = vadd.f32 %v960, %v974
      %v977 = vadd.f32 %v961, %v974
      %v978 = vadd.f32 %v962, %v974
      %v979 = vadd.f32 %v963, %v974
      %v980 = vadd.f32 %v964, %v974
      %v981 = vadd.f32 %v965, %v974
      %v982 = vadd.f32 %v966, %v974
      %v983 = vadd.f32 %v967, %v974
      %v984 = vadd.f32 %v968, %v974
      %v985 = vmax.f32 %v976, 0.0
      %v986 = vmax.f32 %v977, 0.0
      %v987 = vmax.f32 %v978, 0.0
      %v988 = vmax.f32 %v979, 0.0
      %v989 = vmax.f32 %v980, 0.0
      %v990 = vmax.f32 %v981, 0.0
      %v991 = vmax.f32 %v982, 0.0
      %v992 = vmax.f32 %v983, 0.0
      %v993 = vmax.f32 %v984, 0.0
      %v994 = vpack.c.bf16 %v985, %v985
      %v995 = vpack.c.bf16 %v986, %v986
      %v996 = vpack.c.bf16 %v987, %v987
      %v997 = vpack.c.bf16 %v988, %v988
      %v998 = vpack.c.bf16 %v989, %v989
      %v999 = vpack.c.bf16 %v990, %v990
      %v1000 = vpack.c.bf16 %v991, %v991
      %v1001 = vpack.c.bf16 %v992, %v992
      %v1002 = vpack.c.bf16 %v993, %v993
      %v1003 = vld [vmem:[%s3] sm:$0xff]
      %v1004 = vld [vmem:[%s3 + $0x8] sm:$0xff]
      %v1005 = vld [vmem:[%s3 + $0x10] sm:$0xff]
      %v1006 = vld [vmem:[%s3 + $0x18] sm:$0xff]
      %v1007 = vld [vmem:[%s3 + $0x20] sm:$0xff]
      %v1008 = vld [vmem:[%s3 + $0x28] sm:$0xff]
      %v1009 = vld [vmem:[%s3 + $0x30] sm:$0xff]
      %v1010 = vld [vmem:[%s3 + $0x38] sm:$0xff]
      %v1011 = vld [vmem:[%s3 + $0x40] sm:$0xff]
      %v1012 = vld [vmem:[%s3 + $0x48] sm:$0xff]
      %v1013 = vld [vmem:[%s3 + $0x50] sm:$0xff]
      %v1014 = vld [vmem:[%s3 + $0x58] sm:$0xff]
      %v1015 = vld [vmem:[%s3 + $0x60] sm:$0xff]
      %v1016 = vld [vmem:[%s3 + $0x68] sm:$0xff]
      %v1017 = vld [vmem:[%s3 + $0x70] sm:$0xff]
      %v1018 = vld [vmem:[%s3 + $0x78] sm:$0xff]
      %v1019 = vld [vmem:[%s3 + $0x80] sm:$0xff]
      %v1020 = vld [vmem:[%s3 + $0x88] sm:$0xff]
      %v1021 = vld [vmem:[%s3 + $0x90] sm:$0xff]
      %v1022 = vld [vmem:[%s3 + $0x98] sm:$0xff]
      %v1023 = vld [vmem:[%s3 + $0xa0] sm:$0xff]
      %v1024 = vld [vmem:[%s3 + $0xa8] sm:$0xff]
      %v1025 = vld [vmem:[%s3 + $0xb0] sm:$0xff]
      %v1026 = vld [vmem:[%s3 + $0xb8] sm:$0xff]
      %v1027 = vld [vmem:[%s3 + $0xc0] sm:$0xff]
      %v1028 = vld [vmem:[%s3 + $0xc8] sm:$0xff]
      %v1029 = vld [vmem:[%s3 + $0xd0] sm:$0xff]
      %v1030 = vld [vmem:[%s3 + $0xd8] sm:$0xff]
      %v1031 = vld [vmem:[%s3 + $0xe0] sm:$0xff]
      %v1032 = vld [vmem:[%s3 + $0xe8] sm:$0xff]
      %v1033 = vld [vmem:[%s3 + $0xf0] sm:$0xff]
      %v1034 = vld [vmem:[%s3 + $0xf8] sm:$0xff]
      %v1035 = vld [vmem:[%s3 + $0x100] sm:$0xff]
      %v1036 = vld [vmem:[%s3 + $0x108] sm:$0xff]
      %v1037 = vld [vmem:[%s3 + $0x110] sm:$0xff]
      %v1038 = vld [vmem:[%s3 + $0x118] sm:$0xff]
      %v1039 = vld [vmem:[%s3 + $0x120] sm:$0xff]
      %v1040 = vld [vmem:[%s3 + $0x128] sm:$0xff]
      %v1041 = vld [vmem:[%s3 + $0x130] sm:$0xff]
      %v1042 = vld [vmem:[%s3 + $0x138] sm:$0xff]
      %v1043 = vld [vmem:[%s3 + $0x140] sm:$0xff]
      %v1044 = vld [vmem:[%s3 + $0x148] sm:$0xff]
      %v1045 = vld [vmem:[%s3 + $0x150] sm:$0xff]
      %v1046 = vld [vmem:[%s3 + $0x158] sm:$0xff]
      %v1047 = vld [vmem:[%s3 + $0x160] sm:$0xff]
      %v1048 = vld [vmem:[%s3 + $0x168] sm:$0xff]
      %v1049 = vld [vmem:[%s3 + $0x170] sm:$0xff]
      %v1050 = vld [vmem:[%s3 + $0x178] sm:$0xff]
      %v1051 = vld [vmem:[%s3 + $0x180] sm:$0xff]
      %v1052 = vld [vmem:[%s3 + $0x188] sm:$0xff]
      %v1053 = vld [vmem:[%s3 + $0x190] sm:$0xff]
      %v1054 = vld [vmem:[%s3 + $0x198] sm:$0xff]
      %v1055 = vld [vmem:[%s3 + $0x1a0] sm:$0xff]
      %v1056 = vld [vmem:[%s3 + $0x1a8] sm:$0xff]
      %v1057 = vld [vmem:[%s3 + $0x1b0] sm:$0xff]
      %v1058 = vld [vmem:[%s3 + $0x1b8] sm:$0xff]
      %v1059 = vld [vmem:[%s3 + $0x1c0] sm:$0xff]
      %v1060 = vld [vmem:[%s3 + $0x1c8] sm:$0xff]
      %v1061 = vld [vmem:[%s3 + $0x1d0] sm:$0xff]
      %v1062 = vld [vmem:[%s3 + $0x1d8] sm:$0xff]
      %v1063 = vld [vmem:[%s3 + $0x1e0] sm:$0xff]
      %v1064 = vld [vmem:[%s3 + $0x1e8] sm:$0xff]
      %v1065 = vld [vmem:[%s3 + $0x1f0] sm:$0xff]
      %v1066 = vld [vmem:[%s3 + $0x1f8] sm:$0xff]
      %v1067 = vld [vmem:[%s3 + $0x200] sm:$0xff]
      %v1068 = vld [vmem:[%s3 + $0x208] sm:$0xff]
      %v1069 = vld [vmem:[%s3 + $0x210] sm:$0xff]
      %v1070 = vld [vmem:[%s3 + $0x218] sm:$0xff]
      %v1071 = vld [vmem:[%s3 + $0x220] sm:$0xff]
      %v1072 = vld [vmem:[%s3 + $0x228] sm:$0xff]
      %v1073 = vld [vmem:[%s3 + $0x230] sm:$0xff]
      %v1074 = vld [vmem:[%s3 + $0x238] sm:$0xff]
      %v1075 = vld [vmem:[%s3 + $0x240] sm:$0xff]
      %v1076 = vld [vmem:[%s3 + $0x248] sm:$0xff]
      %v1077 = vld [vmem:[%s3 + $0x250] sm:$0xff]
      %v1078 = vld [vmem:[%s3 + $0x258] sm:$0xff]
      %v1079 = vld [vmem:[%s3 + $0x260] sm:$0xff]
      %v1080 = vld [vmem:[%s3 + $0x268] sm:$0xff]
      %v1081 = vld [vmem:[%s3 + $0x270] sm:$0xff]
      %v1082 = vld [vmem:[%s3 + $0x278] sm:$0xff]
      %v1083 = vld [vmem:[%s3 + $0x280] sm:$0xff]
      %v1084 = vld [vmem:[%s3 + $0x288] sm:$0xff]
      %v1085 = vld [vmem:[%s3 + $0x290] sm:$0xff]
      %v1086 = vld [vmem:[%s3 + $0x298] sm:$0xff]
      %v1087 = vld [vmem:[%s3 + $0x2a0] sm:$0xff]
      %v1088 = vld [vmem:[%s3 + $0x2a8] sm:$0xff]
      %v1089 = vld [vmem:[%s3 + $0x2b0] sm:$0xff]
      %v1090 = vld [vmem:[%s3 + $0x2b8] sm:$0xff]
      %v1091 = vld [vmem:[%s3 + $0x2c0] sm:$0xff]
      %v1092 = vld [vmem:[%s3 + $0x2c8] sm:$0xff]
      %v1093 = vld [vmem:[%s3 + $0x2d0] sm:$0xff]
      %v1094 = vld [vmem:[%s3 + $0x2d8] sm:$0xff]
      %v1095 = vld [vmem:[%s3 + $0x2e0] sm:$0xff]
      %v1096 = vld [vmem:[%s3 + $0x2e8] sm:$0xff]
      %v1097 = vld [vmem:[%s3 + $0x2f0] sm:$0xff]
      %v1098 = vld [vmem:[%s3 + $0x2f8] sm:$0xff]
      %v1099 = vld [vmem:[%s3 + $0x300] sm:$0xff]
      %v1100 = vld [vmem:[%s3 + $0x308] sm:$0xff]
      %v1101 = vld [vmem:[%s3 + $0x310] sm:$0xff]
      %v1102 = vld [vmem:[%s3 + $0x318] sm:$0xff]
      %v1103 = vld [vmem:[%s3 + $0x320] sm:$0xff]
      %v1104 = vld [vmem:[%s3 + $0x328] sm:$0xff]
      %v1105 = vld [vmem:[%s3 + $0x330] sm:$0xff]
      %v1106 = vld [vmem:[%s3 + $0x338] sm:$0xff]
      %v1107 = vld [vmem:[%s3 + $0x340] sm:$0xff]
      %v1108 = vld [vmem:[%s3 + $0x348] sm:$0xff]
      %v1109 = vld [vmem:[%s3 + $0x350] sm:$0xff]
      %v1110 = vld [vmem:[%s3 + $0x358] sm:$0xff]
      %v1111 = vld [vmem:[%s3 + $0x360] sm:$0xff]
      %v1112 = vld [vmem:[%s3 + $0x368] sm:$0xff]
      %v1113 = vld [vmem:[%s3 + $0x370] sm:$0xff]
      %v1114 = vld [vmem:[%s3 + $0x378] sm:$0xff]
      %v1115 = vld [vmem:[%s3 + $0x380] sm:$0xff]
      %v1116 = vld [vmem:[%s3 + $0x388] sm:$0xff]
      %v1117 = vld [vmem:[%s3 + $0x390] sm:$0xff]
      %v1118 = vld [vmem:[%s3 + $0x398] sm:$0xff]
      %v1119 = vld [vmem:[%s3 + $0x3a0] sm:$0xff]
      %v1120 = vld [vmem:[%s3 + $0x3a8] sm:$0xff]
      %v1121 = vld [vmem:[%s3 + $0x3b0] sm:$0xff]
      %v1122 = vld [vmem:[%s3 + $0x3b8] sm:$0xff]
      %v1123 = vld [vmem:[%s3 + $0x3c0] sm:$0xff]
      %v1124 = vld [vmem:[%s3 + $0x3c8] sm:$0xff]
      %v1125 = vld [vmem:[%s3 + $0x3d0] sm:$0xff]
      %v1126 = vld [vmem:[%s3 + $0x3d8] sm:$0xff]
      %v1127 = vld [vmem:[%s3 + $0x3e0] sm:$0xff]
      %v1128 = vld [vmem:[%s3 + $0x3e8] sm:$0xff]
      %v1129 = vld [vmem:[%s3 + $0x3f0] sm:$0xff]
      %v1130 = vld [vmem:[%s3 + $0x3f8] sm:$0xff]
      %v1131 = vld [vmem:[%s3 + $0x400] sm:$0xff]
      %v1132 = vld [vmem:[%s3 + $0x408] sm:$0xff]
      %v1133 = vld [vmem:[%s3 + $0x410] sm:$0xff]
      %v1134 = vld [vmem:[%s3 + $0x418] sm:$0xff]
      %v1135 = vld [vmem:[%s3 + $0x420] sm:$0xff]
      %v1136 = vld [vmem:[%s3 + $0x428] sm:$0xff]
      %v1137 = vld [vmem:[%s3 + $0x430] sm:$0xff]
      %v1138 = vld [vmem:[%s3 + $0x438] sm:$0xff]
      %v1139 = vld [vmem:[%s3 + $0x440] sm:$0xff]
      %v1140 = vld [vmem:[%s3 + $0x448] sm:$0xff]
      %v1141 = vld [vmem:[%s3 + $0x450] sm:$0xff]
      %v1142 = vld [vmem:[%s3 + $0x458] sm:$0xff]
      %v1143 = vld [vmem:[%s3 + $0x460] sm:$0xff]
      %v1144 = vld [vmem:[%s3 + $0x468] sm:$0xff]
      %v1145 = vld [vmem:[%s3 + $0x470] sm:$0xff]
      %v1146 = vld [vmem:[%s3 + $0x478] sm:$0xff]
      %v1147 = vld [vmem:[%s3 + $0x480] sm:$0xff]
      %v1148 = vld [vmem:[%s3 + $0x488] sm:$0xff]
      %v1149 = vld [vmem:[%s3 + $0x490] sm:$0xff]
      %v1150 = vld [vmem:[%s3 + $0x498] sm:$0xff]
      %v1151 = vld [vmem:[%s3 + $0x4a0] sm:$0xff]
      %v1152 = vld [vmem:[%s3 + $0x4a8] sm:$0xff]
      %v1153 = vld [vmem:[%s3 + $0x4b0] sm:$0xff]
      %v1154 = vld [vmem:[%s3 + $0x4b8] sm:$0xff]
      %v1155 = vld [vmem:[%s3 + $0x4c0] sm:$0xff]
      %v1156 = vld [vmem:[%s3 + $0x4c8] sm:$0xff]
      %v1157 = vld [vmem:[%s3 + $0x4d0] sm:$0xff]
      %v1158 = vld [vmem:[%s3 + $0x4d8] sm:$0xff]
      %v1159 = vld [vmem:[%s3 + $0x4e0] sm:$0xff]
      %v1160 = vld [vmem:[%s3 + $0x4e8] sm:$0xff]
      %v1161 = vld [vmem:[%s3 + $0x4f0] sm:$0xff]
      %v1162 = vld [vmem:[%s3 + $0x4f8] sm:$0xff]
      %v1163 = vld [vmem:[%s3 + $0x500] sm:$0xff]
      %v1164 = vld [vmem:[%s3 + $0x508] sm:$0xff]
      %v1165 = vld [vmem:[%s3 + $0x510] sm:$0xff]
      %v1166 = vld [vmem:[%s3 + $0x518] sm:$0xff]
      %v1167 = vld [vmem:[%s3 + $0x520] sm:$0xff]
      %v1168 = vld [vmem:[%s3 + $0x528] sm:$0xff]
      %v1169 = vld [vmem:[%s3 + $0x530] sm:$0xff]
      %v1170 = vld [vmem:[%s3 + $0x538] sm:$0xff]
      %v1171 = vld [vmem:[%s3 + $0x540] sm:$0xff]
      %v1172 = vld [vmem:[%s3 + $0x548] sm:$0xff]
      %v1173 = vld [vmem:[%s3 + $0x550] sm:$0xff]
      %v1174 = vld [vmem:[%s3 + $0x558] sm:$0xff]
      %v1175 = vld [vmem:[%s3 + $0x560] sm:$0xff]
      %v1176 = vld [vmem:[%s3 + $0x568] sm:$0xff]
      %v1177 = vld [vmem:[%s3 + $0x570] sm:$0xff]
      %v1178 = vld [vmem:[%s3 + $0x578] sm:$0xff]
      %v1179 = vld [vmem:[%s3 + $0x580] sm:$0xff]
      %v1180 = vld [vmem:[%s3 + $0x588] sm:$0xff]
      %v1181 = vld [vmem:[%s3 + $0x590] sm:$0xff]
      %v1182 = vld [vmem:[%s3 + $0x598] sm:$0xff]
      %v1183 = vld [vmem:[%s3 + $0x5a0] sm:$0xff]
      %v1184 = vld [vmem:[%s3 + $0x5a8] sm:$0xff]
      %v1185 = vld [vmem:[%s3 + $0x5b0] sm:$0xff]
      %v1186 = vld [vmem:[%s3 + $0x5b8] sm:$0xff]
      %v1187 = vld [vmem:[%s3 + $0x5c0] sm:$0xff]
      %v1188 = vld [vmem:[%s3 + $0x5c8] sm:$0xff]
      %v1189 = vld [vmem:[%s3 + $0x5d0] sm:$0xff]
      %v1190 = vld [vmem:[%s3 + $0x5d8] sm:$0xff]
      %v1191 = vld [vmem:[%s3 + $0x5e0] sm:$0xff]
      %v1192 = vld [vmem:[%s3 + $0x5e8] sm:$0xff]
      %v1193 = vld [vmem:[%s3 + $0x5f0] sm:$0xff]
      %v1194 = vld [vmem:[%s3 + $0x5f8] sm:$0xff]
      %v1195 = vld [vmem:[%s3 + $0x600] sm:$0xff]
      %v1196 = vld [vmem:[%s3 + $0x608] sm:$0xff]
      %v1197 = vld [vmem:[%s3 + $0x610] sm:$0xff]
      %v1198 = vld [vmem:[%s3 + $0x618] sm:$0xff]
      %v1199 = vld [vmem:[%s3 + $0x620] sm:$0xff]
      %v1200 = vld [vmem:[%s3 + $0x628] sm:$0xff]
      %v1201 = vld [vmem:[%s3 + $0x630] sm:$0xff]
      %v1202 = vld [vmem:[%s3 + $0x638] sm:$0xff]
      %v1203 = vld [vmem:[%s3 + $0x640] sm:$0xff]
      %v1204 = vld [vmem:[%s3 + $0x648] sm:$0xff]
      %v1205 = vld [vmem:[%s3 + $0x650] sm:$0xff]
      %v1206 = vld [vmem:[%s3 + $0x658] sm:$0xff]
      %v1207 = vld [vmem:[%s3 + $0x660] sm:$0xff]
      %v1208 = vld [vmem:[%s3 + $0x668] sm:$0xff]
      %v1209 = vld [vmem:[%s3 + $0x670] sm:$0xff]
      %v1210 = vld [vmem:[%s3 + $0x678] sm:$0xff]
      %v1211 = vld [vmem:[%s3 + $0x680] sm:$0xff]
      %v1212 = vld [vmem:[%s3 + $0x688] sm:$0xff]
      %v1213 = vld [vmem:[%s3 + $0x690] sm:$0xff]
      %v1214 = vld [vmem:[%s3 + $0x698] sm:$0xff]
      %v1215 = vld [vmem:[%s3 + $0x6a0] sm:$0xff]
      %v1216 = vld [vmem:[%s3 + $0x6a8] sm:$0xff]
      %v1217 = vld [vmem:[%s3 + $0x6b0] sm:$0xff]
      %v1218 = vld [vmem:[%s3 + $0x6b8] sm:$0xff]
      %v1219 = vld [vmem:[%s3 + $0x6c0] sm:$0xff]
      %v1220 = vld [vmem:[%s3 + $0x6c8] sm:$0xff]
      %v1221 = vld [vmem:[%s3 + $0x6d0] sm:$0xff]
      %v1222 = vld [vmem:[%s3 + $0x6d8] sm:$0xff]
      %v1223 = vld [vmem:[%s3 + $0x6e0] sm:$0xff]
      %v1224 = vld [vmem:[%s3 + $0x6e8] sm:$0xff]
      %v1225 = vld [vmem:[%s3 + $0x6f0] sm:$0xff]
      %v1226 = vld [vmem:[%s3 + $0x6f8] sm:$0xff]
      %v1227 = vld [vmem:[%s3 + $0x700] sm:$0xff]
      %v1228 = vld [vmem:[%s3 + $0x708] sm:$0xff]
      %v1229 = vld [vmem:[%s3 + $0x710] sm:$0xff]
      %v1230 = vld [vmem:[%s3 + $0x718] sm:$0xff]
      %v1231 = vld [vmem:[%s3 + $0x720] sm:$0xff]
      %v1232 = vld [vmem:[%s3 + $0x728] sm:$0xff]
      %v1233 = vld [vmem:[%s3 + $0x730] sm:$0xff]
      %v1234 = vld [vmem:[%s3 + $0x738] sm:$0xff]
      %v1235 = vld [vmem:[%s3 + $0x740] sm:$0xff]
      %v1236 = vld [vmem:[%s3 + $0x748] sm:$0xff]
      %v1237 = vld [vmem:[%s3 + $0x750] sm:$0xff]
      %v1238 = vld [vmem:[%s3 + $0x758] sm:$0xff]
      %v1239 = vld [vmem:[%s3 + $0x760] sm:$0xff]
      %v1240 = vld [vmem:[%s3 + $0x768] sm:$0xff]
      %v1241 = vld [vmem:[%s3 + $0x770] sm:$0xff]
      %v1242 = vld [vmem:[%s3 + $0x778] sm:$0xff]
      %v1243 = vld [vmem:[%s3 + $0x780] sm:$0xff]
      %v1244 = vld [vmem:[%s3 + $0x788] sm:$0xff]
      %v1245 = vld [vmem:[%s3 + $0x790] sm:$0xff]
      %v1246 = vld [vmem:[%s3 + $0x798] sm:$0xff]
      %v1247 = vld [vmem:[%s3 + $0x7a0] sm:$0xff]
      %v1248 = vld [vmem:[%s3 + $0x7a8] sm:$0xff]
      %v1249 = vld [vmem:[%s3 + $0x7b0] sm:$0xff]
      %v1250 = vld [vmem:[%s3 + $0x7b8] sm:$0xff]
      %v1251 = vld [vmem:[%s3 + $0x7c0] sm:$0xff]
      %v1252 = vld [vmem:[%s3 + $0x7c8] sm:$0xff]
      %v1253 = vld [vmem:[%s3 + $0x7d0] sm:$0xff]
      %v1254 = vld [vmem:[%s3 + $0x7d8] sm:$0xff]
      %v1255 = vld [vmem:[%s3 + $0x7e0] sm:$0xff]
      %v1256 = vld [vmem:[%s3 + $0x7e8] sm:$0xff]
      %v1257 = vld [vmem:[%s3 + $0x7f0] sm:$0xff]
      %v1258 = vld [vmem:[%s3 + $0x7f8] sm:$0xff]
      %v1259 = vld [vmem:[%s3 + $0x800] sm:$0xff]
      %v1260 = vld [vmem:[%s3 + $0x808] sm:$0xff]
      %v1261 = vld [vmem:[%s3 + $0x810] sm:$0xff]
      %v1262 = vld [vmem:[%s3 + $0x818] sm:$0xff]
      %v1263 = vld [vmem:[%s3 + $0x820] sm:$0xff]
      %v1264 = vld [vmem:[%s3 + $0x828] sm:$0xff]
      %v1265 = vld [vmem:[%s3 + $0x830] sm:$0xff]
      %v1266 = vld [vmem:[%s3 + $0x838] sm:$0xff]
      %v1267 = vld [vmem:[%s3 + $0x840] sm:$0xff]
      %v1268 = vld [vmem:[%s3 + $0x848] sm:$0xff]
      %v1269 = vld [vmem:[%s3 + $0x850] sm:$0xff]
      %v1270 = vld [vmem:[%s3 + $0x858] sm:$0xff]
      %v1271 = vld [vmem:[%s3 + $0x860] sm:$0xff]
      %v1272 = vld [vmem:[%s3 + $0x868] sm:$0xff]
      %v1273 = vld [vmem:[%s3 + $0x870] sm:$0xff]
      %v1274 = vld [vmem:[%s3 + $0x878] sm:$0xff]
      %v1275 = vld [vmem:[%s3 + $0x880] sm:$0xff]
      %v1276 = vld [vmem:[%s3 + $0x888] sm:$0xff]
      %v1277 = vld [vmem:[%s3 + $0x890] sm:$0xff]
      %v1278 = vld [vmem:[%s3 + $0x898] sm:$0xff]
      %v1279 = vld [vmem:[%s3 + $0x8a0] sm:$0xff]
      %v1280 = vld [vmem:[%s3 + $0x8a8] sm:$0xff]
      %v1281 = vld [vmem:[%s3 + $0x8b0] sm:$0xff]
      %v1282 = vld [vmem:[%s3 + $0x8b8] sm:$0xff]
      %v1283 = vld [vmem:[%s3 + $0x8c0] sm:$0xff]
      %v1284 = vld [vmem:[%s3 + $0x8c8] sm:$0xff]
      %v1285 = vld [vmem:[%s3 + $0x8d0] sm:$0xff]
      %v1286 = vld [vmem:[%s3 + $0x8d8] sm:$0xff]
      %v1287 = vld [vmem:[%s3 + $0x8e0] sm:$0xff]
      %v1288 = vld [vmem:[%s3 + $0x8e8] sm:$0xff]
      %v1289 = vld [vmem:[%s3 + $0x8f0] sm:$0xff]
      %v1290 = vld [vmem:[%s3 + $0x8f8] sm:$0xff]
      %v1291 = vld [vmem:[%s4] sm:$0xf]
      %v1293 = vlaneseq
      %v1294 = vshrl.u32 %v1293, 7
      %v1295 = vsub.s32 0, %v1294
      %v1296 = vrot.slane %v1291, %v1295
      %v1297 = vlaneseq
      %v1298 = vshrl.u32 %v1297, 7
      %v1299 = vsub.s32 1, %v1298
      %v1300 = vrot.slane %v1291, %v1299
      %v1301 = vlaneseq
      %v1302 = vshrl.u32 %v1301, 7
      %v1303 = vsub.s32 2, %v1302
      %v1304 = vrot.slane %v1291, %v1303
      %v1305 = vlaneseq
      %v1306 = vshrl.u32 %v1305, 7
      %v1307 = vsub.s32 3, %v1306
      %v1308 = vrot.slane %v1291, %v1307
      %v1601 = vunpack.c.l.b16 %v1003
      %v1602 = vunpack.c.h.b16 %v1003
      %v1603 = vunpack.c.l.b16 %v1004
      %v1604 = vunpack.c.h.b16 %v1004
      %v1605 = vunpack.c.l.b16 %v1005
      %v1606 = vunpack.c.h.b16 %v1005
      %v1607 = vunpack.c.l.b16 %v1006
      %v1608 = vunpack.c.h.b16 %v1006
      %v1609 = vunpack.c.l.b16 %v1007
      %v1610 = vunpack.c.h.b16 %v1007
      %v1611 = vunpack.c.l.b16 %v1008
      %v1612 = vunpack.c.h.b16 %v1008
      %v1613 = vunpack.c.l.b16 %v1009
      %v1614 = vunpack.c.h.b16 %v1009
      %v1615 = vunpack.c.l.b16 %v1010
      %v1616 = vunpack.c.h.b16 %v1010
      %v1617 = vunpack.c.l.b16 %v1011
      %v1618 = vunpack.c.h.b16 %v1011
      %v1619 = vunpack.c.l.b16 %v1012
      %v1620 = vunpack.c.h.b16 %v1012
      %v1621 = vunpack.c.l.b16 %v1013
      %v1622 = vunpack.c.h.b16 %v1013
      %v1623 = vunpack.c.l.b16 %v1014
      %v1624 = vunpack.c.h.b16 %v1014
      %v1625 = vunpack.c.l.b16 %v1015
      %v1626 = vunpack.c.h.b16 %v1015
      %v1627 = vunpack.c.l.b16 %v1016
      %v1628 = vunpack.c.h.b16 %v1016
      %v1629 = vunpack.c.l.b16 %v1017
      %v1630 = vunpack.c.h.b16 %v1017
      %v1631 = vunpack.c.l.b16 %v1018
      %v1632 = vunpack.c.h.b16 %v1018
      %v1633 = vunpack.c.l.b16 %v1019
      %v1634 = vunpack.c.h.b16 %v1019
      %v1635 = vunpack.c.l.b16 %v1020
      %v1636 = vunpack.c.h.b16 %v1020
      %v1637 = vunpack.c.l.b16 %v1021
      %v1638 = vunpack.c.h.b16 %v1021
      %v1639 = vunpack.c.l.b16 %v1022
      %v1640 = vunpack.c.h.b16 %v1022
      %v1641 = vunpack.c.l.b16 %v1023
      %v1642 = vunpack.c.h.b16 %v1023
      %v1643 = vunpack.c.l.b16 %v1024
      %v1644 = vunpack.c.h.b16 %v1024
      %v1645 = vunpack.c.l.b16 %v1025
      %v1646 = vunpack.c.h.b16 %v1025
      %v1647 = vunpack.c.l.b16 %v1026
      %v1648 = vunpack.c.h.b16 %v1026
      %v1649 = vunpack.c.l.b16 %v1027
      %v1650 = vunpack.c.h.b16 %v1027
      %v1651 = vunpack.c.l.b16 %v1028
      %v1652 = vunpack.c.h.b16 %v1028
      %v1653 = vunpack.c.l.b16 %v1029
      %v1654 = vunpack.c.h.b16 %v1029
      %v1655 = vunpack.c.l.b16 %v1030
      %v1656 = vunpack.c.h.b16 %v1030
      %v1657 = vunpack.c.l.b16 %v1031
      %v1658 = vunpack.c.h.b16 %v1031
      %v1659 = vunpack.c.l.b16 %v1032
      %v1660 = vunpack.c.h.b16 %v1032
      %v1661 = vunpack.c.l.b16 %v1033
      %v1662 = vunpack.c.h.b16 %v1033
      %v1663 = vunpack.c.l.b16 %v1034
      %v1664 = vunpack.c.h.b16 %v1034
      %v1665 = vunpack.c.l.b16 %v1035
      %v1666 = vunpack.c.h.b16 %v1035
      %v1667 = vunpack.c.l.b16 %v1036
      %v1668 = vunpack.c.h.b16 %v1036
      %v1669 = vunpack.c.l.b16 %v1037
      %v1670 = vunpack.c.h.b16 %v1037
      %v1671 = vunpack.c.l.b16 %v1038
      %v1672 = vunpack.c.h.b16 %v1038
      %v1673 = vunpack.c.l.b16 %v1039
      %v1674 = vunpack.c.h.b16 %v1039
      %v1675 = vunpack.c.l.b16 %v1040
      %v1676 = vunpack.c.h.b16 %v1040
      %v1677 = vunpack.c.l.b16 %v1041
      %v1678 = vunpack.c.h.b16 %v1041
      %v1679 = vunpack.c.l.b16 %v1042
      %v1680 = vunpack.c.h.b16 %v1042
      %v1681 = vunpack.c.l.b16 %v1043
      %v1682 = vunpack.c.h.b16 %v1043
      %v1683 = vunpack.c.l.b16 %v1044
      %v1684 = vunpack.c.h.b16 %v1044
      %v1685 = vunpack.c.l.b16 %v1045
      %v1686 = vunpack.c.h.b16 %v1045
      %v1687 = vunpack.c.l.b16 %v1046
      %v1688 = vunpack.c.h.b16 %v1046
      %v1689 = vunpack.c.l.b16 %v1047
      %v1690 = vunpack.c.h.b16 %v1047
      %v1691 = vunpack.c.l.b16 %v1048
      %v1692 = vunpack.c.h.b16 %v1048
      %v1693 = vunpack.c.l.b16 %v1049
      %v1694 = vunpack.c.h.b16 %v1049
      %v1695 = vunpack.c.l.b16 %v1050
      %v1696 = vunpack.c.h.b16 %v1050
      %v1697 = vunpack.c.l.b16 %v1051
      %v1698 = vunpack.c.h.b16 %v1051
      %v1699 = vunpack.c.l.b16 %v1052
      %v1700 = vunpack.c.h.b16 %v1052
      %v1701 = vunpack.c.l.b16 %v1053
      %v1702 = vunpack.c.h.b16 %v1053
      %v1703 = vunpack.c.l.b16 %v1054
      %v1704 = vunpack.c.h.b16 %v1054
      %v1705 = vunpack.c.l.b16 %v1055
      %v1706 = vunpack.c.h.b16 %v1055
      %v1707 = vunpack.c.l.b16 %v1056
      %v1708 = vunpack.c.h.b16 %v1056
      %v1709 = vunpack.c.l.b16 %v1057
      %v1710 = vunpack.c.h.b16 %v1057
      %v1711 = vunpack.c.l.b16 %v1058
      %v1712 = vunpack.c.h.b16 %v1058
      %v1713 = vunpack.c.l.b16 %v1059
      %v1714 = vunpack.c.h.b16 %v1059
      %v1715 = vunpack.c.l.b16 %v1060
      %v1716 = vunpack.c.h.b16 %v1060
      %v1717 = vunpack.c.l.b16 %v1061
      %v1718 = vunpack.c.h.b16 %v1061
      %v1719 = vunpack.c.l.b16 %v1062
      %v1720 = vunpack.c.h.b16 %v1062
      %v1721 = vunpack.c.l.b16 %v1063
      %v1722 = vunpack.c.h.b16 %v1063
      %v1723 = vunpack.c.l.b16 %v1064
      %v1724 = vunpack.c.h.b16 %v1064
      %v1725 = vunpack.c.l.b16 %v1065
      %v1726 = vunpack.c.h.b16 %v1065
      %v1727 = vunpack.c.l.b16 %v1066
      %v1728 = vunpack.c.h.b16 %v1066
      %v1729 = vunpack.c.l.b16 %v1067
      %v1730 = vunpack.c.h.b16 %v1067
      %v1731 = vunpack.c.l.b16 %v1068
      %v1732 = vunpack.c.h.b16 %v1068
      %v1733 = vunpack.c.l.b16 %v1069
      %v1734 = vunpack.c.h.b16 %v1069
      %v1735 = vunpack.c.l.b16 %v1070
      %v1736 = vunpack.c.h.b16 %v1070
      %v1737 = vunpack.c.l.b16 %v1071
      %v1738 = vunpack.c.h.b16 %v1071
      %v1739 = vunpack.c.l.b16 %v1072
      %v1740 = vunpack.c.h.b16 %v1072
      %v1741 = vunpack.c.l.b16 %v1073
      %v1742 = vunpack.c.h.b16 %v1073
      %v1743 = vunpack.c.l.b16 %v1074
      %v1744 = vunpack.c.h.b16 %v1074
      %v1745 = vunpack.c.l.b16 %v1075
      %v1746 = vunpack.c.h.b16 %v1075
      %v1747 = vunpack.c.l.b16 %v1076
      %v1748 = vunpack.c.h.b16 %v1076
      %v1749 = vunpack.c.l.b16 %v1077
      %v1750 = vunpack.c.h.b16 %v1077
      %v1751 = vunpack.c.l.b16 %v1078
      %v1752 = vunpack.c.h.b16 %v1078
      %v1753 = vunpack.c.l.b16 %v1079
      %v1754 = vunpack.c.h.b16 %v1079
      %v1755 = vunpack.c.l.b16 %v1080
      %v1756 = vunpack.c.h.b16 %v1080
      %v1757 = vunpack.c.l.b16 %v1081
      %v1758 = vunpack.c.h.b16 %v1081
      %v1759 = vunpack.c.l.b16 %v1082
      %v1760 = vunpack.c.h.b16 %v1082
      %v1761 = vunpack.c.l.b16 %v1083
      %v1762 = vunpack.c.h.b16 %v1083
      %v1763 = vunpack.c.l.b16 %v1084
      %v1764 = vunpack.c.h.b16 %v1084
      %v1765 = vunpack.c.l.b16 %v1085
      %v1766 = vunpack.c.h.b16 %v1085
      %v1767 = vunpack.c.l.b16 %v1086
      %v1768 = vunpack.c.h.b16 %v1086
      %v1769 = vunpack.c.l.b16 %v1087
      %v1770 = vunpack.c.h.b16 %v1087
      %v1771 = vunpack.c.l.b16 %v1088
      %v1772 = vunpack.c.h.b16 %v1088
      %v1773 = vunpack.c.l.b16 %v1089
      %v1774 = vunpack.c.h.b16 %v1089
      %v1775 = vunpack.c.l.b16 %v1090
      %v1776 = vunpack.c.h.b16 %v1090
      %v1777 = vunpack.c.l.b16 %v1091
      %v1778 = vunpack.c.h.b16 %v1091
      %v1779 = vunpack.c.l.b16 %v1092
      %v1780 = vunpack.c.h.b16 %v1092
      %v1781 = vunpack.c.l.b16 %v1093
      %v1782 = vunpack.c.h.b16 %v1093
      %v1783 = vunpack.c.l.b16 %v1094
      %v1784 = vunpack.c.h.b16 %v1094
      %v1785 = vunpack.c.l.b16 %v1095
      %v1786 = vunpack.c.h.b16 %v1095
      %v1787 = vunpack.c.l.b16 %v1096
      %v1788 = vunpack.c.h.b16 %v1096
      %v1789 = vunpack.c.l.b16 %v1097
      %v1790 = vunpack.c.h.b16 %v1097
      %v1791 = vunpack.c.l.b16 %v1098
      %v1792 = vunpack.c.h.b16 %v1098
      %v1793 = vunpack.c.l.b16 %v1099
      %v1794 = vunpack.c.h.b16 %v1099
      %v1795 = vunpack.c.l.b16 %v1100
      %v1796 = vunpack.c.h.b16 %v1100
      %v1797 = vunpack.c.l.b16 %v1101
      %v1798 = vunpack.c.h.b16 %v1101
      %v1799 = vunpack.c.l.b16 %v1102
      %v1800 = vunpack.c.h.b16 %v1102
      %v1801 = vunpack.c.l.b16 %v1103
      %v1802 = vunpack.c.h.b16 %v1103
      %v1803 = vunpack.c.l.b16 %v1104
      %v1804 = vunpack.c.h.b16 %v1104
      %v1805 = vunpack.c.l.b16 %v1105
      %v1806 = vunpack.c.h.b16 %v1105
      %v1807 = vunpack.c.l.b16 %v1106
      %v1808 = vunpack.c.h.b16 %v1106
      %v1809 = vunpack.c.l.b16 %v1107
      %v1810 = vunpack.c.h.b16 %v1107
      %v1811 = vunpack.c.l.b16 %v1108
      %v1812 = vunpack.c.h.b16 %v1108
      %v1813 = vunpack.c.l.b16 %v1109
      %v1814 = vunpack.c.h.b16 %v1109
      %v1815 = vunpack.c.l.b16 %v1110
      %v1816 = vunpack.c.h.b16 %v1110
      %v1817 = vunpack.c.l.b16 %v1111
      %v1818 = vunpack.c.h.b16 %v1111
      %v1819 = vunpack.c.l.b16 %v1112
      %v1820 = vunpack.c.h.b16 %v1112
      %v1821 = vunpack.c.l.b16 %v1113
      %v1822 = vunpack.c.h.b16 %v1113
      %v1823 = vunpack.c.l.b16 %v1114
      %v1824 = vunpack.c.h.b16 %v1114
      %v1825 = vunpack.c.l.b16 %v1115
      %v1826 = vunpack.c.h.b16 %v1115
      %v1827 = vunpack.c.l.b16 %v1116
      %v1828 = vunpack.c.h.b16 %v1116
      %v1829 = vunpack.c.l.b16 %v1117
      %v1830 = vunpack.c.h.b16 %v1117
      %v1831 = vunpack.c.l.b16 %v1118
      %v1832 = vunpack.c.h.b16 %v1118
      %v1833 = vunpack.c.l.b16 %v1119
      %v1834 = vunpack.c.h.b16 %v1119
      %v1835 = vunpack.c.l.b16 %v1120
      %v1836 = vunpack.c.h.b16 %v1120
      %v1837 = vunpack.c.l.b16 %v1121
      %v1838 = vunpack.c.h.b16 %v1121
      %v1839 = vunpack.c.l.b16 %v1122
      %v1840 = vunpack.c.h.b16 %v1122
      %v1841 = vunpack.c.l.b16 %v1123
      %v1842 = vunpack.c.h.b16 %v1123
      %v1843 = vunpack.c.l.b16 %v1124
      %v1844 = vunpack.c.h.b16 %v1124
      %v1845 = vunpack.c.l.b16 %v1125
      %v1846 = vunpack.c.h.b16 %v1125
      %v1847 = vunpack.c.l.b16 %v1126
      %v1848 = vunpack.c.h.b16 %v1126
      %v1849 = vunpack.c.l.b16 %v1127
      %v1850 = vunpack.c.h.b16 %v1127
      %v1851 = vunpack.c.l.b16 %v1128
      %v1852 = vunpack.c.h.b16 %v1128
      %v1853 = vunpack.c.l.b16 %v1129
      %v1854 = vunpack.c.h.b16 %v1129
      %v1855 = vunpack.c.l.b16 %v1130
      %v1856 = vunpack.c.h.b16 %v1130
      %v1857 = vunpack.c.l.b16 %v1131
      %v1858 = vunpack.c.h.b16 %v1131
      %v1859 = vunpack.c.l.b16 %v1132
      %v1860 = vunpack.c.h.b16 %v1132
      %v1861 = vunpack.c.l.b16 %v1133
      %v1862 = vunpack.c.h.b16 %v1133
      %v1863 = vunpack.c.l.b16 %v1134
      %v1864 = vunpack.c.h.b16 %v1134
      %v1865 = vunpack.c.l.b16 %v1135
      %v1866 = vunpack.c.h.b16 %v1135
      %v1867 = vunpack.c.l.b16 %v1136
      %v1868 = vunpack.c.h.b16 %v1136
      %v1869 = vunpack.c.l.b16 %v1137
      %v1870 = vunpack.c.h.b16 %v1137
      %v1871 = vunpack.c.l.b16 %v1138
      %v1872 = vunpack.c.h.b16 %v1138
      %v1873 = vunpack.c.l.b16 %v1139
      %v1874 = vunpack.c.h.b16 %v1139
      %v1875 = vunpack.c.l.b16 %v1140
      %v1876 = vunpack.c.h.b16 %v1140
      %v1877 = vunpack.c.l.b16 %v1141
      %v1878 = vunpack.c.h.b16 %v1141
      %v1879 = vunpack.c.l.b16 %v1142
      %v1880 = vunpack.c.h.b16 %v1142
      %v1881 = vunpack.c.l.b16 %v1143
      %v1882 = vunpack.c.h.b16 %v1143
      %v1883 = vunpack.c.l.b16 %v1144
      %v1884 = vunpack.c.h.b16 %v1144
      %v1885 = vunpack.c.l.b16 %v1145
      %v1886 = vunpack.c.h.b16 %v1145
      %v1887 = vunpack.c.l.b16 %v1146
      %v1888 = vunpack.c.h.b16 %v1146
      %v1889 = vunpack.c.l.b16 %v1147
      %v1890 = vunpack.c.h.b16 %v1147
      %v1891 = vunpack.c.l.b16 %v1148
      %v1892 = vunpack.c.h.b16 %v1148
      %v1893 = vunpack.c.l.b16 %v1149
      %v1894 = vunpack.c.h.b16 %v1149
      %v1895 = vunpack.c.l.b16 %v1150
      %v1896 = vunpack.c.h.b16 %v1150
      %v1897 = vunpack.c.l.b16 %v1151
      %v1898 = vunpack.c.h.b16 %v1151
      %v1899 = vunpack.c.l.b16 %v1152
      %v1900 = vunpack.c.h.b16 %v1152
      %v1901 = vunpack.c.l.b16 %v1153
      %v1902 = vunpack.c.h.b16 %v1153
      %v1903 = vunpack.c.l.b16 %v1154
      %v1904 = vunpack.c.h.b16 %v1154
      %v1905 = vunpack.c.l.b16 %v1155
      %v1906 = vunpack.c.h.b16 %v1155
      %v1907 = vunpack.c.l.b16 %v1156
      %v1908 = vunpack.c.h.b16 %v1156
      %v1909 = vunpack.c.l.b16 %v1157
      %v1910 = vunpack.c.h.b16 %v1157
      %v1911 = vunpack.c.l.b16 %v1158
      %v1912 = vunpack.c.h.b16 %v1158
      %v1913 = vunpack.c.l.b16 %v1159
      %v1914 = vunpack.c.h.b16 %v1159
      %v1915 = vunpack.c.l.b16 %v1160
      %v1916 = vunpack.c.h.b16 %v1160
      %v1917 = vunpack.c.l.b16 %v1161
      %v1918 = vunpack.c.h.b16 %v1161
      %v1919 = vunpack.c.l.b16 %v1162
      %v1920 = vunpack.c.h.b16 %v1162
      %v1921 = vunpack.c.l.b16 %v1163
      %v1922 = vunpack.c.h.b16 %v1163
      %v1923 = vunpack.c.l.b16 %v1164
      %v1924 = vunpack.c.h.b16 %v1164
      %v1925 = vunpack.c.l.b16 %v1165
      %v1926 = vunpack.c.h.b16 %v1165
      %v1927 = vunpack.c.l.b16 %v1166
      %v1928 = vunpack.c.h.b16 %v1166
      %v1929 = vunpack.c.l.b16 %v1167
      %v1930 = vunpack.c.h.b16 %v1167
      %v1931 = vunpack.c.l.b16 %v1168
      %v1932 = vunpack.c.h.b16 %v1168
      %v1933 = vunpack.c.l.b16 %v1169
      %v1934 = vunpack.c.h.b16 %v1169
      %v1935 = vunpack.c.l.b16 %v1170
      %v1936 = vunpack.c.h.b16 %v1170
      %v1937 = vunpack.c.l.b16 %v1171
      %v1938 = vunpack.c.h.b16 %v1171
      %v1939 = vunpack.c.l.b16 %v1172
      %v1940 = vunpack.c.h.b16 %v1172
      %v1941 = vunpack.c.l.b16 %v1173
      %v1942 = vunpack.c.h.b16 %v1173
      %v1943 = vunpack.c.l.b16 %v1174
      %v1944 = vunpack.c.h.b16 %v1174
      %v1945 = vunpack.c.l.b16 %v1175
      %v1946 = vunpack.c.h.b16 %v1175
      %v1947 = vunpack.c.l.b16 %v1176
      %v1948 = vunpack.c.h.b16 %v1176
      %v1949 = vunpack.c.l.b16 %v1177
      %v1950 = vunpack.c.h.b16 %v1177
      %v1951 = vunpack.c.l.b16 %v1178
      %v1952 = vunpack.c.h.b16 %v1178
      %v1953 = vunpack.c.l.b16 %v1179
      %v1954 = vunpack.c.h.b16 %v1179
      %v1955 = vunpack.c.l.b16 %v1180
      %v1956 = vunpack.c.h.b16 %v1180
      %v1957 = vunpack.c.l.b16 %v1181
      %v1958 = vunpack.c.h.b16 %v1181
      %v1959 = vunpack.c.l.b16 %v1182
      %v1960 = vunpack.c.h.b16 %v1182
      %v1961 = vunpack.c.l.b16 %v1183
      %v1962 = vunpack.c.h.b16 %v1183
      %v1963 = vunpack.c.l.b16 %v1184
      %v1964 = vunpack.c.h.b16 %v1184
      %v1965 = vunpack.c.l.b16 %v1185
      %v1966 = vunpack.c.h.b16 %v1185
      %v1967 = vunpack.c.l.b16 %v1186
      %v1968 = vunpack.c.h.b16 %v1186
      %v1969 = vunpack.c.l.b16 %v1187
      %v1970 = vunpack.c.h.b16 %v1187
      %v1971 = vunpack.c.l.b16 %v1188
      %v1972 = vunpack.c.h.b16 %v1188
      %v1973 = vunpack.c.l.b16 %v1189
      %v1974 = vunpack.c.h.b16 %v1189
      %v1975 = vunpack.c.l.b16 %v1190
      %v1976 = vunpack.c.h.b16 %v1190
      %v1977 = vunpack.c.l.b16 %v1191
      %v1978 = vunpack.c.h.b16 %v1191
      %v1979 = vunpack.c.l.b16 %v1192
      %v1980 = vunpack.c.h.b16 %v1192
      %v1981 = vunpack.c.l.b16 %v1193
      %v1982 = vunpack.c.h.b16 %v1193
      %v1983 = vunpack.c.l.b16 %v1194
      %v1984 = vunpack.c.h.b16 %v1194
      %v1985 = vunpack.c.l.b16 %v1195
      %v1986 = vunpack.c.h.b16 %v1195
      %v1987 = vunpack.c.l.b16 %v1196
      %v1988 = vunpack.c.h.b16 %v1196
      %v1989 = vunpack.c.l.b16 %v1197
      %v1990 = vunpack.c.h.b16 %v1197
      %v1991 = vunpack.c.l.b16 %v1198
      %v1992 = vunpack.c.h.b16 %v1198
      %v1993 = vunpack.c.l.b16 %v1199
      %v1994 = vunpack.c.h.b16 %v1199
      %v1995 = vunpack.c.l.b16 %v1200
      %v1996 = vunpack.c.h.b16 %v1200
      %v1997 = vunpack.c.l.b16 %v1201
      %v1998 = vunpack.c.h.b16 %v1201
      %v1999 = vunpack.c.l.b16 %v1202
      %v2000 = vunpack.c.h.b16 %v1202
      %v2001 = vunpack.c.l.b16 %v1203
      %v2002 = vunpack.c.h.b16 %v1203
      %v2003 = vunpack.c.l.b16 %v1204
      %v2004 = vunpack.c.h.b16 %v1204
      %v2005 = vunpack.c.l.b16 %v1205
      %v2006 = vunpack.c.h.b16 %v1205
      %v2007 = vunpack.c.l.b16 %v1206
      %v2008 = vunpack.c.h.b16 %v1206
      %v2009 = vunpack.c.l.b16 %v1207
      %v2010 = vunpack.c.h.b16 %v1207
      %v2011 = vunpack.c.l.b16 %v1208
      %v2012 = vunpack.c.h.b16 %v1208
      %v2013 = vunpack.c.l.b16 %v1209
      %v2014 = vunpack.c.h.b16 %v1209
      %v2015 = vunpack.c.l.b16 %v1210
      %v2016 = vunpack.c.h.b16 %v1210
      %v2017 = vunpack.c.l.b16 %v1211
      %v2018 = vunpack.c.h.b16 %v1211
      %v2019 = vunpack.c.l.b16 %v1212
      %v2020 = vunpack.c.h.b16 %v1212
      %v2021 = vunpack.c.l.b16 %v1213
      %v2022 = vunpack.c.h.b16 %v1213
      %v2023 = vunpack.c.l.b16 %v1214
      %v2024 = vunpack.c.h.b16 %v1214
      %v2025 = vunpack.c.l.b16 %v1215
      %v2026 = vunpack.c.h.b16 %v1215
      %v2027 = vunpack.c.l.b16 %v1216
      %v2028 = vunpack.c.h.b16 %v1216
      %v2029 = vunpack.c.l.b16 %v1217
      %v2030 = vunpack.c.h.b16 %v1217
      %v2031 = vunpack.c.l.b16 %v1218
      %v2032 = vunpack.c.h.b16 %v1218
      %v2033 = vunpack.c.l.b16 %v1219
      %v2034 = vunpack.c.h.b16 %v1219
      %v2035 = vunpack.c.l.b16 %v1220
      %v2036 = vunpack.c.h.b16 %v1220
      %v2037 = vunpack.c.l.b16 %v1221
      %v2038 = vunpack.c.h.b16 %v1221
      %v2039 = vunpack.c.l.b16 %v1222
      %v2040 = vunpack.c.h.b16 %v1222
      %v2041 = vunpack.c.l.b16 %v1223
      %v2042 = vunpack.c.h.b16 %v1223
      %v2043 = vunpack.c.l.b16 %v1224
      %v2044 = vunpack.c.h.b16 %v1224
      %v2045 = vunpack.c.l.b16 %v1225
      %v2046 = vunpack.c.h.b16 %v1225
      %v2047 = vunpack.c.l.b16 %v1226
      %v2048 = vunpack.c.h.b16 %v1226
      %v2049 = vunpack.c.l.b16 %v1227
      %v2050 = vunpack.c.h.b16 %v1227
      %v2051 = vunpack.c.l.b16 %v1228
      %v2052 = vunpack.c.h.b16 %v1228
      %v2053 = vunpack.c.l.b16 %v1229
      %v2054 = vunpack.c.h.b16 %v1229
      %v2055 = vunpack.c.l.b16 %v1230
      %v2056 = vunpack.c.h.b16 %v1230
      %v2057 = vunpack.c.l.b16 %v1231
      %v2058 = vunpack.c.h.b16 %v1231
      %v2059 = vunpack.c.l.b16 %v1232
      %v2060 = vunpack.c.h.b16 %v1232
      %v2061 = vunpack.c.l.b16 %v1233
      %v2062 = vunpack.c.h.b16 %v1233
      %v2063 = vunpack.c.l.b16 %v1234
      %v2064 = vunpack.c.h.b16 %v1234
      %v2065 = vunpack.c.l.b16 %v1235
      %v2066 = vunpack.c.h.b16 %v1235
      %v2067 = vunpack.c.l.b16 %v1236
      %v2068 = vunpack.c.h.b16 %v1236
      %v2069 = vunpack.c.l.b16 %v1237
      %v2070 = vunpack.c.h.b16 %v1237
      %v2071 = vunpack.c.l.b16 %v1238
      %v2072 = vunpack.c.h.b16 %v1238
      %v2073 = vunpack.c.l.b16 %v1239
      %v2074 = vunpack.c.h.b16 %v1239
      %v2075 = vunpack.c.l.b16 %v1240
      %v2076 = vunpack.c.h.b16 %v1240
      %v2077 = vunpack.c.l.b16 %v1241
      %v2078 = vunpack.c.h.b16 %v1241
      %v2079 = vunpack.c.l.b16 %v1242
      %v2080 = vunpack.c.h.b16 %v1242
      %v2081 = vunpack.c.l.b16 %v1243
      %v2082 = vunpack.c.h.b16 %v1243
      %v2083 = vunpack.c.l.b16 %v1244
      %v2084 = vunpack.c.h.b16 %v1244
      %v2085 = vunpack.c.l.b16 %v1245
      %v2086 = vunpack.c.h.b16 %v1245
      %v2087 = vunpack.c.l.b16 %v1246
      %v2088 = vunpack.c.h.b16 %v1246
      %v2089 = vunpack.c.l.b16 %v1247
      %v2090 = vunpack.c.h.b16 %v1247
      %v2091 = vunpack.c.l.b16 %v1248
      %v2092 = vunpack.c.h.b16 %v1248
      %v2093 = vunpack.c.l.b16 %v1249
      %v2094 = vunpack.c.h.b16 %v1249
      %v2095 = vunpack.c.l.b16 %v1250
      %v2096 = vunpack.c.h.b16 %v1250
      %v2097 = vunpack.c.l.b16 %v1251
      %v2098 = vunpack.c.h.b16 %v1251
      %v2099 = vunpack.c.l.b16 %v1252
      %v2100 = vunpack.c.h.b16 %v1252
      %v2101 = vunpack.c.l.b16 %v1253
      %v2102 = vunpack.c.h.b16 %v1253
      %v2103 = vunpack.c.l.b16 %v1254
      %v2104 = vunpack.c.h.b16 %v1254
      %v2105 = vunpack.c.l.b16 %v1255
      %v2106 = vunpack.c.h.b16 %v1255
      %v2107 = vunpack.c.l.b16 %v1256
      %v2108 = vunpack.c.h.b16 %v1256
      %v2109 = vunpack.c.l.b16 %v1257
      %v2110 = vunpack.c.h.b16 %v1257
      %v2111 = vunpack.c.l.b16 %v1258
      %v2112 = vunpack.c.h.b16 %v1258
      %v2113 = vunpack.c.l.b16 %v1259
      %v2114 = vunpack.c.h.b16 %v1259
      %v2115 = vunpack.c.l.b16 %v1260
      %v2116 = vunpack.c.h.b16 %v1260
      %v2117 = vunpack.c.l.b16 %v1261
      %v2118 = vunpack.c.h.b16 %v1261
      %v2119 = vunpack.c.l.b16 %v1262
      %v2120 = vunpack.c.h.b16 %v1262
      %v2121 = vunpack.c.l.b16 %v1263
      %v2122 = vunpack.c.h.b16 %v1263
      %v2123 = vunpack.c.l.b16 %v1264
      %v2124 = vunpack.c.h.b16 %v1264
      %v2125 = vunpack.c.l.b16 %v1265
      %v2126 = vunpack.c.h.b16 %v1265
      %v2127 = vunpack.c.l.b16 %v1266
      %v2128 = vunpack.c.h.b16 %v1266
      %v2129 = vunpack.c.l.b16 %v1267
      %v2130 = vunpack.c.h.b16 %v1267
      %v2131 = vunpack.c.l.b16 %v1268
      %v2132 = vunpack.c.h.b16 %v1268
      %v2133 = vunpack.c.l.b16 %v1269
      %v2134 = vunpack.c.h.b16 %v1269
      %v2135 = vunpack.c.l.b16 %v1270
      %v2136 = vunpack.c.h.b16 %v1270
      %v2137 = vunpack.c.l.b16 %v1271
      %v2138 = vunpack.c.h.b16 %v1271
      %v2139 = vunpack.c.l.b16 %v1272
      %v2140 = vunpack.c.h.b16 %v1272
      %v2141 = vunpack.c.l.b16 %v1273
      %v2142 = vunpack.c.h.b16 %v1273
      %v2143 = vunpack.c.l.b16 %v1274
      %v2144 = vunpack.c.h.b16 %v1274
      %v2145 = vunpack.c.l.b16 %v1275
      %v2146 = vunpack.c.h.b16 %v1275
      %v2147 = vunpack.c.l.b16 %v1276
      %v2148 = vunpack.c.h.b16 %v1276
      %v2149 = vunpack.c.l.b16 %v1277
      %v2150 = vunpack.c.h.b16 %v1277
      %v2151 = vunpack.c.l.b16 %v1278
      %v2152 = vunpack.c.h.b16 %v1278
      %v2153 = vunpack.c.l.b16 %v1279
      %v2154 = vunpack.c.h.b16 %v1279
      %v2155 = vunpack.c.l.b16 %v1280
      %v2156 = vunpack.c.h.b16 %v1280
      %v2157 = vunpack.c.l.b16 %v1281
      %v2158 = vunpack.c.h.b16 %v1281
      %v2159 = vunpack.c.l.b16 %v1282
      %v2160 = vunpack.c.h.b16 %v1282
      %v2161 = vunpack.c.l.b16 %v1283
      %v2162 = vunpack.c.h.b16 %v1283
      %v2163 = vunpack.c.l.b16 %v1284
      %v2164 = vunpack.c.h.b16 %v1284
      %v2165 = vunpack.c.l.b16 %v1285
      %v2166 = vunpack.c.h.b16 %v1285
      %v2167 = vunpack.c.l.b16 %v1286
      %v2168 = vunpack.c.h.b16 %v1286
      %v2169 = vunpack.c.l.b16 %v1287
      %v2170 = vunpack.c.h.b16 %v1287
      %v2171 = vunpack.c.l.b16 %v1288
      %v2172 = vunpack.c.h.b16 %v1288
      %v2173 = vunpack.c.l.b16 %v1289
      %v2174 = vunpack.c.h.b16 %v1289
      %v2175 = vunpack.c.l.b16 %v1290
      %v2176 = vunpack.c.h.b16 %v1290
      %v2177 = vpack.c.b16 %v1605, %v1601
      %v2178 = vpack.c.b16 %v1606, %v1602
      %v2179 = vpack.c.b16 %v1607, %v1603
      %v2180 = vpack.c.b16 %v1608, %v1604
      %v2181 = vpack.c.b16 %v1613, %v1609
      %v2182 = vpack.c.b16 %v1614, %v1610
      %v2183 = vpack.c.b16 %v1615, %v1611
      %v2184 = vpack.c.b16 %v1616, %v1612
      %v2185 = vpack.c.b16 %v1621, %v1617
      %v2186 = vpack.c.b16 %v1622, %v1618
      %v2187 = vpack.c.b16 %v1623, %v1619
      %v2188 = vpack.c.b16 %v1624, %v1620
      %v2189 = vpack.c.b16 %v1629, %v1625
      %v2190 = vpack.c.b16 %v1630, %v1626
      %v2191 = vpack.c.b16 %v1631, %v1627
      %v2192 = vpack.c.b16 %v1632, %v1628
      %v2193 = vpack.c.b16 %v1637, %v1633
      %v2194 = vpack.c.b16 %v1638, %v1634
      %v2195 = vpack.c.b16 %v1639, %v1635
      %v2196 = vpack.c.b16 %v1640, %v1636
      %v2197 = vpack.c.b16 %v1645, %v1641
      %v2198 = vpack.c.b16 %v1646, %v1642
      %v2199 = vpack.c.b16 %v1647, %v1643
      %v2200 = vpack.c.b16 %v1648, %v1644
      %v2201 = vpack.c.b16 %v1653, %v1649
      %v2202 = vpack.c.b16 %v1654, %v1650
      %v2203 = vpack.c.b16 %v1655, %v1651
      %v2204 = vpack.c.b16 %v1656, %v1652
      %v2205 = vpack.c.b16 %v1661, %v1657
      %v2206 = vpack.c.b16 %v1662, %v1658
      %v2207 = vpack.c.b16 %v1663, %v1659
      %v2208 = vpack.c.b16 %v1664, %v1660
      %v2209 = vpack.c.b16 %v1669, %v1665
      %v2210 = vpack.c.b16 %v1670, %v1666
      %v2211 = vpack.c.b16 %v1671, %v1667
      %v2212 = vpack.c.b16 %v1672, %v1668
      %v2213 = vpack.c.b16 %v1677, %v1673
      %v2214 = vpack.c.b16 %v1678, %v1674
      %v2215 = vpack.c.b16 %v1679, %v1675
      %v2216 = vpack.c.b16 %v1680, %v1676
      %v2217 = vpack.c.b16 %v1685, %v1681
      %v2218 = vpack.c.b16 %v1686, %v1682
      %v2219 = vpack.c.b16 %v1687, %v1683
      %v2220 = vpack.c.b16 %v1688, %v1684
      %v2221 = vpack.c.b16 %v1693, %v1689
      %v2222 = vpack.c.b16 %v1694, %v1690
      %v2223 = vpack.c.b16 %v1695, %v1691
      %v2224 = vpack.c.b16 %v1696, %v1692
      %v2225 = vpack.c.b16 %v1701, %v1697
      %v2226 = vpack.c.b16 %v1702, %v1698
      %v2227 = vpack.c.b16 %v1703, %v1699
      %v2228 = vpack.c.b16 %v1704, %v1700
      %v2229 = vpack.c.b16 %v1709, %v1705
      %v2230 = vpack.c.b16 %v1710, %v1706
      %v2231 = vpack.c.b16 %v1711, %v1707
      %v2232 = vpack.c.b16 %v1712, %v1708
      %v2233 = vpack.c.b16 %v1717, %v1713
      %v2234 = vpack.c.b16 %v1718, %v1714
      %v2235 = vpack.c.b16 %v1719, %v1715
      %v2236 = vpack.c.b16 %v1720, %v1716
      %v2237 = vpack.c.b16 %v1725, %v1721
      %v2238 = vpack.c.b16 %v1726, %v1722
      %v2239 = vpack.c.b16 %v1727, %v1723
      %v2240 = vpack.c.b16 %v1728, %v1724
      %v2241 = vpack.c.b16 %v1733, %v1729
      %v2242 = vpack.c.b16 %v1734, %v1730
      %v2243 = vpack.c.b16 %v1735, %v1731
      %v2244 = vpack.c.b16 %v1736, %v1732
      %v2245 = vpack.c.b16 %v1741, %v1737
      %v2246 = vpack.c.b16 %v1742, %v1738
      %v2247 = vpack.c.b16 %v1743, %v1739
      %v2248 = vpack.c.b16 %v1744, %v1740
      %v2249 = vpack.c.b16 %v1749, %v1745
      %v2250 = vpack.c.b16 %v1750, %v1746
      %v2251 = vpack.c.b16 %v1751, %v1747
      %v2252 = vpack.c.b16 %v1752, %v1748
      %v2253 = vpack.c.b16 %v1757, %v1753
      %v2254 = vpack.c.b16 %v1758, %v1754
      %v2255 = vpack.c.b16 %v1759, %v1755
      %v2256 = vpack.c.b16 %v1760, %v1756
      %v2257 = vpack.c.b16 %v1765, %v1761
      %v2258 = vpack.c.b16 %v1766, %v1762
      %v2259 = vpack.c.b16 %v1767, %v1763
      %v2260 = vpack.c.b16 %v1768, %v1764
      %v2261 = vpack.c.b16 %v1773, %v1769
      %v2262 = vpack.c.b16 %v1774, %v1770
      %v2263 = vpack.c.b16 %v1775, %v1771
      %v2264 = vpack.c.b16 %v1776, %v1772
      %v2265 = vpack.c.b16 %v1781, %v1777
      %v2266 = vpack.c.b16 %v1782, %v1778
      %v2267 = vpack.c.b16 %v1783, %v1779
      %v2268 = vpack.c.b16 %v1784, %v1780
      %v2269 = vpack.c.b16 %v1789, %v1785
      %v2270 = vpack.c.b16 %v1790, %v1786
      %v2271 = vpack.c.b16 %v1791, %v1787
      %v2272 = vpack.c.b16 %v1792, %v1788
      %v2273 = vpack.c.b16 %v1797, %v1793
      %v2274 = vpack.c.b16 %v1798, %v1794
      %v2275 = vpack.c.b16 %v1799, %v1795
      %v2276 = vpack.c.b16 %v1800, %v1796
      %v2277 = vpack.c.b16 %v1805, %v1801
      %v2278 = vpack.c.b16 %v1806, %v1802
      %v2279 = vpack.c.b16 %v1807, %v1803
      %v2280 = vpack.c.b16 %v1808, %v1804
      %v2281 = vpack.c.b16 %v1813, %v1809
      %v2282 = vpack.c.b16 %v1814, %v1810
      %v2283 = vpack.c.b16 %v1815, %v1811
      %v2284 = vpack.c.b16 %v1816, %v1812
      %v2285 = vpack.c.b16 %v1821, %v1817
      %v2286 = vpack.c.b16 %v1822, %v1818
      %v2287 = vpack.c.b16 %v1823, %v1819
      %v2288 = vpack.c.b16 %v1824, %v1820
      %v2289 = vpack.c.b16 %v1829, %v1825
      %v2290 = vpack.c.b16 %v1830, %v1826
      %v2291 = vpack.c.b16 %v1831, %v1827
      %v2292 = vpack.c.b16 %v1832, %v1828
      %v2293 = vpack.c.b16 %v1837, %v1833
      %v2294 = vpack.c.b16 %v1838, %v1834
      %v2295 = vpack.c.b16 %v1839, %v1835
      %v2296 = vpack.c.b16 %v1840, %v1836
      %v2297 = vpack.c.b16 %v1845, %v1841
      %v2298 = vpack.c.b16 %v1846, %v1842
      %v2299 = vpack.c.b16 %v1847, %v1843
      %v2300 = vpack.c.b16 %v1848, %v1844
      %v2301 = vpack.c.b16 %v1853, %v1849
      %v2302 = vpack.c.b16 %v1854, %v1850
      %v2303 = vpack.c.b16 %v1855, %v1851
      %v2304 = vpack.c.b16 %v1856, %v1852
      %v2305 = vpack.c.b16 %v1861, %v1857
      %v2306 = vpack.c.b16 %v1862, %v1858
      %v2307 = vpack.c.b16 %v1863, %v1859
      %v2308 = vpack.c.b16 %v1864, %v1860
      %v2309 = vpack.c.b16 %v1869, %v1865
      %v2310 = vpack.c.b16 %v1870, %v1866
      %v2311 = vpack.c.b16 %v1871, %v1867
      %v2312 = vpack.c.b16 %v1872, %v1868
      %v2313 = vpack.c.b16 %v1877, %v1873
      %v2314 = vpack.c.b16 %v1878, %v1874
      %v2315 = vpack.c.b16 %v1879, %v1875
      %v2316 = vpack.c.b16 %v1880, %v1876
      %v2317 = vpack.c.b16 %v1885, %v1881
      %v2318 = vpack.c.b16 %v1886, %v1882
      %v2319 = vpack.c.b16 %v1887, %v1883
      %v2320 = vpack.c.b16 %v1888, %v1884
      %v2321 = vpack.c.b16 %v1893, %v1889
      %v2322 = vpack.c.b16 %v1894, %v1890
      %v2323 = vpack.c.b16 %v1895, %v1891
      %v2324 = vpack.c.b16 %v1896, %v1892
      %v2325 = vpack.c.b16 %v1901, %v1897
      %v2326 = vpack.c.b16 %v1902, %v1898
      %v2327 = vpack.c.b16 %v1903, %v1899
      %v2328 = vpack.c.b16 %v1904, %v1900
      %v2329 = vpack.c.b16 %v1909, %v1905
      %v2330 = vpack.c.b16 %v1910, %v1906
      %v2331 = vpack.c.b16 %v1911, %v1907
      %v2332 = vpack.c.b16 %v1912, %v1908
      %v2333 = vpack.c.b16 %v1917, %v1913
      %v2334 = vpack.c.b16 %v1918, %v1914
      %v2335 = vpack.c.b16 %v1919, %v1915
      %v2336 = vpack.c.b16 %v1920, %v1916
      %v2337 = vpack.c.b16 %v1925, %v1921
      %v2338 = vpack.c.b16 %v1926, %v1922
      %v2339 = vpack.c.b16 %v1927, %v1923
      %v2340 = vpack.c.b16 %v1928, %v1924
      %v2341 = vpack.c.b16 %v1933, %v1929
      %v2342 = vpack.c.b16 %v1934, %v1930
      %v2343 = vpack.c.b16 %v1935, %v1931
      %v2344 = vpack.c.b16 %v1936, %v1932
      %v2345 = vpack.c.b16 %v1941, %v1937
      %v2346 = vpack.c.b16 %v1942, %v1938
      %v2347 = vpack.c.b16 %v1943, %v1939
      %v2348 = vpack.c.b16 %v1944, %v1940
      %v2349 = vpack.c.b16 %v1949, %v1945
      %v2350 = vpack.c.b16 %v1950, %v1946
      %v2351 = vpack.c.b16 %v1951, %v1947
      %v2352 = vpack.c.b16 %v1952, %v1948
      %v2353 = vpack.c.b16 %v1957, %v1953
      %v2354 = vpack.c.b16 %v1958, %v1954
      %v2355 = vpack.c.b16 %v1959, %v1955
      %v2356 = vpack.c.b16 %v1960, %v1956
      %v2357 = vpack.c.b16 %v1965, %v1961
      %v2358 = vpack.c.b16 %v1966, %v1962
      %v2359 = vpack.c.b16 %v1967, %v1963
      %v2360 = vpack.c.b16 %v1968, %v1964
      %v2361 = vpack.c.b16 %v1973, %v1969
      %v2362 = vpack.c.b16 %v1974, %v1970
      %v2363 = vpack.c.b16 %v1975, %v1971
      %v2364 = vpack.c.b16 %v1976, %v1972
      %v2365 = vpack.c.b16 %v1981, %v1977
      %v2366 = vpack.c.b16 %v1982, %v1978
      %v2367 = vpack.c.b16 %v1983, %v1979
      %v2368 = vpack.c.b16 %v1984, %v1980
      %v2369 = vpack.c.b16 %v1989, %v1985
      %v2370 = vpack.c.b16 %v1990, %v1986
      %v2371 = vpack.c.b16 %v1991, %v1987
      %v2372 = vpack.c.b16 %v1992, %v1988
      %v2373 = vpack.c.b16 %v1997, %v1993
      %v2374 = vpack.c.b16 %v1998, %v1994
      %v2375 = vpack.c.b16 %v1999, %v1995
      %v2376 = vpack.c.b16 %v2000, %v1996
      %v2377 = vpack.c.b16 %v2005, %v2001
      %v2378 = vpack.c.b16 %v2006, %v2002
      %v2379 = vpack.c.b16 %v2007, %v2003
      %v2380 = vpack.c.b16 %v2008, %v2004
      %v2381 = vpack.c.b16 %v2013, %v2009
      %v2382 = vpack.c.b16 %v2014, %v2010
      %v2383 = vpack.c.b16 %v2015, %v2011
      %v2384 = vpack.c.b16 %v2016, %v2012
      %v2385 = vpack.c.b16 %v2021, %v2017
      %v2386 = vpack.c.b16 %v2022, %v2018
      %v2387 = vpack.c.b16 %v2023, %v2019
      %v2388 = vpack.c.b16 %v2024, %v2020
      %v2389 = vpack.c.b16 %v2029, %v2025
      %v2390 = vpack.c.b16 %v2030, %v2026
      %v2391 = vpack.c.b16 %v2031, %v2027
      %v2392 = vpack.c.b16 %v2032, %v2028
      %v2393 = vpack.c.b16 %v2037, %v2033
      %v2394 = vpack.c.b16 %v2038, %v2034
      %v2395 = vpack.c.b16 %v2039, %v2035
      %v2396 = vpack.c.b16 %v2040, %v2036
      %v2397 = vpack.c.b16 %v2045, %v2041
      %v2398 = vpack.c.b16 %v2046, %v2042
      %v2399 = vpack.c.b16 %v2047, %v2043
      %v2400 = vpack.c.b16 %v2048, %v2044
      %v2401 = vpack.c.b16 %v2053, %v2049
      %v2402 = vpack.c.b16 %v2054, %v2050
      %v2403 = vpack.c.b16 %v2055, %v2051
      %v2404 = vpack.c.b16 %v2056, %v2052
      %v2405 = vpack.c.b16 %v2061, %v2057
      %v2406 = vpack.c.b16 %v2062, %v2058
      %v2407 = vpack.c.b16 %v2063, %v2059
      %v2408 = vpack.c.b16 %v2064, %v2060
      %v2409 = vpack.c.b16 %v2069, %v2065
      %v2410 = vpack.c.b16 %v2070, %v2066
      %v2411 = vpack.c.b16 %v2071, %v2067
      %v2412 = vpack.c.b16 %v2072, %v2068
      %v2413 = vpack.c.b16 %v2077, %v2073
      %v2414 = vpack.c.b16 %v2078, %v2074
      %v2415 = vpack.c.b16 %v2079, %v2075
      %v2416 = vpack.c.b16 %v2080, %v2076
      %v2417 = vpack.c.b16 %v2085, %v2081
      %v2418 = vpack.c.b16 %v2086, %v2082
      %v2419 = vpack.c.b16 %v2087, %v2083
      %v2420 = vpack.c.b16 %v2088, %v2084
      %v2421 = vpack.c.b16 %v2093, %v2089
      %v2422 = vpack.c.b16 %v2094, %v2090
      %v2423 = vpack.c.b16 %v2095, %v2091
      %v2424 = vpack.c.b16 %v2096, %v2092
      %v2425 = vpack.c.b16 %v2101, %v2097
      %v2426 = vpack.c.b16 %v2102, %v2098
      %v2427 = vpack.c.b16 %v2103, %v2099
      %v2428 = vpack.c.b16 %v2104, %v2100
      %v2429 = vpack.c.b16 %v2109, %v2105
      %v2430 = vpack.c.b16 %v2110, %v2106
      %v2431 = vpack.c.b16 %v2111, %v2107
      %v2432 = vpack.c.b16 %v2112, %v2108
      %v2433 = vpack.c.b16 %v2117, %v2113
      %v2434 = vpack.c.b16 %v2118, %v2114
      %v2435 = vpack.c.b16 %v2119, %v2115
      %v2436 = vpack.c.b16 %v2120, %v2116
      %v2437 = vpack.c.b16 %v2125, %v2121
      %v2438 = vpack.c.b16 %v2126, %v2122
      %v2439 = vpack.c.b16 %v2127, %v2123
      %v2440 = vpack.c.b16 %v2128, %v2124
      %v2441 = vpack.c.b16 %v2133, %v2129
      %v2442 = vpack.c.b16 %v2134, %v2130
      %v2443 = vpack.c.b16 %v2135, %v2131
      %v2444 = vpack.c.b16 %v2136, %v2132
      %v2445 = vpack.c.b16 %v2141, %v2137
      %v2446 = vpack.c.b16 %v2142, %v2138
      %v2447 = vpack.c.b16 %v2143, %v2139
      %v2448 = vpack.c.b16 %v2144, %v2140
      %v2449 = vpack.c.b16 %v2149, %v2145
      %v2450 = vpack.c.b16 %v2150, %v2146
      %v2451 = vpack.c.b16 %v2151, %v2147
      %v2452 = vpack.c.b16 %v2152, %v2148
      %v2453 = vpack.c.b16 %v2157, %v2153
      %v2454 = vpack.c.b16 %v2158, %v2154
      %v2455 = vpack.c.b16 %v2159, %v2155
      %v2456 = vpack.c.b16 %v2160, %v2156
      %v2457 = vpack.c.b16 %v2165, %v2161
      %v2458 = vpack.c.b16 %v2166, %v2162
      %v2459 = vpack.c.b16 %v2167, %v2163
      %v2460 = vpack.c.b16 %v2168, %v2164
      %v2461 = vpack.c.b16 %v2173, %v2169
      %v2462 = vpack.c.b16 %v2174, %v2170
      %v2463 = vpack.c.b16 %v2175, %v2171
      %v2464 = vpack.c.b16 %v2176, %v2172
      %2753 = vmatprep.subr.bf16.mxu0 %v2178
      %2754 = vmatpush1.bf16.msra.mxu0 %v2177
      %2755 = vmatprep.subr.bf16.mxu0 %v2182
      %2756 = vmatpush1.bf16.msra.mxu0 %v2181
      %2757 = vmatprep.subr.bf16.mxu0 %v2186
      %2758 = vmatpush1.bf16.msra.mxu0 %v2185
      %2759 = vmatprep.subr.bf16.mxu0 %v2190
      %2760 = vmatpush1.bf16.msra.mxu0 %v2189
      %2761 = vmatprep.subr.bf16.mxu0 %v2194
      %2762 = vmatpush1.bf16.msra.mxu0 %v2193
      %2763 = vmatprep.subr.bf16.mxu0 %v2198
      %2764 = vmatpush1.bf16.msra.mxu0 %v2197
      %2765 = vmatprep.subr.bf16.mxu0 %v2202
      %2766 = vmatpush1.bf16.msra.mxu0 %v2201
      %2767 = vmatprep.subr.bf16.mxu0 %v2206
      %2768 = vmatpush1.bf16.msra.mxu0 %v2205
      %2769 = vmatprep.subr.bf16.mxu0 %v2210
      %2770 = vmatpush1.bf16.msra.mxu0 %v2209
      %2771 = vmatprep.subr.bf16.mxu0 %v2214
      %2772 = vmatpush1.bf16.msra.mxu0 %v2213
      %2773 = vmatprep.subr.bf16.mxu0 %v2218
      %2774 = vmatpush1.bf16.msra.mxu0 %v2217
      %2775 = vmatprep.subr.bf16.mxu0 %v2222
      %2776 = vmatpush1.bf16.msra.mxu0 %v2221
      %2777 = vmatprep.subr.bf16.mxu0 %v2226
      %2778 = vmatpush1.bf16.msra.mxu0 %v2225
      %2779 = vmatprep.subr.bf16.mxu0 %v2230
      %2780 = vmatpush1.bf16.msra.mxu0 %v2229
      %2781 = vmatprep.subr.bf16.mxu0 %v2234
      %2782 = vmatpush1.bf16.msra.mxu0 %v2233
      %2783 = vmatprep.subr.bf16.mxu0 %v2238
      %2784 = vmatpush1.bf16.msra.mxu0 %v2237
      %2785 = vmatprep.mubr.bf16.mxu0 %v995
      %2786 = vmatmul.mubr.bf16.gmra.mrb[0].mxu0 %v994
      %v2787 = vpop.f32.mrb[0].mxu0
      %v2788 = vadd.f32 %v1296, %v2787
      %v2789 = vpop.f32.mrb[0].mxu0
      %v2790 = vadd.f32 %v1300, %v2789
      %v2791 = vpop.f32.mrb[0].mxu0
      %v2792 = vpop.f32.mrb[0].mxu0
      %2793 = vdwg.mxu0
      %2794 = vmatprep.subr.bf16.mxu0 %v2242
      %2795 = vmatpush1.bf16.msra.mxu0 %v2241
      %2796 = vmatprep.subr.bf16.mxu0 %v2246
      %2797 = vmatpush1.bf16.msra.mxu0 %v2245
      %2798 = vmatprep.subr.bf16.mxu0 %v2250
      %2799 = vmatpush1.bf16.msra.mxu0 %v2249
      %2800 = vmatprep.subr.bf16.mxu0 %v2254
      %2801 = vmatpush1.bf16.msra.mxu0 %v2253
      %2802 = vmatprep.subr.bf16.mxu0 %v2258
      %2803 = vmatpush1.bf16.msra.mxu0 %v2257
      %2804 = vmatprep.subr.bf16.mxu0 %v2262
      %2805 = vmatpush1.bf16.msra.mxu0 %v2261
      %2806 = vmatprep.subr.bf16.mxu0 %v2266
      %2807 = vmatpush1.bf16.msra.mxu0 %v2265
      %2808 = vmatprep.subr.bf16.mxu0 %v2270
      %2809 = vmatpush1.bf16.msra.mxu0 %v2269
      %2810 = vmatprep.subr.bf16.mxu0 %v2274
      %2811 = vmatpush1.bf16.msra.mxu0 %v2273
      %2812 = vmatprep.subr.bf16.mxu0 %v2278
      %2813 = vmatpush1.bf16.msra.mxu0 %v2277
      %2814 = vmatprep.subr.bf16.mxu0 %v2282
      %2815 = vmatpush1.bf16.msra.mxu0 %v2281
      %2816 = vmatprep.subr.bf16.mxu0 %v2286
      %2817 = vmatpush1.bf16.msra.mxu0 %v2285
      %2818 = vmatprep.subr.bf16.mxu0 %v2290
      %2819 = vmatpush1.bf16.msra.mxu0 %v2289
      %2820 = vmatprep.subr.bf16.mxu0 %v2294
      %2821 = vmatpush1.bf16.msra.mxu0 %v2293
      %2822 = vmatprep.subr.bf16.mxu0 %v2298
      %2823 = vmatpush1.bf16.msra.mxu0 %v2297
      %2824 = vmatprep.subr.bf16.mxu0 %v2302
      %2825 = vmatpush1.bf16.msra.mxu0 %v2301
      %2826 = vmatprep.mubr.bf16.mxu0 %v997
      %2827 = vmatmul.mubr.bf16.gmra.mrb[0].mxu0 %v996
      %v2828 = vpop.f32.mrb[0].mxu0
      %v2829 = vadd.f32 %v2788, %v2828
      %v2830 = vpop.f32.mrb[0].mxu0
      %v2831 = vadd.f32 %v2790, %v2830
      %v2832 = vpop.f32.mrb[0].mxu0
      %v2833 = vpop.f32.mrb[0].mxu0
      %2834 = vdwg.mxu0
      %2835 = vmatprep.subr.bf16.mxu0 %v2306
      %2836 = vmatpush1.bf16.msra.mxu0 %v2305
      %2837 = vmatprep.subr.bf16.mxu0 %v2310
      %2838 = vmatpush1.bf16.msra.mxu0 %v2309
      %2839 = vmatprep.subr.bf16.mxu0 %v2314
      %2840 = vmatpush1.bf16.msra.mxu0 %v2313
      %2841 = vmatprep.subr.bf16.mxu0 %v2318
      %2842 = vmatpush1.bf16.msra.mxu0 %v2317
      %2843 = vmatprep.subr.bf16.mxu0 %v2322
      %2844 = vmatpush1.bf16.msra.mxu0 %v2321
      %2845 = vmatprep.subr.bf16.mxu0 %v2326
      %2846 = vmatpush1.bf16.msra.mxu0 %v2325
      %2847 = vmatprep.subr.bf16.mxu0 %v2330
      %2848 = vmatpush1.bf16.msra.mxu0 %v2329
      %2849 = vmatprep.subr.bf16.mxu0 %v2334
      %2850 = vmatpush1.bf16.msra.mxu0 %v2333
      %2851 = vmatprep.subr.bf16.mxu0 %v2338
      %2852 = vmatpush1.bf16.msra.mxu0 %v2337
      %2853 = vmatprep.subr.bf16.mxu0 %v2342
      %2854 = vmatpush1.bf16.msra.mxu0 %v2341
      %2855 = vmatprep.subr.bf16.mxu0 %v2346
      %2856 = vmatpush1.bf16.msra.mxu0 %v2345
      %2857 = vmatprep.subr.bf16.mxu0 %v2350
      %2858 = vmatpush1.bf16.msra.mxu0 %v2349
      %2859 = vmatprep.subr.bf16.mxu0 %v2354
      %2860 = vmatpush1.bf16.msra.mxu0 %v2353
      %2861 = vmatprep.subr.bf16.mxu0 %v2358
      %2862 = vmatpush1.bf16.msra.mxu0 %v2357
      %2863 = vmatprep.subr.bf16.mxu0 %v2362
      %2864 = vmatpush1.bf16.msra.mxu0 %v2361
      %2865 = vmatprep.subr.bf16.mxu0 %v2366
      %2866 = vmatpush1.bf16.msra.mxu0 %v2365
      %2867 = vmatprep.mubr.bf16.mxu0 %v999
      %2868 = vmatmul.mubr.bf16.gmra.mrb[0].mxu0 %v998
      %v2869 = vpop.f32.mrb[0].mxu0
      %v2870 = vadd.f32 %v2829, %v2869
      %v2871 = vpop.f32.mrb[0].mxu0
      %v2872 = vadd.f32 %v2831, %v2871
      %v2873 = vpop.f32.mrb[0].mxu0
      %v2874 = vpop.f32.mrb[0].mxu0
      %2875 = vdwg.mxu0
      %2876 = vmatprep.subr.bf16.mxu0 %v2370
      %2877 = vmatpush1.bf16.msra.mxu0 %v2369
      %2878 = vmatprep.subr.bf16.mxu0 %v2374
      %2879 = vmatpush1.bf16.msra.mxu0 %v2373
      %2880 = vmatprep.subr.bf16.mxu0 %v2378
      %2881 = vmatpush1.bf16.msra.mxu0 %v2377
      %2882 = vmatprep.subr.bf16.mxu0 %v2382
      %2883 = vmatpush1.bf16.msra.mxu0 %v2381
      %2884 = vmatprep.subr.bf16.mxu0 %v2386
      %2885 = vmatpush1.bf16.msra.mxu0 %v2385
      %2886 = vmatprep.subr.bf16.mxu0 %v2390
      %2887 = vmatpush1.bf16.msra.mxu0 %v2389
      %2888 = vmatprep.subr.bf16.mxu0 %v2394
      %2889 = vmatpush1.bf16.msra.mxu0 %v2393
      %2890 = vmatprep.subr.bf16.mxu0 %v2398
      %2891 = vmatpush1.bf16.msra.mxu0 %v2397
      %2892 = vmatprep.subr.bf16.mxu0 %v2402
      %2893 = vmatpush1.bf16.msra.mxu0 %v2401
      %2894 = vmatprep.subr.bf16.mxu0 %v2406
      %2895 = vmatpush1.bf16.msra.mxu0 %v2405
      %2896 = vmatprep.subr.bf16.mxu0 %v2410
      %2897 = vmatpush1.bf16.msra.mxu0 %v2409
      %2898 = vmatprep.subr.bf16.mxu0 %v2414
      %2899 = vmatpush1.bf16.msra.mxu0 %v2413
      %2900 = vmatprep.subr.bf16.mxu0 %v2418
      %2901 = vmatpush1.bf16.msra.mxu0 %v2417
      %2902 = vmatprep.subr.bf16.mxu0 %v2422
      %2903 = vmatpush1.bf16.msra.mxu0 %v2421
      %2904 = vmatprep.subr.bf16.mxu0 %v2426
      %2905 = vmatpush1.bf16.msra.mxu0 %v2425
      %2906 = vmatprep.subr.bf16.mxu0 %v2430
      %2907 = vmatpush1.bf16.msra.mxu0 %v2429
      %2908 = vmatprep.mubr.bf16.mxu0 %v1001
      %2909 = vmatmul.mubr.bf16.gmra.mrb[0].mxu0 %v1000
      %v2910 = vpop.f32.mrb[0].mxu0
      %v2911 = vadd.f32 %v2870, %v2910
      %v2912 = vpop.f32.mrb[0].mxu0
      %v2913 = vadd.f32 %v2872, %v2912
      %v2914 = vpop.f32.mrb[0].mxu0
      %v2915 = vpop.f32.mrb[0].mxu0
      %2916 = vdwg.mxu0
      %2917 = vmatprep.subr.bf16.mxu0 %v2434
      %2918 = vmatpush1.bf16.msra.mxu0 %v2433
      %2919 = vmatprep.subr.bf16.mxu0 %v2438
      %2920 = vmatpush1.bf16.msra.mxu0 %v2437
      %2921 = vmatprep.subr.bf16.mxu0 %v2442
      %2922 = vmatpush1.bf16.msra.mxu0 %v2441
      %2923 = vmatprep.subr.bf16.mxu0 %v2446
      %2924 = vmatpush1.bf16.msra.mxu0 %v2445
      %2925 = vmatprep.subr.bf16.mxu0 %v2450
      %2926 = vmatpush1.bf16.msra.mxu0 %v2449
      %2927 = vmatprep.subr.bf16.mxu0 %v2454
      %2928 = vmatpush1.bf16.msra.mxu0 %v2453
      %2929 = vmatprep.subr.bf16.mxu0 %v2458
      %2930 = vmatpush1.bf16.msra.mxu0 %v2457
      %2931 = vmatprep.subr.bf16.mxu0 %v2462
      %2932 = vmatpush1.bf16.msra.mxu0 %v2461
      %2933 = vmatprep.subr.bf16.mxu0 0
      %2934 = vmatpush1.bf16.msra.mxu0 0
      %2935 = vmatprep.subr.bf16.mxu0 0
      %2936 = vmatpush1.bf16.msra.mxu0 0
      %2937 = vmatprep.subr.bf16.mxu0 0
      %2938 = vmatpush1.bf16.msra.mxu0 0
      %2939 = vmatprep.subr.bf16.mxu0 0
      %2940 = vmatpush1.bf16.msra.mxu0 0
      %2941 = vmatprep.subr.bf16.mxu0 0
      %2942 = vmatpush1.bf16.msra.mxu0 0
      %2943 = vmatprep.subr.bf16.mxu0 0
      %2944 = vmatpush1.bf16.msra.mxu0 0
      %2945 = vmatprep.subr.bf16.mxu0 0
      %2946 = vmatpush1.bf16.msra.mxu0 0
      %2947 = vmatprep.subr.bf16.mxu0 0
      %2948 = vmatpush1.bf16.msra.mxu0 0
      %2949 = vmatprep.mubr.bf16.mxu0 0
      %2950 = vmatmul.mubr.bf16.gmra.mrb[0].mxu0 %v1002
      %v2951 = vpop.f32.mrb[0].mxu0
      %v2952 = vadd.f32 %v2911, %v2951
      %v2953 = vpop.f32.mrb[0].mxu0
      %v2954 = vadd.f32 %v2913, %v2953
      %v2955 = vpop.f32.mrb[0].mxu0
      %v2956 = vpop.f32.mrb[0].mxu0
      %2957 = vdwg.mxu0
      %2958 = vmatprep.subr.bf16.mxu0 %v2180
      %2959 = vmatpush1.bf16.msra.mxu0 %v2179
      %2960 = vmatprep.subr.bf16.mxu0 %v2184
      %2961 = vmatpush1.bf16.msra.mxu0 %v2183
      %2962 = vmatprep.subr.bf16.mxu0 %v2188
      %2963 = vmatpush1.bf16.msra.mxu0 %v2187
      %2964 = vmatprep.subr.bf16.mxu0 %v2192
      %2965 = vmatpush1.bf16.msra.mxu0 %v2191
      %2966 = vmatprep.subr.bf16.mxu0 %v2196
      %2967 = vmatpush1.bf16.msra.mxu0 %v2195
      %2968 = vmatprep.subr.bf16.mxu0 %v2200
      %2969 = vmatpush1.bf16.msra.mxu0 %v2199
      %2970 = vmatprep.subr.bf16.mxu0 %v2204
      %2971 = vmatpush1.bf16.msra.mxu0 %v2203
      %2972 = vmatprep.subr.bf16.mxu0 %v2208
      %2973 = vmatpush1.bf16.msra.mxu0 %v2207
      %2974 = vmatprep.subr.bf16.mxu0 %v2212
      %2975 = vmatpush1.bf16.msra.mxu0 %v2211
      %2976 = vmatprep.subr.bf16.mxu0 %v2216
      %2977 = vmatpush1.bf16.msra.mxu0 %v2215
      %2978 = vmatprep.subr.bf16.mxu0 %v2220
      %2979 = vmatpush1.bf16.msra.mxu0 %v2219
      %2980 = vmatprep.subr.bf16.mxu0 %v2224
      %2981 = vmatpush1.bf16.msra.mxu0 %v2223
      %2982 = vmatprep.subr.bf16.mxu0 %v2228
      %2983 = vmatpush1.bf16.msra.mxu0 %v2227
      %2984 = vmatprep.subr.bf16.mxu0 %v2232
      %2985 = vmatpush1.bf16.msra.mxu0 %v2231
      %2986 = vmatprep.subr.bf16.mxu0 %v2236
      %2987 = vmatpush1.bf16.msra.mxu0 %v2235
      %2988 = vmatprep.subr.bf16.mxu0 %v2240
      %2989 = vmatpush1.bf16.msra.mxu0 %v2239
      %2990 = vmatprep.mubr.bf16.mxu0 %v995
      %2991 = vmatmul.mubr.bf16.gmra.mrb[0].mxu0 %v994
      %v2992 = vpop.f32.mrb[0].mxu0
      %v2993 = vadd.f32 %v1304, %v2992
      %v2994 = vpop.f32.mrb[0].mxu0
      %v2995 = vadd.f32 %v1308, %v2994
      %v2996 = vpop.f32.mrb[0].mxu0
      %v2997 = vpop.f32.mrb[0].mxu0
      %2998 = vdwg.mxu0
      %2999 = vmatprep.subr.bf16.mxu0 %v2244
      %3000 = vmatpush1.bf16.msra.mxu0 %v2243
      %3001 = vmatprep.subr.bf16.mxu0 %v2248
      %3002 = vmatpush1.bf16.msra.mxu0 %v2247
      %3003 = vmatprep.subr.bf16.mxu0 %v2252
      %3004 = vmatpush1.bf16.msra.mxu0 %v2251
      %3005 = vmatprep.subr.bf16.mxu0 %v2256
      %3006 = vmatpush1.bf16.msra.mxu0 %v2255
      %3007 = vmatprep.subr.bf16.mxu0 %v2260
      %3008 = vmatpush1.bf16.msra.mxu0 %v2259
      %3009 = vmatprep.subr.bf16.mxu0 %v2264
      %3010 = vmatpush1.bf16.msra.mxu0 %v2263
      %3011 = vmatprep.subr.bf16.mxu0 %v2268
      %3012 = vmatpush1.bf16.msra.mxu0 %v2267
      %3013 = vmatprep.subr.bf16.mxu0 %v2272
      %3014 = vmatpush1.bf16.msra.mxu0 %v2271
      %3015 = vmatprep.subr.bf16.mxu0 %v2276
      %3016 = vmatpush1.bf16.msra.mxu0 %v2275
      %3017 = vmatprep.subr.bf16.mxu0 %v2280
      %3018 = vmatpush1.bf16.msra.mxu0 %v2279
      %3019 = vmatprep.subr.bf16.mxu0 %v2284
      %3020 = vmatpush1.bf16.msra.mxu0 %v2283
      %3021 = vmatprep.subr.bf16.mxu0 %v2288
      %3022 = vmatpush1.bf16.msra.mxu0 %v2287
      %3023 = vmatprep.subr.bf16.mxu0 %v2292
      %3024 = vmatpush1.bf16.msra.mxu0 %v2291
      %3025 = vmatprep.subr.bf16.mxu0 %v2296
      %3026 = vmatpush1.bf16.msra.mxu0 %v2295
      %3027 = vmatprep.subr.bf16.mxu0 %v2300
      %3028 = vmatpush1.bf16.msra.mxu0 %v2299
      %3029 = vmatprep.subr.bf16.mxu0 %v2304
      %3030 = vmatpush1.bf16.msra.mxu0 %v2303
      %3031 = vmatprep.mubr.bf16.mxu0 %v997
      %3032 = vmatmul.mubr.bf16.gmra.mrb[0].mxu0 %v996
      %v3033 = vpop.f32.mrb[0].mxu0
      %v3034 = vadd.f32 %v2993, %v3033
      %v3035 = vpop.f32.mrb[0].mxu0
      %v3036 = vadd.f32 %v2995, %v3035
      %v3037 = vpop.f32.mrb[0].mxu0
      %v3038 = vpop.f32.mrb[0].mxu0
      %3039 = vdwg.mxu0
      %3040 = vmatprep.subr.bf16.mxu0 %v2308
      %3041 = vmatpush1.bf16.msra.mxu0 %v2307
      %3042 = vmatprep.subr.bf16.mxu0 %v2312
      %3043 = vmatpush1.bf16.msra.mxu0 %v2311
      %3044 = vmatprep.subr.bf16.mxu0 %v2316
      %3045 = vmatpush1.bf16.msra.mxu0 %v2315
      %3046 = vmatprep.subr.bf16.mxu0 %v2320
      %3047 = vmatpush1.bf16.msra.mxu0 %v2319
      %3048 = vmatprep.subr.bf16.mxu0 %v2324
      %3049 = vmatpush1.bf16.msra.mxu0 %v2323
      %3050 = vmatprep.subr.bf16.mxu0 %v2328
      %3051 = vmatpush1.bf16.msra.mxu0 %v2327
      %3052 = vmatprep.subr.bf16.mxu0 %v2332
      %3053 = vmatpush1.bf16.msra.mxu0 %v2331
      %3054 = vmatprep.subr.bf16.mxu0 %v2336
      %3055 = vmatpush1.bf16.msra.mxu0 %v2335
      %3056 = vmatprep.subr.bf16.mxu0 %v2340
      %3057 = vmatpush1.bf16.msra.mxu0 %v2339
      %3058 = vmatprep.subr.bf16.mxu0 %v2344
      %3059 = vmatpush1.bf16.msra.mxu0 %v2343
      %3060 = vmatprep.subr.bf16.mxu0 %v2348
      %3061 = vmatpush1.bf16.msra.mxu0 %v2347
      %3062 = vmatprep.subr.bf16.mxu0 %v2352
      %3063 = vmatpush1.bf16.msra.mxu0 %v2351
      %3064 = vmatprep.subr.bf16.mxu0 %v2356
      %3065 = vmatpush1.bf16.msra.mxu0 %v2355
      %3066 = vmatprep.subr.bf16.mxu0 %v2360
      %3067 = vmatpush1.bf16.msra.mxu0 %v2359
      %3068 = vmatprep.subr.bf16.mxu0 %v2364
      %3069 = vmatpush1.bf16.msra.mxu0 %v2363
      %3070 = vmatprep.subr.bf16.mxu0 %v2368
      %3071 = vmatpush1.bf16.msra.mxu0 %v2367
      %3072 = vmatprep.mubr.bf16.mxu0 %v999
      %3073 = vmatmul.mubr.bf16.gmra.mrb[0].mxu0 %v998
      %v3074 = vpop.f32.mrb[0].mxu0
      %v3075 = vadd.f32 %v3034, %v3074
      %v3076 = vpop.f32.mrb[0].mxu0
      %v3077 = vadd.f32 %v3036, %v3076
      %v3078 = vpop.f32.mrb[0].mxu0
      %v3079 = vpop.f32.mrb[0].mxu0
      %3080 = vdwg.mxu0
      %3081 = vmatprep.subr.bf16.mxu0 %v2372
      %3082 = vmatpush1.bf16.msra.mxu0 %v2371
      %3083 = vmatprep.subr.bf16.mxu0 %v2376
      %3084 = vmatpush1.bf16.msra.mxu0 %v2375
      %3085 = vmatprep.subr.bf16.mxu0 %v2380
      %3086 = vmatpush1.bf16.msra.mxu0 %v2379
      %3087 = vmatprep.subr.bf16.mxu0 %v2384
      %3088 = vmatpush1.bf16.msra.mxu0 %v2383
      %3089 = vmatprep.subr.bf16.mxu0 %v2388
      %3090 = vmatpush1.bf16.msra.mxu0 %v2387
      %3091 = vmatprep.subr.bf16.mxu0 %v2392
      %3092 = vmatpush1.bf16.msra.mxu0 %v2391
      %3093 = vmatprep.subr.bf16.mxu0 %v2396
      %3094 = vmatpush1.bf16.msra.mxu0 %v2395
      %3095 = vmatprep.subr.bf16.mxu0 %v2400
      %3096 = vmatpush1.bf16.msra.mxu0 %v2399
      %3097 = vmatprep.subr.bf16.mxu0 %v2404
      %3098 = vmatpush1.bf16.msra.mxu0 %v2403
      %3099 = vmatprep.subr.bf16.mxu0 %v2408
      %3100 = vmatpush1.bf16.msra.mxu0 %v2407
      %3101 = vmatprep.subr.bf16.mxu0 %v2412
      %3102 = vmatpush1.bf16.msra.mxu0 %v2411
      %3103 = vmatprep.subr.bf16.mxu0 %v2416
      %3104 = vmatpush1.bf16.msra.mxu0 %v2415
      %3105 = vmatprep.subr.bf16.mxu0 %v2420
      %3106 = vmatpush1.bf16.msra.mxu0 %v2419
      %3107 = vmatprep.subr.bf16.mxu0 %v2424
      %3108 = vmatpush1.bf16.msra.mxu0 %v2423
      %3109 = vmatprep.subr.bf16.mxu0 %v2428
      %3110 = vmatpush1.bf16.msra.mxu0 %v2427
      %3111 = vmatprep.subr.bf16.mxu0 %v2432
      %3112 = vmatpush1.bf16.msra.mxu0 %v2431
      %3113 = vmatprep.mubr.bf16.mxu0 %v1001
      %3114 = vmatmul.mubr.bf16.gmra.mrb[0].mxu0 %v1000
      %v3115 = vpop.f32.mrb[0].mxu0
      %v3116 = vadd.f32 %v3075, %v3115
      %v3117 = vpop.f32.mrb[0].mxu0
      %v3118 = vadd.f32 %v3077, %v3117
      %v3119 = vpop.f32.mrb[0].mxu0
      %v3120 = vpop.f32.mrb[0].mxu0
      %3121 = vdwg.mxu0
      %3122 = vmatprep.subr.bf16.mxu0 %v2436
      %3123 = vmatpush1.bf16.msra.mxu0 %v2435
      %3124 = vmatprep.subr.bf16.mxu0 %v2440
      %3125 = vmatpush1.bf16.msra.mxu0 %v2439
      %3126 = vmatprep.subr.bf16.mxu0 %v2444
      %3127 = vmatpush1.bf16.msra.mxu0 %v2443
      %3128 = vmatprep.subr.bf16.mxu0 %v2448
      %3129 = vmatpush1.bf16.msra.mxu0 %v2447
      %3130 = vmatprep.subr.bf16.mxu0 %v2452
      %3131 = vmatpush1.bf16.msra.mxu0 %v2451
      %3132 = vmatprep.subr.bf16.mxu0 %v2456
      %3133 = vmatpush1.bf16.msra.mxu0 %v2455
      %3134 = vmatprep.subr.bf16.mxu0 %v2460
      %3135 = vmatpush1.bf16.msra.mxu0 %v2459
      %3136 = vmatprep.subr.bf16.mxu0 %v2464
      %3137 = vmatpush1.bf16.msra.mxu0 %v2463
      %3138 = vmatprep.subr.bf16.mxu0 0
      %3139 = vmatpush1.bf16.msra.mxu0 0
      %3140 = vmatprep.subr.bf16.mxu0 0
      %3141 = vmatpush1.bf16.msra.mxu0 0
      %3142 = vmatprep.subr.bf16.mxu0 0
      %3143 = vmatpush1.bf16.msra.mxu0 0
      %3144 = vmatprep.subr.bf16.mxu0 0
      %3145 = vmatpush1.bf16.msra.mxu0 0
      %3146 = vmatprep.subr.bf16.mxu0 0
      %3147 = vmatpush1.bf16.msra.mxu0 0
      %3148 = vmatprep.subr.bf16.mxu0 0
      %3149 = vmatpush1.bf16.msra.mxu0 0
      %3150 = vmatprep.subr.bf16.mxu0 0
      %3151 = vmatpush1.bf16.msra.mxu0 0
      %3152 = vmatprep.subr.bf16.mxu0 0
      %3153 = vmatpush1.bf16.msra.mxu0 0
      %3154 = vmatprep.mubr.bf16.mxu0 0
      %3155 = vmatmul.mubr.bf16.gmra.mrb[0].mxu0 %v1002
      %v3156 = vpop.f32.mrb[0].mxu0
      %v3157 = vadd.f32 %v3116, %v3156
      %v3158 = vpop.f32.mrb[0].mxu0
      %v3159 = vadd.f32 %v3118, %v3158
      %v3160 = vpop.f32.mrb[0].mxu0
      %v3161 = vpop.f32.mrb[0].mxu0
      %3162 = vdwg.mxu0
      %v3163 = vmax.f32 %v2952, 0.0
      %v3164 = vmax.f32 %v2954, 0.0
      %v3165 = vmax.f32 %v3157, 0.0
      %v3166 = vmax.f32 %v3159, 0.0
      %v3167 = vpack.c.bf16 %v3163, %v3163
      %v3168 = vpack.c.bf16 %v3164, %v3164
      %v3169 = vpack.c.bf16 %v3165, %v3165
      %v3170 = vpack.c.bf16 %v3166, %v3166
      %v3171 = vld [vmem:[%s5] sm:$0xff]
      %v3172 = vld [vmem:[%s5 + $0x8] sm:$0xff]
      %v3173 = vld [vmem:[%s5 + $0x10] sm:$0xff]
      %v3174 = vld [vmem:[%s5 + $0x18] sm:$0xff]
      %v3175 = vld [vmem:[%s5 + $0x20] sm:$0xff]
      %v3176 = vld [vmem:[%s5 + $0x28] sm:$0xff]
      %v3177 = vld [vmem:[%s5 + $0x30] sm:$0xff]
      %v3178 = vld [vmem:[%s5 + $0x38] sm:$0xff]
      %v3179 = vld [vmem:[%s5 + $0x40] sm:$0xff]
      %v3180 = vld [vmem:[%s5 + $0x48] sm:$0xff]
      %v3181 = vld [vmem:[%s5 + $0x50] sm:$0xff]
      %v3182 = vld [vmem:[%s5 + $0x58] sm:$0xff]
      %v3183 = vld [vmem:[%s5 + $0x60] sm:$0xff]
      %v3184 = vld [vmem:[%s5 + $0x68] sm:$0xff]
      %v3185 = vld [vmem:[%s5 + $0x70] sm:$0xff]
      %v3186 = vld [vmem:[%s5 + $0x78] sm:$0xff]
      %v3187 = vld [vmem:[%s5 + $0x80] sm:$0xff]
      %v3188 = vld [vmem:[%s5 + $0x88] sm:$0xff]
      %v3189 = vld [vmem:[%s5 + $0x90] sm:$0xff]
      %v3190 = vld [vmem:[%s5 + $0x98] sm:$0xff]
      %v3191 = vld [vmem:[%s5 + $0xa0] sm:$0xff]
      %v3192 = vld [vmem:[%s5 + $0xa8] sm:$0xff]
      %v3193 = vld [vmem:[%s5 + $0xb0] sm:$0xff]
      %v3194 = vld [vmem:[%s5 + $0xb8] sm:$0xff]
      %v3195 = vld [vmem:[%s5 + $0xc0] sm:$0xff]
      %v3196 = vld [vmem:[%s5 + $0xc8] sm:$0xff]
      %v3197 = vld [vmem:[%s5 + $0xd0] sm:$0xff]
      %v3198 = vld [vmem:[%s5 + $0xd8] sm:$0xff]
      %v3199 = vld [vmem:[%s5 + $0xe0] sm:$0xff]
      %v3200 = vld [vmem:[%s5 + $0xe8] sm:$0xff]
      %v3201 = vld [vmem:[%s5 + $0xf0] sm:$0xff]
      %v3202 = vld [vmem:[%s5 + $0xf8] sm:$0xff]
      %v3203 = vld [vmem:[%s5 + $0x100] sm:$0xff]
      %v3204 = vld [vmem:[%s5 + $0x108] sm:$0xff]
      %v3205 = vld [vmem:[%s5 + $0x110] sm:$0xff]
      %v3206 = vld [vmem:[%s5 + $0x118] sm:$0xff]
      %v3207 = vld [vmem:[%s5 + $0x120] sm:$0xff]
      %v3208 = vld [vmem:[%s5 + $0x128] sm:$0xff]
      %v3209 = vld [vmem:[%s5 + $0x130] sm:$0xff]
      %v3210 = vld [vmem:[%s5 + $0x138] sm:$0xff]
      %v3211 = vld [vmem:[%s5 + $0x140] sm:$0xff]
      %v3212 = vld [vmem:[%s5 + $0x148] sm:$0xff]
      %v3213 = vld [vmem:[%s5 + $0x150] sm:$0xff]
      %v3214 = vld [vmem:[%s5 + $0x158] sm:$0xff]
      %v3215 = vld [vmem:[%s5 + $0x160] sm:$0xff]
      %v3216 = vld [vmem:[%s5 + $0x168] sm:$0xff]
      %v3217 = vld [vmem:[%s5 + $0x170] sm:$0xff]
      %v3218 = vld [vmem:[%s5 + $0x178] sm:$0xff]
      %v3219 = vld [vmem:[%s5 + $0x180] sm:$0xff]
      %v3220 = vld [vmem:[%s5 + $0x188] sm:$0xff]
      %v3221 = vld [vmem:[%s5 + $0x190] sm:$0xff]
      %v3222 = vld [vmem:[%s5 + $0x198] sm:$0xff]
      %v3223 = vld [vmem:[%s5 + $0x1a0] sm:$0xff]
      %v3224 = vld [vmem:[%s5 + $0x1a8] sm:$0xff]
      %v3225 = vld [vmem:[%s5 + $0x1b0] sm:$0xff]
      %v3226 = vld [vmem:[%s5 + $0x1b8] sm:$0xff]
      %v3227 = vld [vmem:[%s5 + $0x1c0] sm:$0xff]
      %v3228 = vld [vmem:[%s5 + $0x1c8] sm:$0xff]
      %v3229 = vld [vmem:[%s5 + $0x1d0] sm:$0xff]
      %v3230 = vld [vmem:[%s5 + $0x1d8] sm:$0xff]
      %v3231 = vld [vmem:[%s5 + $0x1e0] sm:$0xff]
      %v3232 = vld [vmem:[%s5 + $0x1e8] sm:$0xff]
      %v3233 = vld [vmem:[%s5 + $0x1f0] sm:$0xff]
      %v3234 = vld [vmem:[%s5 + $0x1f8] sm:$0xff]
      %v3235 = vld [vmem:[%s5 + $0x200] sm:$0xff]
      %v3236 = vld [vmem:[%s5 + $0x208] sm:$0xff]
      %v3237 = vld [vmem:[%s5 + $0x210] sm:$0xff]
      %v3238 = vld [vmem:[%s5 + $0x218] sm:$0xff]
      %v3239 = vld [vmem:[%s5 + $0x220] sm:$0xff]
      %v3240 = vld [vmem:[%s5 + $0x228] sm:$0xff]
      %v3241 = vld [vmem:[%s5 + $0x230] sm:$0xff]
      %v3242 = vld [vmem:[%s5 + $0x238] sm:$0xff]
      %v3243 = vld [vmem:[%s5 + $0x240] sm:$0xff]
      %v3244 = vld [vmem:[%s5 + $0x248] sm:$0xff]
      %v3245 = vld [vmem:[%s5 + $0x250] sm:$0xff]
      %v3246 = vld [vmem:[%s5 + $0x258] sm:$0xff]
      %v3247 = vld [vmem:[%s5 + $0x260] sm:$0xff]
      %v3248 = vld [vmem:[%s5 + $0x268] sm:$0xff]
      %v3249 = vld [vmem:[%s5 + $0x270] sm:$0xff]
      %v3250 = vld [vmem:[%s5 + $0x278] sm:$0xff]
      %v3251 = vld [vmem:[%s5 + $0x280] sm:$0xff]
      %v3252 = vld [vmem:[%s5 + $0x288] sm:$0xff]
      %v3253 = vld [vmem:[%s5 + $0x290] sm:$0xff]
      %v3254 = vld [vmem:[%s5 + $0x298] sm:$0xff]
      %v3255 = vld [vmem:[%s5 + $0x2a0] sm:$0xff]
      %v3256 = vld [vmem:[%s5 + $0x2a8] sm:$0xff]
      %v3257 = vld [vmem:[%s5 + $0x2b0] sm:$0xff]
      %v3258 = vld [vmem:[%s5 + $0x2b8] sm:$0xff]
      %v3259 = vld [vmem:[%s5 + $0x2c0] sm:$0xff]
      %v3260 = vld [vmem:[%s5 + $0x2c8] sm:$0xff]
      %v3261 = vld [vmem:[%s5 + $0x2d0] sm:$0xff]
      %v3262 = vld [vmem:[%s5 + $0x2d8] sm:$0xff]
      %v3263 = vld [vmem:[%s5 + $0x2e0] sm:$0xff]
      %v3264 = vld [vmem:[%s5 + $0x2e8] sm:$0xff]
      %v3265 = vld [vmem:[%s5 + $0x2f0] sm:$0xff]
      %v3266 = vld [vmem:[%s5 + $0x2f8] sm:$0xff]
      %v3267 = vld [vmem:[%s5 + $0x300] sm:$0xff]
      %v3268 = vld [vmem:[%s5 + $0x308] sm:$0xff]
      %v3269 = vld [vmem:[%s5 + $0x310] sm:$0xff]
      %v3270 = vld [vmem:[%s5 + $0x318] sm:$0xff]
      %v3271 = vld [vmem:[%s5 + $0x320] sm:$0xff]
      %v3272 = vld [vmem:[%s5 + $0x328] sm:$0xff]
      %v3273 = vld [vmem:[%s5 + $0x330] sm:$0xff]
      %v3274 = vld [vmem:[%s5 + $0x338] sm:$0xff]
      %v3275 = vld [vmem:[%s5 + $0x340] sm:$0xff]
      %v3276 = vld [vmem:[%s5 + $0x348] sm:$0xff]
      %v3277 = vld [vmem:[%s5 + $0x350] sm:$0xff]
      %v3278 = vld [vmem:[%s5 + $0x358] sm:$0xff]
      %v3279 = vld [vmem:[%s5 + $0x360] sm:$0xff]
      %v3280 = vld [vmem:[%s5 + $0x368] sm:$0xff]
      %v3281 = vld [vmem:[%s5 + $0x370] sm:$0xff]
      %v3282 = vld [vmem:[%s5 + $0x378] sm:$0xff]
      %v3283 = vld [vmem:[%s5 + $0x380] sm:$0xff]
      %v3284 = vld [vmem:[%s5 + $0x388] sm:$0xff]
      %v3285 = vld [vmem:[%s5 + $0x390] sm:$0xff]
      %v3286 = vld [vmem:[%s5 + $0x398] sm:$0xff]
      %v3287 = vld [vmem:[%s5 + $0x3a0] sm:$0xff]
      %v3288 = vld [vmem:[%s5 + $0x3a8] sm:$0xff]
      %v3289 = vld [vmem:[%s5 + $0x3b0] sm:$0xff]
      %v3290 = vld [vmem:[%s5 + $0x3b8] sm:$0xff]
      %v3291 = vld [vmem:[%s5 + $0x3c0] sm:$0xff]
      %v3292 = vld [vmem:[%s5 + $0x3c8] sm:$0xff]
      %v3293 = vld [vmem:[%s5 + $0x3d0] sm:$0xff]
      %v3294 = vld [vmem:[%s5 + $0x3d8] sm:$0xff]
      %v3295 = vld [vmem:[%s5 + $0x3e0] sm:$0xff]
      %v3296 = vld [vmem:[%s5 + $0x3e8] sm:$0xff]
      %v3297 = vld [vmem:[%s5 + $0x3f0] sm:$0xff]
      %v3298 = vld [vmem:[%s5 + $0x3f8] sm:$0xff]
      %v3299 = vld [vmem:[%s6] sm:$0xf]
      %v3301 = vlaneseq
      %v3302 = vshrl.u32 %v3301, 7
      %v3303 = vsub.s32 0, %v3302
      %v3304 = vrot.slane %v3299, %v3303
      %v3305 = vlaneseq
      %v3306 = vshrl.u32 %v3305, 7
      %v3307 = vsub.s32 1, %v3306
      %v3308 = vrot.slane %v3299, %v3307
      %v3309 = vlaneseq
      %v3310 = vshrl.u32 %v3309, 7
      %v3311 = vsub.s32 2, %v3310
      %v3312 = vrot.slane %v3299, %v3311
      %v3313 = vlaneseq
      %v3314 = vshrl.u32 %v3313, 7
      %v3315 = vsub.s32 3, %v3314
      %v3316 = vrot.slane %v3299, %v3315
      %v3449 = vunpack.c.l.b16 %v3171
      %v3450 = vunpack.c.h.b16 %v3171
      %v3451 = vunpack.c.l.b16 %v3172
      %v3452 = vunpack.c.h.b16 %v3172
      %v3453 = vunpack.c.l.b16 %v3173
      %v3454 = vunpack.c.h.b16 %v3173
      %v3455 = vunpack.c.l.b16 %v3174
      %v3456 = vunpack.c.h.b16 %v3174
      %v3457 = vunpack.c.l.b16 %v3175
      %v3458 = vunpack.c.h.b16 %v3175
      %v3459 = vunpack.c.l.b16 %v3176
      %v3460 = vunpack.c.h.b16 %v3176
      %v3461 = vunpack.c.l.b16 %v3177
      %v3462 = vunpack.c.h.b16 %v3177
      %v3463 = vunpack.c.l.b16 %v3178
      %v3464 = vunpack.c.h.b16 %v3178
      %v3465 = vunpack.c.l.b16 %v3179
      %v3466 = vunpack.c.h.b16 %v3179
      %v3467 = vunpack.c.l.b16 %v3180
      %v3468 = vunpack.c.h.b16 %v3180
      %v3469 = vunpack.c.l.b16 %v3181
      %v3470 = vunpack.c.h.b16 %v3181
      %v3471 = vunpack.c.l.b16 %v3182
      %v3472 = vunpack.c.h.b16 %v3182
      %v3473 = vunpack.c.l.b16 %v3183
      %v3474 = vunpack.c.h.b16 %v3183
      %v3475 = vunpack.c.l.b16 %v3184
      %v3476 = vunpack.c.h.b16 %v3184
      %v3477 = vunpack.c.l.b16 %v3185
      %v3478 = vunpack.c.h.b16 %v3185
      %v3479 = vunpack.c.l.b16 %v3186
      %v3480 = vunpack.c.h.b16 %v3186
      %v3481 = vunpack.c.l.b16 %v3187
      %v3482 = vunpack.c.h.b16 %v3187
      %v3483 = vunpack.c.l.b16 %v3188
      %v3484 = vunpack.c.h.b16 %v3188
      %v3485 = vunpack.c.l.b16 %v3189
      %v3486 = vunpack.c.h.b16 %v3189
      %v3487 = vunpack.c.l.b16 %v3190
      %v3488 = vunpack.c.h.b16 %v3190
      %v3489 = vunpack.c.l.b16 %v3191
      %v3490 = vunpack.c.h.b16 %v3191
      %v3491 = vunpack.c.l.b16 %v3192
      %v3492 = vunpack.c.h.b16 %v3192
      %v3493 = vunpack.c.l.b16 %v3193
      %v3494 = vunpack.c.h.b16 %v3193
      %v3495 = vunpack.c.l.b16 %v3194
      %v3496 = vunpack.c.h.b16 %v3194
      %v3497 = vunpack.c.l.b16 %v3195
      %v3498 = vunpack.c.h.b16 %v3195
      %v3499 = vunpack.c.l.b16 %v3196
      %v3500 = vunpack.c.h.b16 %v3196
      %v3501 = vunpack.c.l.b16 %v3197
      %v3502 = vunpack.c.h.b16 %v3197
      %v3503 = vunpack.c.l.b16 %v3198
      %v3504 = vunpack.c.h.b16 %v3198
      %v3505 = vunpack.c.l.b16 %v3199
      %v3506 = vunpack.c.h.b16 %v3199
      %v3507 = vunpack.c.l.b16 %v3200
      %v3508 = vunpack.c.h.b16 %v3200
      %v3509 = vunpack.c.l.b16 %v3201
      %v3510 = vunpack.c.h.b16 %v3201
      %v3511 = vunpack.c.l.b16 %v3202
      %v3512 = vunpack.c.h.b16 %v3202
      %v3513 = vunpack.c.l.b16 %v3203
      %v3514 = vunpack.c.h.b16 %v3203
      %v3515 = vunpack.c.l.b16 %v3204
      %v3516 = vunpack.c.h.b16 %v3204
      %v3517 = vunpack.c.l.b16 %v3205
      %v3518 = vunpack.c.h.b16 %v3205
      %v3519 = vunpack.c.l.b16 %v3206
      %v3520 = vunpack.c.h.b16 %v3206
      %v3521 = vunpack.c.l.b16 %v3207
      %v3522 = vunpack.c.h.b16 %v3207
      %v3523 = vunpack.c.l.b16 %v3208
      %v3524 = vunpack.c.h.b16 %v3208
      %v3525 = vunpack.c.l.b16 %v3209
      %v3526 = vunpack.c.h.b16 %v3209
      %v3527 = vunpack.c.l.b16 %v3210
      %v3528 = vunpack.c.h.b16 %v3210
      %v3529 = vunpack.c.l.b16 %v3211
      %v3530 = vunpack.c.h.b16 %v3211
      %v3531 = vunpack.c.l.b16 %v3212
      %v3532 = vunpack.c.h.b16 %v3212
      %v3533 = vunpack.c.l.b16 %v3213
      %v3534 = vunpack.c.h.b16 %v3213
      %v3535 = vunpack.c.l.b16 %v3214
      %v3536 = vunpack.c.h.b16 %v3214
      %v3537 = vunpack.c.l.b16 %v3215
      %v3538 = vunpack.c.h.b16 %v3215
      %v3539 = vunpack.c.l.b16 %v3216
      %v3540 = vunpack.c.h.b16 %v3216
      %v3541 = vunpack.c.l.b16 %v3217
      %v3542 = vunpack.c.h.b16 %v3217
      %v3543 = vunpack.c.l.b16 %v3218
      %v3544 = vunpack.c.h.b16 %v3218
      %v3545 = vunpack.c.l.b16 %v3219
      %v3546 = vunpack.c.h.b16 %v3219
      %v3547 = vunpack.c.l.b16 %v3220
      %v3548 = vunpack.c.h.b16 %v3220
      %v3549 = vunpack.c.l.b16 %v3221
      %v3550 = vunpack.c.h.b16 %v3221
      %v3551 = vunpack.c.l.b16 %v3222
      %v3552 = vunpack.c.h.b16 %v3222
      %v3553 = vunpack.c.l.b16 %v3223
      %v3554 = vunpack.c.h.b16 %v3223
      %v3555 = vunpack.c.l.b16 %v3224
      %v3556 = vunpack.c.h.b16 %v3224
      %v3557 = vunpack.c.l.b16 %v3225
      %v3558 = vunpack.c.h.b16 %v3225
      %v3559 = vunpack.c.l.b16 %v3226
      %v3560 = vunpack.c.h.b16 %v3226
      %v3561 = vunpack.c.l.b16 %v3227
      %v3562 = vunpack.c.h.b16 %v3227
      %v3563 = vunpack.c.l.b16 %v3228
      %v3564 = vunpack.c.h.b16 %v3228
      %v3565 = vunpack.c.l.b16 %v3229
      %v3566 = vunpack.c.h.b16 %v3229
      %v3567 = vunpack.c.l.b16 %v3230
      %v3568 = vunpack.c.h.b16 %v3230
      %v3569 = vunpack.c.l.b16 %v3231
      %v3570 = vunpack.c.h.b16 %v3231
      %v3571 = vunpack.c.l.b16 %v3232
      %v3572 = vunpack.c.h.b16 %v3232
      %v3573 = vunpack.c.l.b16 %v3233
      %v3574 = vunpack.c.h.b16 %v3233
      %v3575 = vunpack.c.l.b16 %v3234
      %v3576 = vunpack.c.h.b16 %v3234
      %v3577 = vunpack.c.l.b16 %v3235
      %v3578 = vunpack.c.h.b16 %v3235
      %v3579 = vunpack.c.l.b16 %v3236
      %v3580 = vunpack.c.h.b16 %v3236
      %v3581 = vunpack.c.l.b16 %v3237
      %v3582 = vunpack.c.h.b16 %v3237
      %v3583 = vunpack.c.l.b16 %v3238
      %v3584 = vunpack.c.h.b16 %v3238
      %v3585 = vunpack.c.l.b16 %v3239
      %v3586 = vunpack.c.h.b16 %v3239
      %v3587 = vunpack.c.l.b16 %v3240
      %v3588 = vunpack.c.h.b16 %v3240
      %v3589 = vunpack.c.l.b16 %v3241
      %v3590 = vunpack.c.h.b16 %v3241
      %v3591 = vunpack.c.l.b16 %v3242
      %v3592 = vunpack.c.h.b16 %v3242
      %v3593 = vunpack.c.l.b16 %v3243
      %v3594 = vunpack.c.h.b16 %v3243
      %v3595 = vunpack.c.l.b16 %v3244
      %v3596 = vunpack.c.h.b16 %v3244
      %v3597 = vunpack.c.l.b16 %v3245
      %v3598 = vunpack.c.h.b16 %v3245
      %v3599 = vunpack.c.l.b16 %v3246
      %v3600 = vunpack.c.h.b16 %v3246
      %v3601 = vunpack.c.l.b16 %v3247
      %v3602 = vunpack.c.h.b16 %v3247
      %v3603 = vunpack.c.l.b16 %v3248
      %v3604 = vunpack.c.h.b16 %v3248
      %v3605 = vunpack.c.l.b16 %v3249
      %v3606 = vunpack.c.h.b16 %v3249
      %v3607 = vunpack.c.l.b16 %v3250
      %v3608 = vunpack.c.h.b16 %v3250
      %v3609 = vunpack.c.l.b16 %v3251
      %v3610 = vunpack.c.h.b16 %v3251
      %v3611 = vunpack.c.l.b16 %v3252
      %v3612 = vunpack.c.h.b16 %v3252
      %v3613 = vunpack.c.l.b16 %v3253
      %v3614 = vunpack.c.h.b16 %v3253
      %v3615 = vunpack.c.l.b16 %v3254
      %v3616 = vunpack.c.h.b16 %v3254
      %v3617 = vunpack.c.l.b16 %v3255
      %v3618 = vunpack.c.h.b16 %v3255
      %v3619 = vunpack.c.l.b16 %v3256
      %v3620 = vunpack.c.h.b16 %v3256
      %v3621 = vunpack.c.l.b16 %v3257
      %v3622 = vunpack.c.h.b16 %v3257
      %v3623 = vunpack.c.l.b16 %v3258
      %v3624 = vunpack.c.h.b16 %v3258
      %v3625 = vunpack.c.l.b16 %v3259
      %v3626 = vunpack.c.h.b16 %v3259
      %v3627 = vunpack.c.l.b16 %v3260
      %v3628 = vunpack.c.h.b16 %v3260
      %v3629 = vunpack.c.l.b16 %v3261
      %v3630 = vunpack.c.h.b16 %v3261
      %v3631 = vunpack.c.l.b16 %v3262
      %v3632 = vunpack.c.h.b16 %v3262
      %v3633 = vunpack.c.l.b16 %v3263
      %v3634 = vunpack.c.h.b16 %v3263
      %v3635 = vunpack.c.l.b16 %v3264
      %v3636 = vunpack.c.h.b16 %v3264
      %v3637 = vunpack.c.l.b16 %v3265
      %v3638 = vunpack.c.h.b16 %v3265
      %v3639 = vunpack.c.l.b16 %v3266
      %v3640 = vunpack.c.h.b16 %v3266
      %v3641 = vunpack.c.l.b16 %v3267
      %v3642 = vunpack.c.h.b16 %v3267
      %v3643 = vunpack.c.l.b16 %v3268
      %v3644 = vunpack.c.h.b16 %v3268
      %v3645 = vunpack.c.l.b16 %v3269
      %v3646 = vunpack.c.h.b16 %v3269
      %v3647 = vunpack.c.l.b16 %v3270
      %v3648 = vunpack.c.h.b16 %v3270
      %v3649 = vunpack.c.l.b16 %v3271
      %v3650 = vunpack.c.h.b16 %v3271
      %v3651 = vunpack.c.l.b16 %v3272
      %v3652 = vunpack.c.h.b16 %v3272
      %v3653 = vunpack.c.l.b16 %v3273
      %v3654 = vunpack.c.h.b16 %v3273
      %v3655 = vunpack.c.l.b16 %v3274
      %v3656 = vunpack.c.h.b16 %v3274
      %v3657 = vunpack.c.l.b16 %v3275
      %v3658 = vunpack.c.h.b16 %v3275
      %v3659 = vunpack.c.l.b16 %v3276
      %v3660 = vunpack.c.h.b16 %v3276
      %v3661 = vunpack.c.l.b16 %v3277
      %v3662 = vunpack.c.h.b16 %v3277
      %v3663 = vunpack.c.l.b16 %v3278
      %v3664 = vunpack.c.h.b16 %v3278
      %v3665 = vunpack.c.l.b16 %v3279
      %v3666 = vunpack.c.h.b16 %v3279
      %v3667 = vunpack.c.l.b16 %v3280
      %v3668 = vunpack.c.h.b16 %v3280
      %v3669 = vunpack.c.l.b16 %v3281
      %v3670 = vunpack.c.h.b16 %v3281
      %v3671 = vunpack.c.l.b16 %v3282
      %v3672 = vunpack.c.h.b16 %v3282
      %v3673 = vunpack.c.l.b16 %v3283
      %v3674 = vunpack.c.h.b16 %v3283
      %v3675 = vunpack.c.l.b16 %v3284
      %v3676 = vunpack.c.h.b16 %v3284
      %v3677 = vunpack.c.l.b16 %v3285
      %v3678 = vunpack.c.h.b16 %v3285
      %v3679 = vunpack.c.l.b16 %v3286
      %v3680 = vunpack.c.h.b16 %v3286
      %v3681 = vunpack.c.l.b16 %v3287
      %v3682 = vunpack.c.h.b16 %v3287
      %v3683 = vunpack.c.l.b16 %v3288
      %v3684 = vunpack.c.h.b16 %v3288
      %v3685 = vunpack.c.l.b16 %v3289
      %v3686 = vunpack.c.h.b16 %v3289
      %v3687 = vunpack.c.l.b16 %v3290
      %v3688 = vunpack.c.h.b16 %v3290
      %v3689 = vunpack.c.l.b16 %v3291
      %v3690 = vunpack.c.h.b16 %v3291
      %v3691 = vunpack.c.l.b16 %v3292
      %v3692 = vunpack.c.h.b16 %v3292
      %v3693 = vunpack.c.l.b16 %v3293
      %v3694 = vunpack.c.h.b16 %v3293
      %v3695 = vunpack.c.l.b16 %v3294
      %v3696 = vunpack.c.h.b16 %v3294
      %v3697 = vunpack.c.l.b16 %v3295
      %v3698 = vunpack.c.h.b16 %v3295
      %v3699 = vunpack.c.l.b16 %v3296
      %v3700 = vunpack.c.h.b16 %v3296
      %v3701 = vunpack.c.l.b16 %v3297
      %v3702 = vunpack.c.h.b16 %v3297
      %v3703 = vunpack.c.l.b16 %v3298
      %v3704 = vunpack.c.h.b16 %v3298
      %v3705 = vpack.c.b16 %v3453, %v3449
      %v3706 = vpack.c.b16 %v3454, %v3450
      %v3707 = vpack.c.b16 %v3455, %v3451
      %v3708 = vpack.c.b16 %v3456, %v3452
      %v3709 = vpack.c.b16 %v3461, %v3457
      %v3710 = vpack.c.b16 %v3462, %v3458
      %v3711 = vpack.c.b16 %v3463, %v3459
      %v3712 = vpack.c.b16 %v3464, %v3460
      %v3713 = vpack.c.b16 %v3469, %v3465
      %v3714 = vpack.c.b16 %v3470, %v3466
      %v3715 = vpack.c.b16 %v3471, %v3467
      %v3716 = vpack.c.b16 %v3472, %v3468
      %v3717 = vpack.c.b16 %v3477, %v3473
      %v3718 = vpack.c.b16 %v3478, %v3474
      %v3719 = vpack.c.b16 %v3479, %v3475
      %v3720 = vpack.c.b16 %v3480, %v3476
      %v3721 = vpack.c.b16 %v3485, %v3481
      %v3722 = vpack.c.b16 %v3486, %v3482
      %v3723 = vpack.c.b16 %v3487, %v3483
      %v3724 = vpack.c.b16 %v3488, %v3484
      %v3725 = vpack.c.b16 %v3493, %v3489
      %v3726 = vpack.c.b16 %v3494, %v3490
      %v3727 = vpack.c.b16 %v3495, %v3491
      %v3728 = vpack.c.b16 %v3496, %v3492
      %v3729 = vpack.c.b16 %v3501, %v3497
      %v3730 = vpack.c.b16 %v3502, %v3498
      %v3731 = vpack.c.b16 %v3503, %v3499
      %v3732 = vpack.c.b16 %v3504, %v3500
      %v3733 = vpack.c.b16 %v3509, %v3505
      %v3734 = vpack.c.b16 %v3510, %v3506
      %v3735 = vpack.c.b16 %v3511, %v3507
      %v3736 = vpack.c.b16 %v3512, %v3508
      %v3737 = vpack.c.b16 %v3517, %v3513
      %v3738 = vpack.c.b16 %v3518, %v3514
      %v3739 = vpack.c.b16 %v3519, %v3515
      %v3740 = vpack.c.b16 %v3520, %v3516
      %v3741 = vpack.c.b16 %v3525, %v3521
      %v3742 = vpack.c.b16 %v3526, %v3522
      %v3743 = vpack.c.b16 %v3527, %v3523
      %v3744 = vpack.c.b16 %v3528, %v3524
      %v3745 = vpack.c.b16 %v3533, %v3529
      %v3746 = vpack.c.b16 %v3534, %v3530
      %v3747 = vpack.c.b16 %v3535, %v3531
      %v3748 = vpack.c.b16 %v3536, %v3532
      %v3749 = vpack.c.b16 %v3541, %v3537
      %v3750 = vpack.c.b16 %v3542, %v3538
      %v3751 = vpack.c.b16 %v3543, %v3539
      %v3752 = vpack.c.b16 %v3544, %v3540
      %v3753 = vpack.c.b16 %v3549, %v3545
      %v3754 = vpack.c.b16 %v3550, %v3546
      %v3755 = vpack.c.b16 %v3551, %v3547
      %v3756 = vpack.c.b16 %v3552, %v3548
      %v3757 = vpack.c.b16 %v3557, %v3553
      %v3758 = vpack.c.b16 %v3558, %v3554
      %v3759 = vpack.c.b16 %v3559, %v3555
      %v3760 = vpack.c.b16 %v3560, %v3556
      %v3761 = vpack.c.b16 %v3565, %v3561
      %v3762 = vpack.c.b16 %v3566, %v3562
      %v3763 = vpack.c.b16 %v3567, %v3563
      %v3764 = vpack.c.b16 %v3568, %v3564
      %v3765 = vpack.c.b16 %v3573, %v3569
      %v3766 = vpack.c.b16 %v3574, %v3570
      %v3767 = vpack.c.b16 %v3575, %v3571
      %v3768 = vpack.c.b16 %v3576, %v3572
      %v3769 = vpack.c.b16 %v3581, %v3577
      %v3770 = vpack.c.b16 %v3582, %v3578
      %v3771 = vpack.c.b16 %v3583, %v3579
      %v3772 = vpack.c.b16 %v3584, %v3580
      %v3773 = vpack.c.b16 %v3589, %v3585
      %v3774 = vpack.c.b16 %v3590, %v3586
      %v3775 = vpack.c.b16 %v3591, %v3587
      %v3776 = vpack.c.b16 %v3592, %v3588
      %v3777 = vpack.c.b16 %v3597, %v3593
      %v3778 = vpack.c.b16 %v3598, %v3594
      %v3779 = vpack.c.b16 %v3599, %v3595
      %v3780 = vpack.c.b16 %v3600, %v3596
      %v3781 = vpack.c.b16 %v3605, %v3601
      %v3782 = vpack.c.b16 %v3606, %v3602
      %v3783 = vpack.c.b16 %v3607, %v3603
      %v3784 = vpack.c.b16 %v3608, %v3604
      %v3785 = vpack.c.b16 %v3613, %v3609
      %v3786 = vpack.c.b16 %v3614, %v3610
      %v3787 = vpack.c.b16 %v3615, %v3611
      %v3788 = vpack.c.b16 %v3616, %v3612
      %v3789 = vpack.c.b16 %v3621, %v3617
      %v3790 = vpack.c.b16 %v3622, %v3618
      %v3791 = vpack.c.b16 %v3623, %v3619
      %v3792 = vpack.c.b16 %v3624, %v3620
      %v3793 = vpack.c.b16 %v3629, %v3625
      %v3794 = vpack.c.b16 %v3630, %v3626
      %v3795 = vpack.c.b16 %v3631, %v3627
      %v3796 = vpack.c.b16 %v3632, %v3628
      %v3797 = vpack.c.b16 %v3637, %v3633
      %v3798 = vpack.c.b16 %v3638, %v3634
      %v3799 = vpack.c.b16 %v3639, %v3635
      %v3800 = vpack.c.b16 %v3640, %v3636
      %v3801 = vpack.c.b16 %v3645, %v3641
      %v3802 = vpack.c.b16 %v3646, %v3642
      %v3803 = vpack.c.b16 %v3647, %v3643
      %v3804 = vpack.c.b16 %v3648, %v3644
      %v3805 = vpack.c.b16 %v3653, %v3649
      %v3806 = vpack.c.b16 %v3654, %v3650
      %v3807 = vpack.c.b16 %v3655, %v3651
      %v3808 = vpack.c.b16 %v3656, %v3652
      %v3809 = vpack.c.b16 %v3661, %v3657
      %v3810 = vpack.c.b16 %v3662, %v3658
      %v3811 = vpack.c.b16 %v3663, %v3659
      %v3812 = vpack.c.b16 %v3664, %v3660
      %v3813 = vpack.c.b16 %v3669, %v3665
      %v3814 = vpack.c.b16 %v3670, %v3666
      %v3815 = vpack.c.b16 %v3671, %v3667
      %v3816 = vpack.c.b16 %v3672, %v3668
      %v3817 = vpack.c.b16 %v3677, %v3673
      %v3818 = vpack.c.b16 %v3678, %v3674
      %v3819 = vpack.c.b16 %v3679, %v3675
      %v3820 = vpack.c.b16 %v3680, %v3676
      %v3821 = vpack.c.b16 %v3685, %v3681
      %v3822 = vpack.c.b16 %v3686, %v3682
      %v3823 = vpack.c.b16 %v3687, %v3683
      %v3824 = vpack.c.b16 %v3688, %v3684
      %v3825 = vpack.c.b16 %v3693, %v3689
      %v3826 = vpack.c.b16 %v3694, %v3690
      %v3827 = vpack.c.b16 %v3695, %v3691
      %v3828 = vpack.c.b16 %v3696, %v3692
      %v3829 = vpack.c.b16 %v3701, %v3697
      %v3830 = vpack.c.b16 %v3702, %v3698
      %v3831 = vpack.c.b16 %v3703, %v3699
      %v3832 = vpack.c.b16 %v3704, %v3700
      %3961 = vmatprep.subr.bf16.mxu0 %v3706
      %3962 = vmatpush1.bf16.msra.mxu0 %v3705
      %3963 = vmatprep.subr.bf16.mxu0 %v3710
      %3964 = vmatpush1.bf16.msra.mxu0 %v3709
      %3965 = vmatprep.subr.bf16.mxu0 %v3714
      %3966 = vmatpush1.bf16.msra.mxu0 %v3713
      %3967 = vmatprep.subr.bf16.mxu0 %v3718
      %3968 = vmatpush1.bf16.msra.mxu0 %v3717
      %3969 = vmatprep.subr.bf16.mxu0 %v3722
      %3970 = vmatpush1.bf16.msra.mxu0 %v3721
      %3971 = vmatprep.subr.bf16.mxu0 %v3726
      %3972 = vmatpush1.bf16.msra.mxu0 %v3725
      %3973 = vmatprep.subr.bf16.mxu0 %v3730
      %3974 = vmatpush1.bf16.msra.mxu0 %v3729
      %3975 = vmatprep.subr.bf16.mxu0 %v3734
      %3976 = vmatpush1.bf16.msra.mxu0 %v3733
      %3977 = vmatprep.subr.bf16.mxu0 %v3738
      %3978 = vmatpush1.bf16.msra.mxu0 %v3737
      %3979 = vmatprep.subr.bf16.mxu0 %v3742
      %3980 = vmatpush1.bf16.msra.mxu0 %v3741
      %3981 = vmatprep.subr.bf16.mxu0 %v3746
      %3982 = vmatpush1.bf16.msra.mxu0 %v3745
      %3983 = vmatprep.subr.bf16.mxu0 %v3750
      %3984 = vmatpush1.bf16.msra.mxu0 %v3749
      %3985 = vmatprep.subr.bf16.mxu0 %v3754
      %3986 = vmatpush1.bf16.msra.mxu0 %v3753
      %3987 = vmatprep.subr.bf16.mxu0 %v3758
      %3988 = vmatpush1.bf16.msra.mxu0 %v3757
      %3989 = vmatprep.subr.bf16.mxu0 %v3762
      %3990 = vmatpush1.bf16.msra.mxu0 %v3761
      %3991 = vmatprep.subr.bf16.mxu0 %v3766
      %3992 = vmatpush1.bf16.msra.mxu0 %v3765
      %3993 = vmatprep.mubr.bf16.mxu0 %v3168
      %3994 = vmatmul.mubr.bf16.gmra.mrb[0].mxu0 %v3167
      %v3995 = vpop.f32.mrb[0].mxu0
      %v3996 = vadd.f32 %v3304, %v3995
      %v3997 = vpop.f32.mrb[0].mxu0
      %v3998 = vadd.f32 %v3308, %v3997
      %v3999 = vpop.f32.mrb[0].mxu0
      %v4000 = vpop.f32.mrb[0].mxu0
      %4001 = vdwg.mxu0
      %4002 = vmatprep.subr.bf16.mxu0 %v3770
      %4003 = vmatpush1.bf16.msra.mxu0 %v3769
      %4004 = vmatprep.subr.bf16.mxu0 %v3774
      %4005 = vmatpush1.bf16.msra.mxu0 %v3773
      %4006 = vmatprep.subr.bf16.mxu0 %v3778
      %4007 = vmatpush1.bf16.msra.mxu0 %v3777
      %4008 = vmatprep.subr.bf16.mxu0 %v3782
      %4009 = vmatpush1.bf16.msra.mxu0 %v3781
      %4010 = vmatprep.subr.bf16.mxu0 %v3786
      %4011 = vmatpush1.bf16.msra.mxu0 %v3785
      %4012 = vmatprep.subr.bf16.mxu0 %v3790
      %4013 = vmatpush1.bf16.msra.mxu0 %v3789
      %4014 = vmatprep.subr.bf16.mxu0 %v3794
      %4015 = vmatpush1.bf16.msra.mxu0 %v3793
      %4016 = vmatprep.subr.bf16.mxu0 %v3798
      %4017 = vmatpush1.bf16.msra.mxu0 %v3797
      %4018 = vmatprep.subr.bf16.mxu0 %v3802
      %4019 = vmatpush1.bf16.msra.mxu0 %v3801
      %4020 = vmatprep.subr.bf16.mxu0 %v3806
      %4021 = vmatpush1.bf16.msra.mxu0 %v3805
      %4022 = vmatprep.subr.bf16.mxu0 %v3810
      %4023 = vmatpush1.bf16.msra.mxu0 %v3809
      %4024 = vmatprep.subr.bf16.mxu0 %v3814
      %4025 = vmatpush1.bf16.msra.mxu0 %v3813
      %4026 = vmatprep.subr.bf16.mxu0 %v3818
      %4027 = vmatpush1.bf16.msra.mxu0 %v3817
      %4028 = vmatprep.subr.bf16.mxu0 %v3822
      %4029 = vmatpush1.bf16.msra.mxu0 %v3821
      %4030 = vmatprep.subr.bf16.mxu0 %v3826
      %4031 = vmatpush1.bf16.msra.mxu0 %v3825
      %4032 = vmatprep.subr.bf16.mxu0 %v3830
      %4033 = vmatpush1.bf16.msra.mxu0 %v3829
      %4034 = vmatprep.mubr.bf16.mxu0 %v3170
      %4035 = vmatmul.mubr.bf16.gmra.mrb[0].mxu0 %v3169
      %v4036 = vpop.f32.mrb[0].mxu0
      %v4037 = vadd.f32 %v3996, %v4036
      %v4038 = vpop.f32.mrb[0].mxu0
      %v4039 = vadd.f32 %v3998, %v4038
      %v4040 = vpop.f32.mrb[0].mxu0
      %v4041 = vpop.f32.mrb[0].mxu0
      %4042 = vdwg.mxu0
      %4043 = vmatprep.subr.bf16.mxu0 %v3708
      %4044 = vmatpush1.bf16.msra.mxu0 %v3707
      %4045 = vmatprep.subr.bf16.mxu0 %v3712
      %4046 = vmatpush1.bf16.msra.mxu0 %v3711
      %4047 = vmatprep.subr.bf16.mxu0 %v3716
      %4048 = vmatpush1.bf16.msra.mxu0 %v3715
      %4049 = vmatprep.subr.bf16.mxu0 %v3720
      %4050 = vmatpush1.bf16.msra.mxu0 %v3719
      %4051 = vmatprep.subr.bf16.mxu0 %v3724
      %4052 = vmatpush1.bf16.msra.mxu0 %v3723
      %4053 = vmatprep.subr.bf16.mxu0 %v3728
      %4054 = vmatpush1.bf16.msra.mxu0 %v3727
      %4055 = vmatprep.subr.bf16.mxu0 %v3732
      %4056 = vmatpush1.bf16.msra.mxu0 %v3731
      %4057 = vmatprep.subr.bf16.mxu0 %v3736
      %4058 = vmatpush1.bf16.msra.mxu0 %v3735
      %4059 = vmatprep.subr.bf16.mxu0 %v3740
      %4060 = vmatpush1.bf16.msra.mxu0 %v3739
      %4061 = vmatprep.subr.bf16.mxu0 %v3744
      %4062 = vmatpush1.bf16.msra.mxu0 %v3743
      %4063 = vmatprep.subr.bf16.mxu0 %v3748
      %4064 = vmatpush1.bf16.msra.mxu0 %v3747
      %4065 = vmatprep.subr.bf16.mxu0 %v3752
      %4066 = vmatpush1.bf16.msra.mxu0 %v3751
      %4067 = vmatprep.subr.bf16.mxu0 %v3756
      %4068 = vmatpush1.bf16.msra.mxu0 %v3755
      %4069 = vmatprep.subr.bf16.mxu0 %v3760
      %4070 = vmatpush1.bf16.msra.mxu0 %v3759
      %4071 = vmatprep.subr.bf16.mxu0 %v3764
      %4072 = vmatpush1.bf16.msra.mxu0 %v3763
      %4073 = vmatprep.subr.bf16.mxu0 %v3768
      %4074 = vmatpush1.bf16.msra.mxu0 %v3767
      %4075 = vmatprep.mubr.bf16.mxu0 %v3168
      %4076 = vmatmul.mubr.bf16.gmra.mrb[0].mxu0 %v3167
      %v4077 = vpop.f32.mrb[0].mxu0
      %v4078 = vadd.f32 %v3312, %v4077
      %v4079 = vpop.f32.mrb[0].mxu0
      %v4080 = vadd.f32 %v3316, %v4079
      %v4081 = vpop.f32.mrb[0].mxu0
      %v4082 = vpop.f32.mrb[0].mxu0
      %4083 = vdwg.mxu0
      %4084 = vmatprep.subr.bf16.mxu0 %v3772
      %4085 = vmatpush1.bf16.msra.mxu0 %v3771
      %4086 = vmatprep.subr.bf16.mxu0 %v3776
      %4087 = vmatpush1.bf16.msra.mxu0 %v3775
      %4088 = vmatprep.subr.bf16.mxu0 %v3780
      %4089 = vmatpush1.bf16.msra.mxu0 %v3779
      %4090 = vmatprep.subr.bf16.mxu0 %v3784
      %4091 = vmatpush1.bf16.msra.mxu0 %v3783
      %4092 = vmatprep.subr.bf16.mxu0 %v3788
      %4093 = vmatpush1.bf16.msra.mxu0 %v3787
      %4094 = vmatprep.subr.bf16.mxu0 %v3792
      %4095 = vmatpush1.bf16.msra.mxu0 %v3791
      %4096 = vmatprep.subr.bf16.mxu0 %v3796
      %4097 = vmatpush1.bf16.msra.mxu0 %v3795
      %4098 = vmatprep.subr.bf16.mxu0 %v3800
      %4099 = vmatpush1.bf16.msra.mxu0 %v3799
      %4100 = vmatprep.subr.bf16.mxu0 %v3804
      %4101 = vmatpush1.bf16.msra.mxu0 %v3803
      %4102 = vmatprep.subr.bf16.mxu0 %v3808
      %4103 = vmatpush1.bf16.msra.mxu0 %v3807
      %4104 = vmatprep.subr.bf16.mxu0 %v3812
      %4105 = vmatpush1.bf16.msra.mxu0 %v3811
      %4106 = vmatprep.subr.bf16.mxu0 %v3816
      %4107 = vmatpush1.bf16.msra.mxu0 %v3815
      %4108 = vmatprep.subr.bf16.mxu0 %v3820
      %4109 = vmatpush1.bf16.msra.mxu0 %v3819
      %4110 = vmatprep.subr.bf16.mxu0 %v3824
      %4111 = vmatpush1.bf16.msra.mxu0 %v3823
      %4112 = vmatprep.subr.bf16.mxu0 %v3828
      %4113 = vmatpush1.bf16.msra.mxu0 %v3827
      %4114 = vmatprep.subr.bf16.mxu0 %v3832
      %4115 = vmatpush1.bf16.msra.mxu0 %v3831
      %4116 = vmatprep.mubr.bf16.mxu0 %v3170
      %4117 = vmatmul.mubr.bf16.gmra.mrb[0].mxu0 %v3169
      %v4118 = vpop.f32.mrb[0].mxu0
      %v4119 = vadd.f32 %v4078, %v4118
      %v4120 = vpop.f32.mrb[0].mxu0
      %v4121 = vadd.f32 %v4080, %v4120
      %v4122 = vpop.f32.mrb[0].mxu0
      %v4123 = vpop.f32.mrb[0].mxu0
      %4124 = vdwg.mxu0
      %v4125 = vmax.f32 %v4037, 0.0
      %v4126 = vmax.f32 %v4039, 0.0
      %v4127 = vmax.f32 %v4119, 0.0
      %v4128 = vmax.f32 %v4121, 0.0
      %v4129 = vpack.c.bf16 %v4125, %v4125
      %v4130 = vpack.c.bf16 %v4126, %v4126
      %v4131 = vpack.c.bf16 %v4127, %v4127
      %v4132 = vpack.c.bf16 %v4128, %v4128
      %v4133 = vld [vmem:[%s7] sm:$0xf]
      %v4134 = vld [vmem:[%s7 + $0x4] sm:$0xf]
      %v4135 = vld [vmem:[%s7 + $0x8] sm:$0xf]
      %v4136 = vld [vmem:[%s7 + $0xc] sm:$0xf]
      %v4137 = vld [vmem:[%s7 + $0x10] sm:$0xf]
      %v4138 = vld [vmem:[%s7 + $0x14] sm:$0xf]
      %v4139 = vld [vmem:[%s7 + $0x18] sm:$0xf]
      %v4140 = vld [vmem:[%s7 + $0x1c] sm:$0xf]
      %v4141 = vld [vmem:[%s7 + $0x20] sm:$0xf]
      %v4142 = vld [vmem:[%s7 + $0x24] sm:$0xf]
      %v4143 = vld [vmem:[%s7 + $0x28] sm:$0xf]
      %v4144 = vld [vmem:[%s7 + $0x2c] sm:$0xf]
      %v4145 = vld [vmem:[%s7 + $0x30] sm:$0xf]
      %v4146 = vld [vmem:[%s7 + $0x34] sm:$0xf]
      %v4147 = vld [vmem:[%s7 + $0x38] sm:$0xf]
      %v4148 = vld [vmem:[%s7 + $0x3c] sm:$0xf]
      %v4149 = vld [vmem:[%s7 + $0x40] sm:$0xf]
      %v4150 = vld [vmem:[%s7 + $0x44] sm:$0xf]
      %v4151 = vld [vmem:[%s7 + $0x48] sm:$0xf]
      %v4152 = vld [vmem:[%s7 + $0x4c] sm:$0xf]
      %v4153 = vld [vmem:[%s7 + $0x50] sm:$0xf]
      %v4154 = vld [vmem:[%s7 + $0x54] sm:$0xf]
      %v4155 = vld [vmem:[%s7 + $0x58] sm:$0xf]
      %v4156 = vld [vmem:[%s7 + $0x5c] sm:$0xf]
      %v4157 = vld [vmem:[%s7 + $0x60] sm:$0xf]
      %v4158 = vld [vmem:[%s7 + $0x64] sm:$0xf]
      %v4159 = vld [vmem:[%s7 + $0x68] sm:$0xf]
      %v4160 = vld [vmem:[%s7 + $0x6c] sm:$0xf]
      %v4161 = vld [vmem:[%s7 + $0x70] sm:$0xf]
      %v4162 = vld [vmem:[%s7 + $0x74] sm:$0xf]
      %v4163 = vld [vmem:[%s7 + $0x78] sm:$0xf]
      %v4164 = vld [vmem:[%s7 + $0x7c] sm:$0xf]
      %v4165 = vld [vmem:[%s7 + $0x80] sm:$0xf]
      %v4166 = vld [vmem:[%s7 + $0x84] sm:$0xf]
      %v4167 = vld [vmem:[%s7 + $0x88] sm:$0xf]
      %v4168 = vld [vmem:[%s7 + $0x8c] sm:$0xf]
      %v4169 = vld [vmem:[%s7 + $0x90] sm:$0xf]
      %v4170 = vld [vmem:[%s7 + $0x94] sm:$0xf]
      %v4171 = vld [vmem:[%s7 + $0x98] sm:$0xf]
      %v4172 = vld [vmem:[%s7 + $0x9c] sm:$0xf]
      %v4173 = vld [vmem:[%s7 + $0xa0] sm:$0xf]
      %v4174 = vld [vmem:[%s7 + $0xa4] sm:$0xf]
      %v4175 = vld [vmem:[%s7 + $0xa8] sm:$0xf]
      %v4176 = vld [vmem:[%s7 + $0xac] sm:$0xf]
      %v4177 = vld [vmem:[%s7 + $0xb0] sm:$0xf]
      %v4178 = vld [vmem:[%s7 + $0xb4] sm:$0xf]
      %v4179 = vld [vmem:[%s7 + $0xb8] sm:$0xf]
      %v4180 = vld [vmem:[%s7 + $0xbc] sm:$0xf]
      %v4181 = vld [vmem:[%s7 + $0xc0] sm:$0xf]
      %v4182 = vld [vmem:[%s7 + $0xc4] sm:$0xf]
      %v4183 = vld [vmem:[%s7 + $0xc8] sm:$0xf]
      %v4184 = vld [vmem:[%s7 + $0xcc] sm:$0xf]
      %v4185 = vld [vmem:[%s7 + $0xd0] sm:$0xf]
      %v4186 = vld [vmem:[%s7 + $0xd4] sm:$0xf]
      %v4187 = vld [vmem:[%s7 + $0xd8] sm:$0xf]
      %v4188 = vld [vmem:[%s7 + $0xdc] sm:$0xf]
      %v4189 = vld [vmem:[%s7 + $0xe0] sm:$0xf]
      %v4190 = vld [vmem:[%s7 + $0xe4] sm:$0xf]
      %v4191 = vld [vmem:[%s7 + $0xe8] sm:$0xf]
      %v4192 = vld [vmem:[%s7 + $0xec] sm:$0xf]
      %v4193 = vld [vmem:[%s7 + $0xf0] sm:$0xf]
      %v4194 = vld [vmem:[%s7 + $0xf4] sm:$0xf]
      %v4195 = vld [vmem:[%s7 + $0xf8] sm:$0xf]
      %v4196 = vld [vmem:[%s7 + $0xfc] sm:$0xf]
      %v4197 = vld [vmem:[%s8] sm:$0x1]
      %v4199 = vlaneseq
      %v4200 = vshrl.u32 %v4199, 7
      %v4201 = vsub.s32 0, %v4200
      %v4202 = vrot.slane %v4197, %v4201
      %v4268 = vunpack.c.l.b16 %v4133
      %v4269 = vunpack.c.l.b16 %v4134
      %v4270 = vunpack.c.l.b16 %v4135
      %v4271 = vunpack.c.l.b16 %v4136
      %v4272 = vunpack.c.l.b16 %v4137
      %v4273 = vunpack.c.l.b16 %v4138
      %v4274 = vunpack.c.l.b16 %v4139
      %v4275 = vunpack.c.l.b16 %v4140
      %v4276 = vunpack.c.l.b16 %v4141
      %v4277 = vunpack.c.l.b16 %v4142
      %v4278 = vunpack.c.l.b16 %v4143
      %v4279 = vunpack.c.l.b16 %v4144
      %v4280 = vunpack.c.l.b16 %v4145
      %v4281 = vunpack.c.l.b16 %v4146
      %v4282 = vunpack.c.l.b16 %v4147
      %v4283 = vunpack.c.l.b16 %v4148
      %v4284 = vunpack.c.l.b16 %v4149
      %v4285 = vunpack.c.l.b16 %v4150
      %v4286 = vunpack.c.l.b16 %v4151
      %v4287 = vunpack.c.l.b16 %v4152
      %v4288 = vunpack.c.l.b16 %v4153
      %v4289 = vunpack.c.l.b16 %v4154
      %v4290 = vunpack.c.l.b16 %v4155
      %v4291 = vunpack.c.l.b16 %v4156
      %v4292 = vunpack.c.l.b16 %v4157
      %v4293 = vunpack.c.l.b16 %v4158
      %v4294 = vunpack.c.l.b16 %v4159
      %v4295 = vunpack.c.l.b16 %v4160
      %v4296 = vunpack.c.l.b16 %v4161
      %v4297 = vunpack.c.l.b16 %v4162
      %v4298 = vunpack.c.l.b16 %v4163
      %v4299 = vunpack.c.l.b16 %v4164
      %v4300 = vunpack.c.l.b16 %v4165
      %v4301 = vunpack.c.l.b16 %v4166
      %v4302 = vunpack.c.l.b16 %v4167
      %v4303 = vunpack.c.l.b16 %v4168
      %v4304 = vunpack.c.l.b16 %v4169
      %v4305 = vunpack.c.l.b16 %v4170
      %v4306 = vunpack.c.l.b16 %v4171
      %v4307 = vunpack.c.l.b16 %v4172
      %v4308 = vunpack.c.l.b16 %v4173
      %v4309 = vunpack.c.l.b16 %v4174
      %v4310 = vunpack.c.l.b16 %v4175
      %v4311 = vunpack.c.l.b16 %v4176
      %v4312 = vunpack.c.l.b16 %v4177
      %v4313 = vunpack.c.l.b16 %v4178
      %v4314 = vunpack.c.l.b16 %v4179
      %v4315 = vunpack.c.l.b16 %v4180
      %v4316 = vunpack.c.l.b16 %v4181
      %v4317 = vunpack.c.l.b16 %v4182
      %v4318 = vunpack.c.l.b16 %v4183
      %v4319 = vunpack.c.l.b16 %v4184
      %v4320 = vunpack.c.l.b16 %v4185
      %v4321 = vunpack.c.l.b16 %v4186
      %v4322 = vunpack.c.l.b16 %v4187
      %v4323 = vunpack.c.l.b16 %v4188
      %v4324 = vunpack.c.l.b16 %v4189
      %v4325 = vunpack.c.l.b16 %v4190
      %v4326 = vunpack.c.l.b16 %v4191
      %v4327 = vunpack.c.l.b16 %v4192
      %v4328 = vunpack.c.l.b16 %v4193
      %v4329 = vunpack.c.l.b16 %v4194
      %v4330 = vunpack.c.l.b16 %v4195
      %v4331 = vunpack.c.l.b16 %v4196
      %v4332 = vpack.c.b16 %v4269, %v4268
      %v4333 = vpack.c.b16 %v4271, %v4270
      %v4334 = vpack.c.b16 %v4273, %v4272
      %v4335 = vpack.c.b16 %v4275, %v4274
      %v4336 = vpack.c.b16 %v4277, %v4276
      %v4337 = vpack.c.b16 %v4279, %v4278
      %v4338 = vpack.c.b16 %v4281, %v4280
      %v4339 = vpack.c.b16 %v4283, %v4282
      %v4340 = vpack.c.b16 %v4285, %v4284
      %v4341 = vpack.c.b16 %v4287, %v4286
      %v4342 = vpack.c.b16 %v4289, %v4288
      %v4343 = vpack.c.b16 %v4291, %v4290
      %v4344 = vpack.c.b16 %v4293, %v4292
      %v4345 = vpack.c.b16 %v4295, %v4294
      %v4346 = vpack.c.b16 %v4297, %v4296
      %v4347 = vpack.c.b16 %v4299, %v4298
      %v4348 = vpack.c.b16 %v4301, %v4300
      %v4349 = vpack.c.b16 %v4303, %v4302
      %v4350 = vpack.c.b16 %v4305, %v4304
      %v4351 = vpack.c.b16 %v4307, %v4306
      %v4352 = vpack.c.b16 %v4309, %v4308
      %v4353 = vpack.c.b16 %v4311, %v4310
      %v4354 = vpack.c.b16 %v4313, %v4312
      %v4355 = vpack.c.b16 %v4315, %v4314
      %v4356 = vpack.c.b16 %v4317, %v4316
      %v4357 = vpack.c.b16 %v4319, %v4318
      %v4358 = vpack.c.b16 %v4321, %v4320
      %v4359 = vpack.c.b16 %v4323, %v4322
      %v4360 = vpack.c.b16 %v4325, %v4324
      %v4361 = vpack.c.b16 %v4327, %v4326
      %v4362 = vpack.c.b16 %v4329, %v4328
      %v4363 = vpack.c.b16 %v4331, %v4330
      %4396 = vmatprep.subr.bf16.mxu0 0
      %4397 = vmatpush1.bf16.msra.mxu0 %v4332
      %4398 = vmatprep.subr.bf16.mxu0 0
      %4399 = vmatpush1.bf16.msra.mxu0 %v4333
      %4400 = vmatprep.subr.bf16.mxu0 0
      %4401 = vmatpush1.bf16.msra.mxu0 %v4334
      %4402 = vmatprep.subr.bf16.mxu0 0
      %4403 = vmatpush1.bf16.msra.mxu0 %v4335
      %4404 = vmatprep.subr.bf16.mxu0 0
      %4405 = vmatpush1.bf16.msra.mxu0 %v4336
      %4406 = vmatprep.subr.bf16.mxu0 0
      %4407 = vmatpush1.bf16.msra.mxu0 %v4337
      %4408 = vmatprep.subr.bf16.mxu0 0
      %4409 = vmatpush1.bf16.msra.mxu0 %v4338
      %4410 = vmatprep.subr.bf16.mxu0 0
      %4411 = vmatpush1.bf16.msra.mxu0 %v4339
      %4412 = vmatprep.subr.bf16.mxu0 0
      %4413 = vmatpush1.bf16.msra.mxu0 %v4340
      %4414 = vmatprep.subr.bf16.mxu0 0
      %4415 = vmatpush1.bf16.msra.mxu0 %v4341
      %4416 = vmatprep.subr.bf16.mxu0 0
      %4417 = vmatpush1.bf16.msra.mxu0 %v4342
      %4418 = vmatprep.subr.bf16.mxu0 0
      %4419 = vmatpush1.bf16.msra.mxu0 %v4343
      %4420 = vmatprep.subr.bf16.mxu0 0
      %4421 = vmatpush1.bf16.msra.mxu0 %v4344
      %4422 = vmatprep.subr.bf16.mxu0 0
      %4423 = vmatpush1.bf16.msra.mxu0 %v4345
      %4424 = vmatprep.subr.bf16.mxu0 0
      %4425 = vmatpush1.bf16.msra.mxu0 %v4346
      %4426 = vmatprep.subr.bf16.mxu0 0
      %4427 = vmatpush1.bf16.msra.mxu0 %v4347
      %4428 = vmatprep.mubr.bf16.mxu0 %v4130
      %4429 = vmatmul.mubr.bf16.gmra.mrb[0].mxu0 %v4129
      %v4430 = vpop.f32.mrb[0].mxu0
      %v4431 = vadd.f32 %v4202, %v4430
      %v4432 = vpop.f32.mrb[0].mxu0
      %v4433 = vpop.f32.mrb[0].mxu0
      %v4434 = vpop.f32.mrb[0].mxu0
      %4435 = vdwg.mxu0
      %4436 = vmatprep.subr.bf16.mxu0 0
      %4437 = vmatpush1.bf16.msra.mxu0 %v4348
      %4438 = vmatprep.subr.bf16.mxu0 0
      %4439 = vmatpush1.bf16.msra.mxu0 %v4349
      %4440 = vmatprep.subr.bf16.mxu0 0
      %4441 = vmatpush1.bf16.msra.mxu0 %v4350
      %4442 = vmatprep.subr.bf16.mxu0 0
      %4443 = vmatpush1.bf16.msra.mxu0 %v4351
      %4444 = vmatprep.subr.bf16.mxu0 0
      %4445 = vmatpush1.bf16.msra.mxu0 %v4352
      %4446 = vmatprep.subr.bf16.mxu0 0
      %4447 = vmatpush1.bf16.msra.mxu0 %v4353
      %4448 = vmatprep.subr.bf16.mxu0 0
      %4449 = vmatpush1.bf16.msra.mxu0 %v4354
      %4450 = vmatprep.subr.bf16.mxu0 0
      %4451 = vmatpush1.bf16.msra.mxu0 %v4355
      %4452 = vmatprep.subr.bf16.mxu0 0
      %4453 = vmatpush1.bf16.msra.mxu0 %v4356
      %4454 = vmatprep.subr.bf16.mxu0 0
      %4455 = vmatpush1.bf16.msra.mxu0 %v4357
      %4456 = vmatprep.subr.bf16.mxu0 0
      %4457 = vmatpush1.bf16.msra.mxu0 %v4358
      %4458 = vmatprep.subr.bf16.mxu0 0
      %4459 = vmatpush1.bf16.msra.mxu0 %v4359
      %4460 = vmatprep.subr.bf16.mxu0 0
      %4461 = vmatpush1.bf16.msra.mxu0 %v4360
      %4462 = vmatprep.subr.bf16.mxu0 0
      %4463 = vmatpush1.bf16.msra.mxu0 %v4361
      %4464 = vmatprep.subr.bf16.mxu0 0
      %4465 = vmatpush1.bf16.msra.mxu0 %v4362
      %4466 = vmatprep.subr.bf16.mxu0 0
      %4467 = vmatpush1.bf16.msra.mxu0 %v4363
      %4468 = vmatprep.mubr.bf16.mxu0 %v4132
      %4469 = vmatmul.mubr.bf16.gmra.mrb[0].mxu0 %v4131
      %v4470 = vpop.f32.mrb[0].mxu0
      %v4471 = vadd.f32 %v4431, %v4470
      %v4472 = vpop.f32.mrb[0].mxu0
      %v4473 = vpop.f32.mrb[0].mxu0
      %v4474 = vpop.f32.mrb[0].mxu0
      %4475 = vdwg.mxu0
      %v4476 = vmax.f32 %v4471, 0.0
      %v4477 = vpack.c.bf16 %v4476, %v4476
      %v4478 = vld [vmem:[%s9] sm:$0xf]
      %v4479 = vld [vmem:[%s9 + $0x4] sm:$0xf]
      %v4480 = vld [vmem:[%s9 + $0x8] sm:$0xf]
      %v4481 = vld [vmem:[%s9 + $0xc] sm:$0xf]
      %v4482 = vld [vmem:[%s9 + $0x10] sm:$0xf]
      %v4483 = vld [vmem:[%s9 + $0x14] sm:$0xf]
      %v4484 = vld [vmem:[%s9 + $0x18] sm:$0xf]
      %v4485 = vld [vmem:[%s9 + $0x1c] sm:$0xf]
      %v4486 = vld [vmem:[%s9 + $0x20] sm:$0xf]
      %v4487 = vld [vmem:[%s9 + $0x24] sm:$0xf]
      %v4488 = vld [vmem:[%s9 + $0x28] sm:$0xf]
      %v4489 = vld [vmem:[%s9 + $0x2c] sm:$0xf]
      %v4490 = vld [vmem:[%s9 + $0x30] sm:$0xf]
      %v4491 = vld [vmem:[%s9 + $0x34] sm:$0xf]
      %v4492 = vld [vmem:[%s9 + $0x38] sm:$0xf]
      %v4493 = vld [vmem:[%s9 + $0x3c] sm:$0xf]
      %v4494 = vld [vmem:[%s10] sm:$0x1]
      %v4496 = vlaneseq
      %v4497 = vshrl.u32 %v4496, 7
      %v4498 = vsub.s32 0, %v4497
      %v4499 = vrot.slane %v4494, %v4498
      %v4517 = vunpack.c.l.b16 %v4478
      %v4518 = vunpack.c.l.b16 %v4479
      %v4519 = vunpack.c.l.b16 %v4480
      %v4520 = vunpack.c.l.b16 %v4481
      %v4521 = vunpack.c.l.b16 %v4482
      %v4522 = vunpack.c.l.b16 %v4483
      %v4523 = vunpack.c.l.b16 %v4484
      %v4524 = vunpack.c.l.b16 %v4485
      %v4525 = vunpack.c.l.b16 %v4486
      %v4526 = vunpack.c.l.b16 %v4487
      %v4527 = vunpack.c.l.b16 %v4488
      %v4528 = vunpack.c.l.b16 %v4489
      %v4529 = vunpack.c.l.b16 %v4490
      %v4530 = vunpack.c.l.b16 %v4491
      %v4531 = vunpack.c.l.b16 %v4492
      %v4532 = vunpack.c.l.b16 %v4493
      %v4533 = vpack.c.b16 %v4518, %v4517
      %v4534 = vpack.c.b16 %v4520, %v4519
      %v4535 = vpack.c.b16 %v4522, %v4521
      %v4536 = vpack.c.b16 %v4524, %v4523
      %v4537 = vpack.c.b16 %v4526, %v4525
      %v4538 = vpack.c.b16 %v4528, %v4527
      %v4539 = vpack.c.b16 %v4530, %v4529
      %v4540 = vpack.c.b16 %v4532, %v4531
      %4549 = vmatprep.subr.bf16.mxu0 0
      %4550 = vmatpush1.bf16.msra.mxu0 %v4533
      %4551 = vmatprep.subr.bf16.mxu0 0
      %4552 = vmatpush1.bf16.msra.mxu0 %v4534
      %4553 = vmatprep.subr.bf16.mxu0 0
      %4554 = vmatpush1.bf16.msra.mxu0 %v4535
      %4555 = vmatprep.subr.bf16.mxu0 0
      %4556 = vmatpush1.bf16.msra.mxu0 %v4536
      %4557 = vmatprep.subr.bf16.mxu0 0
      %4558 = vmatpush1.bf16.msra.mxu0 %v4537
      %4559 = vmatprep.subr.bf16.mxu0 0
      %4560 = vmatpush1.bf16.msra.mxu0 %v4538
      %4561 = vmatprep.subr.bf16.mxu0 0
      %4562 = vmatpush1.bf16.msra.mxu0 %v4539
      %4563 = vmatprep.subr.bf16.mxu0 0
      %4564 = vmatpush1.bf16.msra.mxu0 %v4540
      %4565 = vmatprep.subr.bf16.mxu0 0
      %4566 = vmatpush1.bf16.msra.mxu0 0
      %4567 = vmatprep.subr.bf16.mxu0 0
      %4568 = vmatpush1.bf16.msra.mxu0 0
      %4569 = vmatprep.subr.bf16.mxu0 0
      %4570 = vmatpush1.bf16.msra.mxu0 0
      %4571 = vmatprep.subr.bf16.mxu0 0
      %4572 = vmatpush1.bf16.msra.mxu0 0
      %4573 = vmatprep.subr.bf16.mxu0 0
      %4574 = vmatpush1.bf16.msra.mxu0 0
      %4575 = vmatprep.subr.bf16.mxu0 0
      %4576 = vmatpush1.bf16.msra.mxu0 0
      %4577 = vmatprep.subr.bf16.mxu0 0
      %4578 = vmatpush1.bf16.msra.mxu0 0
      %4579 = vmatprep.subr.bf16.mxu0 0
      %4580 = vmatpush1.bf16.msra.mxu0 0
      %4581 = vmatprep.mubr.bf16.mxu0 0
      %4582 = vmatmul.mubr.bf16.gmra.mrb[0].mxu0 %v4477
      %v4583 = vpop.f32.mrb[0].mxu0
      %v4584 = vadd.f32 %v4499, %v4583
      %v4585 = vpop.f32.mrb[0].mxu0
      %v4586 = vpop.f32.mrb[0].mxu0
      %v4587 = vpop.f32.mrb[0].mxu0
      %4588 = vdwg.mxu0
      %v4589 = vmax.f32 %v4584, 0.0
      %v4590 = vpack.c.bf16 %v4589, %v4589
      %v4591 = vld [vmem:[%s11] sm:$0xf]
      %v4592 = vld [vmem:[%s11 + $0x4] sm:$0xf]
      %v4593 = vld [vmem:[%s11 + $0x8] sm:$0xf]
      %v4594 = vld [vmem:[%s11 + $0xc] sm:$0xf]
      %v4595 = vld [vmem:[%s11 + $0x10] sm:$0xf]
      %v4596 = vld [vmem:[%s11 + $0x14] sm:$0xf]
      %v4597 = vld [vmem:[%s11 + $0x18] sm:$0xf]
      %v4598 = vld [vmem:[%s11 + $0x1c] sm:$0xf]
      %v4599 = vld [vmem:[%s11 + $0x20] sm:$0xf]
      %v4600 = vld [vmem:[%s11 + $0x24] sm:$0xf]
      %v4601 = vld [vmem:[%s11 + $0x28] sm:$0xf]
      %v4602 = vld [vmem:[%s11 + $0x2c] sm:$0xf]
      %v4603 = vld [vmem:[%s11 + $0x30] sm:$0xf]
      %v4604 = vld [vmem:[%s11 + $0x34] sm:$0xf]
      %v4605 = vld [vmem:[%s11 + $0x38] sm:$0xf]
      %v4606 = vld [vmem:[%s11 + $0x3c] sm:$0xf]
      %v4607 = vld [vmem:[%s12] sm:$0x1]
      %v4609 = vlaneseq
      %v4610 = vshrl.u32 %v4609, 7
      %v4611 = vsub.s32 0, %v4610
      %v4612 = vrot.slane %v4607, %v4611
      %v4630 = vunpack.c.l.b16 %v4591
      %v4631 = vunpack.c.l.b16 %v4592
      %v4632 = vunpack.c.l.b16 %v4593
      %v4633 = vunpack.c.l.b16 %v4594
      %v4634 = vunpack.c.l.b16 %v4595
      %v4635 = vunpack.c.l.b16 %v4596
      %v4636 = vunpack.c.l.b16 %v4597
      %v4637 = vunpack.c.l.b16 %v4598
      %v4638 = vunpack.c.l.b16 %v4599
      %v4639 = vunpack.c.l.b16 %v4600
      %v4640 = vunpack.c.l.b16 %v4601
      %v4641 = vunpack.c.l.b16 %v4602
      %v4642 = vunpack.c.l.b16 %v4603
      %v4643 = vunpack.c.l.b16 %v4604
      %v4644 = vunpack.c.l.b16 %v4605
      %v4645 = vunpack.c.l.b16 %v4606
      %v4646 = vpack.c.b16 %v4631, %v4630
      %v4647 = vpack.c.b16 %v4633, %v4632
      %v4648 = vpack.c.b16 %v4635, %v4634
      %v4649 = vpack.c.b16 %v4637, %v4636
      %v4650 = vpack.c.b16 %v4639, %v4638
      %v4651 = vpack.c.b16 %v4641, %v4640
      %v4652 = vpack.c.b16 %v4643, %v4642
      %v4653 = vpack.c.b16 %v4645, %v4644
      %4662 = vmatprep.subr.bf16.mxu0 0
      %4663 = vmatpush1.bf16.msra.mxu0 %v4646
      %4664 = vmatprep.subr.bf16.mxu0 0
      %4665 = vmatpush1.bf16.msra.mxu0 %v4647
      %4666 = vmatprep.subr.bf16.mxu0 0
      %4667 = vmatpush1.bf16.msra.mxu0 %v4648
      %4668 = vmatprep.subr.bf16.mxu0 0
      %4669 = vmatpush1.bf16.msra.mxu0 %v4649
      %4670 = vmatprep.subr.bf16.mxu0 0
      %4671 = vmatpush1.bf16.msra.mxu0 %v4650
      %4672 = vmatprep.subr.bf16.mxu0 0
      %4673 = vmatpush1.bf16.msra.mxu0 %v4651
      %4674 = vmatprep.subr.bf16.mxu0 0
      %4675 = vmatpush1.bf16.msra.mxu0 %v4652
      %4676 = vmatprep.subr.bf16.mxu0 0
      %4677 = vmatpush1.bf16.msra.mxu0 %v4653
      %4678 = vmatprep.subr.bf16.mxu0 0
      %4679 = vmatpush1.bf16.msra.mxu0 0
      %4680 = vmatprep.subr.bf16.mxu0 0
      %4681 = vmatpush1.bf16.msra.mxu0 0
      %4682 = vmatprep.subr.bf16.mxu0 0
      %4683 = vmatpush1.bf16.msra.mxu0 0
      %4684 = vmatprep.subr.bf16.mxu0 0
      %4685 = vmatpush1.bf16.msra.mxu0 0
      %4686 = vmatprep.subr.bf16.mxu0 0
      %4687 = vmatpush1.bf16.msra.mxu0 0
      %4688 = vmatprep.subr.bf16.mxu0 0
      %4689 = vmatpush1.bf16.msra.mxu0 0
      %4690 = vmatprep.subr.bf16.mxu0 0
      %4691 = vmatpush1.bf16.msra.mxu0 0
      %4692 = vmatprep.subr.bf16.mxu0 0
      %4693 = vmatpush1.bf16.msra.mxu0 0
      %4694 = vmatprep.mubr.bf16.mxu0 0
      %4695 = vmatmul.mubr.bf16.gmra.mrb[0].mxu0 %v4590
      %v4696 = vpop.f32.mrb[0].mxu0
      %v4697 = vadd.f32 %v4612, %v4696
      %v4698 = vpop.f32.mrb[0].mxu0
      %v4699 = vpop.f32.mrb[0].mxu0
      %v4700 = vpop.f32.mrb[0].mxu0
      %4701 = vdwg.mxu0
      %4702 = vst [vmem:[%s440] sm:$0xff] %v4697
      %p4703 = scmp.lt.s32.totalorder %s24, 1
      %s4704 = scalar_select %p4703, %s24, 1
      %s4705 = smul.addr %s4704, 8
      %s4706 = scalar_lea.vmem %s13, %s4705
      // Predicated region
      $region73: #{test_model_forward.1} parent=71 // pred_check
        %p4707 = pneg %p320
      $region74: #{test_model_forward.1} parent=71 // pred_check_branch
        %4709 = sbr.rel (%p4707) target = $region76
      $region75: #{test_model_forward.1} parent=71 // pred_region
        _
      $region76: #{test_model_forward.1} parent=71 // pred_fallthru
        _
    $region72: #{test_model_forward.1} parent=5 // pred_fallthru
      _
    %p4710 = scmp.le.s32.totalorder 2, %s19
    // Predicated region
    $region77: #{test_model_forward.1} parent=5 // pred_check
      %p4711 = pneg %p4710
    $region78: #{test_model_forward.1} parent=5 // pred_check_branch
      %4713 = sbr.rel (%p4711) target = $region80
    $region79: #{test_model_forward.1} parent=5 // pred_region
      %s4714 = ssub.s32 %s19, 2
      // Predicated region
      $region81: #{test_model_forward.1} parent=79 // pred_check
        %p4715 = pneg %p326
      $region82: #{test_model_forward.1} parent=79 // pred_check_branch
        %4717 = sbr.rel (%p4715) target = $region84
      $region83: #{test_model_forward.1} parent=79 // pred_region
        %p4718 = scmp.lt.s32.totalorder %s25, 1
        %s4719 = scalar_select %p4718, %s25, 1
        %s4720 = smul.addr %s4719, 8
        %s4721 = scalar_lea.vmem %s13, %s4720
      $region84: #{test_model_forward.1} parent=79 // pred_fallthru
        _
    $region80: #{test_model_forward.1} parent=5 // pred_fallthru
      _
  $region6: #{test_model_forward.1} parent=0 // loop_footer
    %s23 = sadd.s32 1, %s19
  $region7: #{test_model_forward.1} parent=0 // loop_footer_branch
    %18 = sbr.rel target = $region3
  $region8: #{test_model_forward.1} parent=0 // loop_exit
    _

</llo_original>
